<compile_context>
chip_gen: v5e
topology: v5e:2x2
jax: 0.10.0
libtpu: 0.0.40
codegen_flags: <defaults>
</compile_context>

<pallas_src>
import jax
import jax.numpy as jnp
import numpy as np
from jax.experimental import pallas as pl
from jax.experimental.pallas import tpu as pltpu

HIDDEN = 51   # true hidden size of the PyTorch module
HP = 128      # per-gate padded hidden size (vreg-lane aligned)

# Packed gate order is [i, f, o, g]; PyTorch LSTMCell rows are [i, f, g, o].
GATE_ORDER = (0, 1, 3, 2)


def sequence_kernel(x_ref, wx1_ref, wh1_ref, b1_ref, wih2_ref, whh2_ref, b2_ref,
                    wlin_ref, blin_ref, y_ref):
    B, T = x_ref.shape
    Hp = wh1_ref.shape[0]                 # padded per-gate hidden (HP)

    # Hoist ALL operand loads out of the unrolled time loop (ref loads are not CSE'd).
    x = x_ref[...]                        # (B, T)      f32
    wx1 = wx1_ref[...]                    # (1, 4*Hp)   f32  layer-1 input weights (K=1)
    wh1 = wh1_ref[...]                    # (Hp, 4*Hp)  bf16 layer-1 recurrent weights
    b1 = b1_ref[...]                      # (1, 4*Hp)   f32  b_ih + b_hh, layer 1
    wih2 = wih2_ref[...]                  # (Hp, 4*Hp)  bf16 layer-2 input weights
    whh2 = whh2_ref[...]                  # (Hp, 4*Hp)  bf16 layer-2 recurrent weights
    b2 = b2_ref[...]                      # (1, 4*Hp)   f32  b_ih + b_hh, layer 2
    wlin = wlin_ref[...]                  # (1, Hp)     f32  linear head weights
    blin = blin_ref[...]                  # (1, 1)      f32  linear head bias

    # Time-invariant input projection for every step, computed off the recurrent chain.
    xpre1 = [x[:, t:t + 1] * wx1 + b1 for t in range(T)]          # T x (B, 4*Hp)

    def lstm_gates(pre, c):
        # pre: (B, 4*Hp) fused gate pre-activations, gate order i | f | o | g.
        s = jax.nn.sigmoid(pre[:, 0:3 * Hp])                      # one contiguous EUP call
        g = jnp.tanh(pre[:, 3 * Hp:4 * Hp])
        i = s[:, 0:Hp]
        f = s[:, Hp:2 * Hp]
        o = s[:, 2 * Hp:3 * Hp]
        c_new = f * c + i * g
        return o * jnp.tanh(c_new), c_new

    h1 = c1 = h2 = c2 = jnp.zeros((B, Hp), jnp.float32)   # torch.zeros(...) init
    h2_list = []

    for t in range(T):
        # Layer-2 recurrent projection depends only on h2(t-1): independent of this
        # step's layer-1 work, so it can overlap the layer-1 matmul/EUP chain.
        pre2_hh = jnp.dot(h2.astype(jnp.bfloat16), whh2,
                          preferred_element_type=jnp.float32)

        # Layer 1: K=1 input projection precomputed (xpre1), recurrent part on the MXU.
        pre1 = xpre1[t] + jnp.dot(h1.astype(jnp.bfloat16), wh1,
                                  preferred_element_type=jnp.float32)
        h1, c1 = lstm_gates(pre1, c1)

        # Layer 2: add the fresh-h1 projection to the already-computed recurrent part.
        pre2 = pre2_hh + b2 + jnp.dot(h1.astype(jnp.bfloat16), wih2,
                                      preferred_element_type=jnp.float32)
        h2, c2 = lstm_gates(pre2, c2)

        h2_list.append(h2)   # head + output assembly deferred to after the loop

    # Linear head (51 -> 1), fully off the recurrent chain:
    # one aligned sublane concat + one fused VPU multiply + one lane reduction.
    h2_all = jnp.concatenate(h2_list, axis=0)                          # (T*B, Hp)
    out_all = jnp.sum(h2_all * wlin, axis=-1, keepdims=True) + blin    # (T*B, 1)

    # Assemble the (B, T) output slab: column t comes from rows [t*B, (t+1)*B).
    lane_t = jax.lax.broadcasted_iota(jnp.int32, (1, T), 1)            # (1, T) column ids
    cols = [out_all[t * B:(t + 1) * B, :] * (lane_t == t).astype(jnp.float32)
            for t in range(T)]
    while len(cols) > 1:                                               # balanced-tree sum
        nxt = [cols[i] + cols[i + 1] for i in range(0, len(cols) - 1, 2)]
        if len(cols) % 2:
            nxt.append(cols[-1])
        cols = nxt
    y_ref[...] = cols[0]                                               # single (B, T) store


def sequence_forward(x, packed):
    """x: (B, T) float32 -> (B, T) float32 (matches torch.cat(outputs, dim=1))."""
    wx1, wh1, b1, wih2, whh2, b2, wlin, blin = packed
    B, T = x.shape
    vmem = lambda: pl.BlockSpec(memory_space=pltpu.MemorySpace.VMEM)
    return pl.pallas_call(
        sequence_kernel,
        out_shape=jax.ShapeDtypeStruct((B, T), jnp.float32),
        in_specs=[vmem() for _ in range(9)],
        out_specs=vmem(),
    )(x, wx1, wh1, b1, wih2, whh2, b2, wlin, blin)


# ----------------------------------------------------------------------------
# Parameter generation (PyTorch layout) + packing into the kernel layout.
# ----------------------------------------------------------------------------
def init_raw_params(key):
    """PyTorch-layout params: LSTMCell w_ih (4H,in), w_hh (4H,H), b_ih, b_hh; Linear (1,H),(1,)."""
    ks = jax.random.split(key, 10)
    bound = 1.0 / np.sqrt(HIDDEN)

    def u(kk, shape):
        return jax.random.uniform(kk, shape, jnp.float32, -bound, bound)

    w_ih1 = u(ks[0], (4 * HIDDEN, 1))
    w_hh1 = u(ks[1], (4 * HIDDEN, HIDDEN))
    b_ih1 = u(ks[2], (4 * HIDDEN,))
    b_hh1 = u(ks[3], (4 * HIDDEN,))
    w_ih2 = u(ks[4], (4 * HIDDEN, HIDDEN))
    w_hh2 = u(ks[5], (4 * HIDDEN, HIDDEN))
    b_ih2 = u(ks[6], (4 * HIDDEN,))
    b_hh2 = u(ks[7], (4 * HIDDEN,))
    w_lin = u(ks[8], (1, HIDDEN))
    b_lin = u(ks[9], (1,))
    return (w_ih1, w_hh1, b_ih1, b_hh1, w_ih2, w_hh2, b_ih2, b_hh2, w_lin, b_lin)


def pack_params(raw, hp=HP):
    """Pack into fused, lane-padded layouts: each gate occupies hp lanes (H real + zero pad).

    Gate order is remapped from PyTorch's [i, f, g, o] to [i, f, o, g] so the three
    sigmoid gates are contiguous.  MXU operands (wh1, w_ih2, w_hh2) are bf16.
    """
    (w_ih1, w_hh1, b_ih1, b_hh1,
     w_ih2, w_hh2, b_ih2, b_hh2, w_lin, b_lin) = raw
    H = HIDDEN

    def pack_w(w, in_rows, rows_out, dtype):
        # w: (4H, in_rows) PyTorch layout -> (rows_out, 4*hp), gate block gout holds
        # the transposed PyTorch gate GATE_ORDER[gout] in cols [gout*hp, gout*hp+H).
        out = np.zeros((rows_out, 4 * hp), np.float32)
        w = np.asarray(w)
        for gout, gpt in enumerate(GATE_ORDER):
            out[:in_rows, gout * hp:gout * hp + H] = w[gpt * H:(gpt + 1) * H, :].T
        return jnp.asarray(out.astype(dtype))

    def pack_b(b_ih, b_hh):
        out = np.zeros((1, 4 * hp), np.float32)
        b = np.asarray(b_ih) + np.asarray(b_hh)
        for gout, gpt in enumerate(GATE_ORDER):
            out[0, gout * hp:gout * hp + H] = b[gpt * H:(gpt + 1) * H]
        return jnp.asarray(out)

    wx1 = pack_w(w_ih1, 1, 1, np.float32)          # (1, 4hp)    VPU broadcast row (f32)
    wh1 = pack_w(w_hh1, H, hp, jnp.bfloat16)       # (hp, 4hp)   MXU operand (bf16)
    b1 = pack_b(b_ih1, b_hh1)                      # (1, 4hp)    f32
    wih2 = pack_w(w_ih2, H, hp, jnp.bfloat16)      # (hp, 4hp)   MXU operand (bf16)
    whh2 = pack_w(w_hh2, H, hp, jnp.bfloat16)      # (hp, 4hp)   MXU operand (bf16)
    b2 = pack_b(b_ih2, b_hh2)                      # (1, 4hp)    f32

    wlin = np.zeros((1, hp), np.float32)
    wlin[0, :H] = np.asarray(w_lin)[0, :]
    wlin = jnp.asarray(wlin)                       # (1, hp)     f32
    blin = jnp.asarray(np.asarray(b_lin).reshape(1, 1))  # (1, 1)  f32
    return wx1, wh1, b1, wih2, whh2, b2, wlin, blin


# ----------------------------------------------------------------------------
# Pure-JAX reference on the raw (PyTorch-layout) parameters.
# ----------------------------------------------------------------------------
def reference_forward(x, raw):
    (w_ih1, w_hh1, b_ih1, b_hh1,
     w_ih2, w_hh2, b_ih2, b_hh2, w_lin, b_lin) = raw
    B, T = x.shape
    H = HIDDEN
    hp = jax.lax.Precision.HIGHEST

    def cell(inp, h, c, w_ih, w_hh, b_ih, b_hh):
        z = (jnp.dot(inp, w_ih.T, precision=hp)
             + jnp.dot(h, w_hh.T, precision=hp) + b_ih + b_hh)
        i = jax.nn.sigmoid(z[:, 0:H])
        f = jax.nn.sigmoid(z[:, H:2 * H])
        g = jnp.tanh(z[:, 2 * H:3 * H])
        o = jax.nn.sigmoid(z[:, 3 * H:4 * H])
        c_new = f * c + i * g
        return o * jnp.tanh(c_new), c_new

    h1 = c1 = h2 = c2 = jnp.zeros((B, H), jnp.float32)
    outs = []
    for t in range(T):
        x_t = x[:, t:t + 1]
        h1, c1 = cell(x_t, h1, c1, w_ih1, w_hh1, b_ih1, b_hh1)
        h2, c2 = cell(h1, h2, c2, w_ih2, w_hh2, b_ih2, b_hh2)
        outs.append(jnp.dot(h2, w_lin.T, precision=hp) + b_lin)
    return jnp.concatenate(outs, axis=1)


if __name__ == "__main__":
    key = jax.random.PRNGKey(0)
    k_params, k_x = jax.random.split(key)

    # B = 8 fills the 8-sublane vreg dimension (same latency as B=4, 2x throughput).
    B, T = 8, 8
    raw = init_raw_params(k_params)
    packed = pack_params(raw)
    x = jax.random.normal(k_x, (B, T), dtype=jnp.float32)

    y = sequence_forward(x, packed)
    jax.block_until_ready(y)

    y_ref = reference_forward(x, raw)
    # bf16 MXU operands accumulate a little rounding over the T-step recurrence.
    np.testing.assert_allclose(np.asarray(y), np.asarray(y_ref), rtol=1e-2, atol=1e-2)
    assert y.shape == (B, T)

    print("KERNEL_OK")
</pallas_src>

<mosaic_0001>
module attributes {stable_mosaic.version = 11 : i64} {
  func.func @sequence_kernel(%arg0: memref<8x8xf32, #tpu.memory_space<vmem>>, %arg1: memref<1x512xf32, #tpu.memory_space<vmem>>, %arg2: memref<128x512xbf16, #tpu.memory_space<vmem>>, %arg3: memref<1x512xf32, #tpu.memory_space<vmem>>, %arg4: memref<128x512xbf16, #tpu.memory_space<vmem>>, %arg5: memref<128x512xbf16, #tpu.memory_space<vmem>>, %arg6: memref<1x512xf32, #tpu.memory_space<vmem>>, %arg7: memref<1x128xf32, #tpu.memory_space<vmem>>, %arg8: memref<1x1xf32, #tpu.memory_space<vmem>>, %arg9: memref<8x8xf32, #tpu.memory_space<vmem>>) attributes {dimension_semantics = [], scalar_prefetch = 0 : i64, scratch_operands = 0 : i64, tpu.core_type = #tpu.core_type<tc>} {
    %c0 = arith.constant 0 : index
    %c0_0 = arith.constant 0 : index
    %0 = vector.load %arg0[%c0, %c0_0] : memref<8x8xf32, #tpu.memory_space<vmem>>, vector<8x8xf32>
    %c0_1 = arith.constant 0 : index
    %c0_2 = arith.constant 0 : index
    %1 = vector.load %arg1[%c0_1, %c0_2] : memref<1x512xf32, #tpu.memory_space<vmem>>, vector<1x512xf32>
    %c0_3 = arith.constant 0 : index
    %c0_4 = arith.constant 0 : index
    %2 = vector.load %arg2[%c0_3, %c0_4] : memref<128x512xbf16, #tpu.memory_space<vmem>>, vector<128x512xbf16>
    %c0_5 = arith.constant 0 : index
    %c0_6 = arith.constant 0 : index
    %3 = vector.load %arg3[%c0_5, %c0_6] : memref<1x512xf32, #tpu.memory_space<vmem>>, vector<1x512xf32>
    %c0_7 = arith.constant 0 : index
    %c0_8 = arith.constant 0 : index
    %4 = vector.load %arg4[%c0_7, %c0_8] : memref<128x512xbf16, #tpu.memory_space<vmem>>, vector<128x512xbf16>
    %c0_9 = arith.constant 0 : index
    %c0_10 = arith.constant 0 : index
    %5 = vector.load %arg5[%c0_9, %c0_10] : memref<128x512xbf16, #tpu.memory_space<vmem>>, vector<128x512xbf16>
    %c0_11 = arith.constant 0 : index
    %c0_12 = arith.constant 0 : index
    %6 = vector.load %arg6[%c0_11, %c0_12] : memref<1x512xf32, #tpu.memory_space<vmem>>, vector<1x512xf32>
    %c0_13 = arith.constant 0 : index
    %c0_14 = arith.constant 0 : index
    %7 = vector.load %arg7[%c0_13, %c0_14] : memref<1x128xf32, #tpu.memory_space<vmem>>, vector<1x128xf32>
    %c0_15 = arith.constant 0 : index
    %c0_16 = arith.constant 0 : index
    %8 = vector.load %arg8[%c0_15, %c0_16] : memref<1x1xf32, #tpu.memory_space<vmem>>, vector<1x1xf32>
    %9 = vector.extract_strided_slice %0 {offsets = [0, 0], sizes = [8, 1], strides = [1, 1]} : vector<8x8xf32> to vector<8x1xf32>
    %10 = vector.broadcast %9 : vector<8x1xf32> to vector<8x512xf32>
    %11 = vector.broadcast %1 : vector<1x512xf32> to vector<8x512xf32>
    %12 = arith.mulf %10, %11 : vector<8x512xf32>
    %13 = vector.broadcast %3 : vector<1x512xf32> to vector<8x512xf32>
    %14 = arith.addf %12, %13 : vector<8x512xf32>
    %15 = vector.extract_strided_slice %0 {offsets = [0, 1], sizes = [8, 1], strides = [1, 1]} : vector<8x8xf32> to vector<8x1xf32>
    %16 = vector.broadcast %15 : vector<8x1xf32> to vector<8x512xf32>
    %17 = vector.broadcast %1 : vector<1x512xf32> to vector<8x512xf32>
    %18 = arith.mulf %16, %17 : vector<8x512xf32>
    %19 = vector.broadcast %3 : vector<1x512xf32> to vector<8x512xf32>
    %20 = arith.addf %18, %19 : vector<8x512xf32>
    %21 = vector.extract_strided_slice %0 {offsets = [0, 2], sizes = [8, 1], strides = [1, 1]} : vector<8x8xf32> to vector<8x1xf32>
    %22 = vector.broadcast %21 : vector<8x1xf32> to vector<8x512xf32>
    %23 = vector.broadcast %1 : vector<1x512xf32> to vector<8x512xf32>
    %24 = arith.mulf %22, %23 : vector<8x512xf32>
    %25 = vector.broadcast %3 : vector<1x512xf32> to vector<8x512xf32>
    %26 = arith.addf %24, %25 : vector<8x512xf32>
    %27 = vector.extract_strided_slice %0 {offsets = [0, 3], sizes = [8, 1], strides = [1, 1]} : vector<8x8xf32> to vector<8x1xf32>
    %28 = vector.broadcast %27 : vector<8x1xf32> to vector<8x512xf32>
    %29 = vector.broadcast %1 : vector<1x512xf32> to vector<8x512xf32>
    %30 = arith.mulf %28, %29 : vector<8x512xf32>
    %31 = vector.broadcast %3 : vector<1x512xf32> to vector<8x512xf32>
    %32 = arith.addf %30, %31 : vector<8x512xf32>
    %33 = vector.extract_strided_slice %0 {offsets = [0, 4], sizes = [8, 1], strides = [1, 1]} : vector<8x8xf32> to vector<8x1xf32>
    %34 = vector.broadcast %33 : vector<8x1xf32> to vector<8x512xf32>
    %35 = vector.broadcast %1 : vector<1x512xf32> to vector<8x512xf32>
    %36 = arith.mulf %34, %35 : vector<8x512xf32>
    %37 = vector.broadcast %3 : vector<1x512xf32> to vector<8x512xf32>
    %38 = arith.addf %36, %37 : vector<8x512xf32>
    %39 = vector.extract_strided_slice %0 {offsets = [0, 5], sizes = [8, 1], strides = [1, 1]} : vector<8x8xf32> to vector<8x1xf32>
    %40 = vector.broadcast %39 : vector<8x1xf32> to vector<8x512xf32>
    %41 = vector.broadcast %1 : vector<1x512xf32> to vector<8x512xf32>
    %42 = arith.mulf %40, %41 : vector<8x512xf32>
    %43 = vector.broadcast %3 : vector<1x512xf32> to vector<8x512xf32>
    %44 = arith.addf %42, %43 : vector<8x512xf32>
    %45 = vector.extract_strided_slice %0 {offsets = [0, 6], sizes = [8, 1], strides = [1, 1]} : vector<8x8xf32> to vector<8x1xf32>
    %46 = vector.broadcast %45 : vector<8x1xf32> to vector<8x512xf32>
    %47 = vector.broadcast %1 : vector<1x512xf32> to vector<8x512xf32>
    %48 = arith.mulf %46, %47 : vector<8x512xf32>
    %49 = vector.broadcast %3 : vector<1x512xf32> to vector<8x512xf32>
    %50 = arith.addf %48, %49 : vector<8x512xf32>
    %51 = vector.extract_strided_slice %0 {offsets = [0, 7], sizes = [8, 1], strides = [1, 1]} : vector<8x8xf32> to vector<8x1xf32>
    %52 = vector.broadcast %51 : vector<8x1xf32> to vector<8x512xf32>
    %53 = vector.broadcast %1 : vector<1x512xf32> to vector<8x512xf32>
    %54 = arith.mulf %52, %53 : vector<8x512xf32>
    %55 = vector.broadcast %3 : vector<1x512xf32> to vector<8x512xf32>
    %56 = arith.addf %54, %55 : vector<8x512xf32>
    %cst = arith.constant 0.000000e+00 : f32
    %57 = vector.broadcast %cst : f32 to vector<8x128xf32>
    %58 = arith.truncf %57 : vector<8x128xf32> to vector<8x128xbf16>
    %cst_17 = arith.constant dense<0.000000e+00> : vector<8x512xf32>
    %59 = tpu.matmul %58, %5, %cst_17 {dimension_numbers = #tpu.dot_dimension_numbers<[1], [0], [0], [1], [0, 0, 1, 1], [], []>} : vector<8x128xbf16>, vector<128x512xbf16>, vector<8x512xf32> -> vector<8x512xf32>
    %60 = arith.truncf %57 : vector<8x128xf32> to vector<8x128xbf16>
    %cst_18 = arith.constant dense<0.000000e+00> : vector<8x512xf32>
    %61 = tpu.matmul %60, %2, %cst_18 {dimension_numbers = #tpu.dot_dimension_numbers<[1], [0], [0], [1], [0, 0, 1, 1], [], []>} : vector<8x128xbf16>, vector<128x512xbf16>, vector<8x512xf32> -> vector<8x512xf32>
    %62 = arith.addf %14, %61 : vector<8x512xf32>
    %63 = vector.extract_strided_slice %62 {offsets = [0, 0], sizes = [8, 384], strides = [1, 1]} : vector<8x512xf32> to vector<8x384xf32>
    %64 = arith.negf %63 : vector<8x384xf32>
    %65 = math.exp %64 : vector<8x384xf32>
    %cst_19 = arith.constant 1.000000e+00 : f32
    %66 = vector.broadcast %cst_19 : f32 to vector<8x384xf32>
    %67 = arith.addf %66, %65 : vector<8x384xf32>
    %68 = arith.divf %66, %67 : vector<8x384xf32>
    %69 = vector.extract_strided_slice %62 {offsets = [0, 384], sizes = [8, 128], strides = [1, 1]} : vector<8x512xf32> to vector<8x128xf32>
    %70 = math.tanh %69 : vector<8x128xf32>
    %71 = vector.extract_strided_slice %68 {offsets = [0, 0], sizes = [8, 128], strides = [1, 1]} : vector<8x384xf32> to vector<8x128xf32>
    %72 = vector.extract_strided_slice %68 {offsets = [0, 128], sizes = [8, 128], strides = [1, 1]} : vector<8x384xf32> to vector<8x128xf32>
    %73 = vector.extract_strided_slice %68 {offsets = [0, 256], sizes = [8, 128], strides = [1, 1]} : vector<8x384xf32> to vector<8x128xf32>
    %74 = arith.mulf %72, %57 : vector<8x128xf32>
    %75 = arith.mulf %71, %70 : vector<8x128xf32>
    %76 = arith.addf %74, %75 : vector<8x128xf32>
    %77 = math.tanh %76 : vector<8x128xf32>
    %78 = arith.mulf %73, %77 : vector<8x128xf32>
    %79 = vector.broadcast %6 : vector<1x512xf32> to vector<8x512xf32>
    %80 = arith.addf %59, %79 : vector<8x512xf32>
    %81 = arith.truncf %78 : vector<8x128xf32> to vector<8x128xbf16>
    %cst_20 = arith.constant dense<0.000000e+00> : vector<8x512xf32>
    %82 = tpu.matmul %81, %4, %cst_20 {dimension_numbers = #tpu.dot_dimension_numbers<[1], [0], [0], [1], [0, 0, 1, 1], [], []>} : vector<8x128xbf16>, vector<128x512xbf16>, vector<8x512xf32> -> vector<8x512xf32>
    %83 = arith.addf %80, %82 : vector<8x512xf32>
    %84 = vector.extract_strided_slice %83 {offsets = [0, 0], sizes = [8, 384], strides = [1, 1]} : vector<8x512xf32> to vector<8x384xf32>
    %85 = arith.negf %84 : vector<8x384xf32>
    %86 = math.exp %85 : vector<8x384xf32>
    %cst_21 = arith.constant 1.000000e+00 : f32
    %87 = vector.broadcast %cst_21 : f32 to vector<8x384xf32>
    %88 = arith.addf %87, %86 : vector<8x384xf32>
    %89 = arith.divf %87, %88 : vector<8x384xf32>
    %90 = vector.extract_strided_slice %83 {offsets = [0, 384], sizes = [8, 128], strides = [1, 1]} : vector<8x512xf32> to vector<8x128xf32>
    %91 = math.tanh %90 : vector<8x128xf32>
    %92 = vector.extract_strided_slice %89 {offsets = [0, 0], sizes = [8, 128], strides = [1, 1]} : vector<8x384xf32> to vector<8x128xf32>
    %93 = vector.extract_strided_slice %89 {offsets = [0, 128], sizes = [8, 128], strides = [1, 1]} : vector<8x384xf32> to vector<8x128xf32>
    %94 = vector.extract_strided_slice %89 {offsets = [0, 256], sizes = [8, 128], strides = [1, 1]} : vector<8x384xf32> to vector<8x128xf32>
    %95 = arith.mulf %93, %57 : vector<8x128xf32>
    %96 = arith.mulf %92, %91 : vector<8x128xf32>
    %97 = arith.addf %95, %96 : vector<8x128xf32>
    %98 = math.tanh %97 : vector<8x128xf32>
    %99 = arith.mulf %94, %98 : vector<8x128xf32>
    %100 = arith.truncf %99 : vector<8x128xf32> to vector<8x128xbf16>
    %cst_22 = arith.constant dense<0.000000e+00> : vector<8x512xf32>
    %101 = tpu.matmul %100, %5, %cst_22 {dimension_numbers = #tpu.dot_dimension_numbers<[1], [0], [0], [1], [0, 0, 1, 1], [], []>} : vector<8x128xbf16>, vector<128x512xbf16>, vector<8x512xf32> -> vector<8x512xf32>
    %102 = arith.truncf %78 : vector<8x128xf32> to vector<8x128xbf16>
    %cst_23 = arith.constant dense<0.000000e+00> : vector<8x512xf32>
    %103 = tpu.matmul %102, %2, %cst_23 {dimension_numbers = #tpu.dot_dimension_numbers<[1], [0], [0], [1], [0, 0, 1, 1], [], []>} : vector<8x128xbf16>, vector<128x512xbf16>, vector<8x512xf32> -> vector<8x512xf32>
    %104 = arith.addf %20, %103 : vector<8x512xf32>
    %105 = vector.extract_strided_slice %104 {offsets = [0, 0], sizes = [8, 384], strides = [1, 1]} : vector<8x512xf32> to vector<8x384xf32>
    %106 = arith.negf %105 : vector<8x384xf32>
    %107 = math.exp %106 : vector<8x384xf32>
    %cst_24 = arith.constant 1.000000e+00 : f32
    %108 = vector.broadcast %cst_24 : f32 to vector<8x384xf32>
    %109 = arith.addf %108, %107 : vector<8x384xf32>
    %110 = arith.divf %108, %109 : vector<8x384xf32>
    %111 = vector.extract_strided_slice %104 {offsets = [0, 384], sizes = [8, 128], strides = [1, 1]} : vector<8x512xf32> to vector<8x128xf32>
    %112 = math.tanh %111 : vector<8x128xf32>
    %113 = vector.extract_strided_slice %110 {offsets = [0, 0], sizes = [8, 128], strides = [1, 1]} : vector<8x384xf32> to vector<8x128xf32>
    %114 = vector.extract_strided_slice %110 {offsets = [0, 128], sizes = [8, 128], strides = [1, 1]} : vector<8x384xf32> to vector<8x128xf32>
    %115 = vector.extract_strided_slice %110 {offsets = [0, 256], sizes = [8, 128], strides = [1, 1]} : vector<8x384xf32> to vector<8x128xf32>
    %116 = arith.mulf %114, %76 : vector<8x128xf32>
    %117 = arith.mulf %113, %112 : vector<8x128xf32>
    %118 = arith.addf %116, %117 : vector<8x128xf32>
    %119 = math.tanh %118 : vector<8x128xf32>
    %120 = arith.mulf %115, %119 : vector<8x128xf32>
    %121 = vector.broadcast %6 : vector<1x512xf32> to vector<8x512xf32>
    %122 = arith.addf %101, %121 : vector<8x512xf32>
    %123 = arith.truncf %120 : vector<8x128xf32> to vector<8x128xbf16>
    %cst_25 = arith.constant dense<0.000000e+00> : vector<8x512xf32>
    %124 = tpu.matmul %123, %4, %cst_25 {dimension_numbers = #tpu.dot_dimension_numbers<[1], [0], [0], [1], [0, 0, 1, 1], [], []>} : vector<8x128xbf16>, vector<128x512xbf16>, vector<8x512xf32> -> vector<8x512xf32>
    %125 = arith.addf %122, %124 : vector<8x512xf32>
    %126 = vector.extract_strided_slice %125 {offsets = [0, 0], sizes = [8, 384], strides = [1, 1]} : vector<8x512xf32> to vector<8x384xf32>
    %127 = arith.negf %126 : vector<8x384xf32>
    %128 = math.exp %127 : vector<8x384xf32>
    %cst_26 = arith.constant 1.000000e+00 : f32
    %129 = vector.broadcast %cst_26 : f32 to vector<8x384xf32>
    %130 = arith.addf %129, %128 : vector<8x384xf32>
    %131 = arith.divf %129, %130 : vector<8x384xf32>
    %132 = vector.extract_strided_slice %125 {offsets = [0, 384], sizes = [8, 128], strides = [1, 1]} : vector<8x512xf32> to vector<8x128xf32>
    %133 = math.tanh %132 : vector<8x128xf32>
    %134 = vector.extract_strided_slice %131 {offsets = [0, 0], sizes = [8, 128], strides = [1, 1]} : vector<8x384xf32> to vector<8x128xf32>
    %135 = vector.extract_strided_slice %131 {offsets = [0, 128], sizes = [8, 128], strides = [1, 1]} : vector<8x384xf32> to vector<8x128xf32>
    %136 = vector.extract_strided_slice %131 {offsets = [0, 256], sizes = [8, 128], strides = [1, 1]} : vector<8x384xf32> to vector<8x128xf32>
    %137 = arith.mulf %135, %97 : vector<8x128xf32>
    %138 = arith.mulf %134, %133 : vector<8x128xf32>
    %139 = arith.addf %137, %138 : vector<8x128xf32>
    %140 = math.tanh %139 : vector<8x128xf32>
    %141 = arith.mulf %136, %140 : vector<8x128xf32>
    %142 = arith.truncf %141 : vector<8x128xf32> to vector<8x128xbf16>
    %cst_27 = arith.constant dense<0.000000e+00> : vector<8x512xf32>
    %143 = tpu.matmul %142, %5, %cst_27 {dimension_numbers = #tpu.dot_dimension_numbers<[1], [0], [0], [1], [0, 0, 1, 1], [], []>} : vector<8x128xbf16>, vector<128x512xbf16>, vector<8x512xf32> -> vector<8x512xf32>
    %144 = arith.truncf %120 : vector<8x128xf32> to vector<8x128xbf16>
    %cst_28 = arith.constant dense<0.000000e+00> : vector<8x512xf32>
    %145 = tpu.matmul %144, %2, %cst_28 {dimension_numbers = #tpu.dot_dimension_numbers<[1], [0], [0], [1], [0, 0, 1, 1], [], []>} : vector<8x128xbf16>, vector<128x512xbf16>, vector<8x512xf32> -> vector<8x512xf32>
    %146 = arith.addf %26, %145 : vector<8x512xf32>
    %147 = vector.extract_strided_slice %146 {offsets = [0, 0], sizes = [8, 384], strides = [1, 1]} : vector<8x512xf32> to vector<8x384xf32>
    %148 = arith.negf %147 : vector<8x384xf32>
    %149 = math.exp %148 : vector<8x384xf32>
    %cst_29 = arith.constant 1.000000e+00 : f32
    %150 = vector.broadcast %cst_29 : f32 to vector<8x384xf32>
    %151 = arith.addf %150, %149 : vector<8x384xf32>
    %152 = arith.divf %150, %151 : vector<8x384xf32>
    %153 = vector.extract_strided_slice %146 {offsets = [0, 384], sizes = [8, 128], strides = [1, 1]} : vector<8x512xf32> to vector<8x128xf32>
    %154 = math.tanh %153 : vector<8x128xf32>
    %155 = vector.extract_strided_slice %152 {offsets = [0, 0], sizes = [8, 128], strides = [1, 1]} : vector<8x384xf32> to vector<8x128xf32>
    %156 = vector.extract_strided_slice %152 {offsets = [0, 128], sizes = [8, 128], strides = [1, 1]} : vector<8x384xf32> to vector<8x128xf32>
    %157 = vector.extract_strided_slice %152 {offsets = [0, 256], sizes = [8, 128], strides = [1, 1]} : vector<8x384xf32> to vector<8x128xf32>
    %158 = arith.mulf %156, %118 : vector<8x128xf32>
    %159 = arith.mulf %155, %154 : vector<8x128xf32>
    %160 = arith.addf %158, %159 : vector<8x128xf32>
    %161 = math.tanh %160 : vector<8x128xf32>
    %162 = arith.mulf %157, %161 : vector<8x128xf32>
    %163 = vector.broadcast %6 : vector<1x512xf32> to vector<8x512xf32>
    %164 = arith.addf %143, %163 : vector<8x512xf32>
    %165 = arith.truncf %162 : vector<8x128xf32> to vector<8x128xbf16>
    %cst_30 = arith.constant dense<0.000000e+00> : vector<8x512xf32>
    %166 = tpu.matmul %165, %4, %cst_30 {dimension_numbers = #tpu.dot_dimension_numbers<[1], [0], [0], [1], [0, 0, 1, 1], [], []>} : vector<8x128xbf16>, vector<128x512xbf16>, vector<8x512xf32> -> vector<8x512xf32>
    %167 = arith.addf %164, %166 : vector<8x512xf32>
    %168 = vector.extract_strided_slice %167 {offsets = [0, 0], sizes = [8, 384], strides = [1, 1]} : vector<8x512xf32> to vector<8x384xf32>
    %169 = arith.negf %168 : vector<8x384xf32>
    %170 = math.exp %169 : vector<8x384xf32>
    %cst_31 = arith.constant 1.000000e+00 : f32
    %171 = vector.broadcast %cst_31 : f32 to vector<8x384xf32>
    %172 = arith.addf %171, %170 : vector<8x384xf32>
    %173 = arith.divf %171, %172 : vector<8x384xf32>
    %174 = vector.extract_strided_slice %167 {offsets = [0, 384], sizes = [8, 128], strides = [1, 1]} : vector<8x512xf32> to vector<8x128xf32>
    %175 = math.tanh %174 : vector<8x128xf32>
    %176 = vector.extract_strided_slice %173 {offsets = [0, 0], sizes = [8, 128], strides = [1, 1]} : vector<8x384xf32> to vector<8x128xf32>
    %177 = vector.extract_strided_slice %173 {offsets = [0, 128], sizes = [8, 128], strides = [1, 1]} : vector<8x384xf32> to vector<8x128xf32>
    %178 = vector.extract_strided_slice %173 {offsets = [0, 256], sizes = [8, 128], strides = [1, 1]} : vector<8x384xf32> to vector<8x128xf32>
    %179 = arith.mulf %177, %139 : vector<8x128xf32>
    %180 = arith.mulf %176, %175 : vector<8x128xf32>
    %181 = arith.addf %179, %180 : vector<8x128xf32>
    %182 = math.tanh %181 : vector<8x128xf32>
    %183 = arith.mulf %178, %182 : vector<8x128xf32>
    %184 = arith.truncf %183 : vector<8x128xf32> to vector<8x128xbf16>
    %cst_32 = arith.constant dense<0.000000e+00> : vector<8x512xf32>
    %185 = tpu.matmul %184, %5, %cst_32 {dimension_numbers = #tpu.dot_dimension_numbers<[1], [0], [0], [1], [0, 0, 1, 1], [], []>} : vector<8x128xbf16>, vector<128x512xbf16>, vector<8x512xf32> -> vector<8x512xf32>
    %186 = arith.truncf %162 : vector<8x128xf32> to vector<8x128xbf16>
    %cst_33 = arith.constant dense<0.000000e+00> : vector<8x512xf32>
    %187 = tpu.matmul %186, %2, %cst_33 {dimension_numbers = #tpu.dot_dimension_numbers<[1], [0], [0], [1], [0, 0, 1, 1], [], []>} : vector<8x128xbf16>, vector<128x512xbf16>, vector<8x512xf32> -> vector<8x512xf32>
    %188 = arith.addf %32, %187 : vector<8x512xf32>
    %189 = vector.extract_strided_slice %188 {offsets = [0, 0], sizes = [8, 384], strides = [1, 1]} : vector<8x512xf32> to vector<8x384xf32>
    %190 = arith.negf %189 : vector<8x384xf32>
    %191 = math.exp %190 : vector<8x384xf32>
    %cst_34 = arith.constant 1.000000e+00 : f32
    %192 = vector.broadcast %cst_34 : f32 to vector<8x384xf32>
    %193 = arith.addf %192, %191 : vector<8x384xf32>
    %194 = arith.divf %192, %193 : vector<8x384xf32>
    %195 = vector.extract_strided_slice %188 {offsets = [0, 384], sizes = [8, 128], strides = [1, 1]} : vector<8x512xf32> to vector<8x128xf32>
    %196 = math.tanh %195 : vector<8x128xf32>
    %197 = vector.extract_strided_slice %194 {offsets = [0, 0], sizes = [8, 128], strides = [1, 1]} : vector<8x384xf32> to vector<8x128xf32>
    %198 = vector.extract_strided_slice %194 {offsets = [0, 128], sizes = [8, 128], strides = [1, 1]} : vector<8x384xf32> to vector<8x128xf32>
    %199 = vector.extract_strided_slice %194 {offsets = [0, 256], sizes = [8, 128], strides = [1, 1]} : vector<8x384xf32> to vector<8x128xf32>
    %200 = arith.mulf %198, %160 : vector<8x128xf32>
    %201 = arith.mulf %197, %196 : vector<8x128xf32>
    %202 = arith.addf %200, %201 : vector<8x128xf32>
    %203 = math.tanh %202 : vector<8x128xf32>
    %204 = arith.mulf %199, %203 : vector<8x128xf32>
    %205 = vector.broadcast %6 : vector<1x512xf32> to vector<8x512xf32>
    %206 = arith.addf %185, %205 : vector<8x512xf32>
    %207 = arith.truncf %204 : vector<8x128xf32> to vector<8x128xbf16>
    %cst_35 = arith.constant dense<0.000000e+00> : vector<8x512xf32>
    %208 = tpu.matmul %207, %4, %cst_35 {dimension_numbers = #tpu.dot_dimension_numbers<[1], [0], [0], [1], [0, 0, 1, 1], [], []>} : vector<8x128xbf16>, vector<128x512xbf16>, vector<8x512xf32> -> vector<8x512xf32>
    %209 = arith.addf %206, %208 : vector<8x512xf32>
    %210 = vector.extract_strided_slice %209 {offsets = [0, 0], sizes = [8, 384], strides = [1, 1]} : vector<8x512xf32> to vector<8x384xf32>
    %211 = arith.negf %210 : vector<8x384xf32>
    %212 = math.exp %211 : vector<8x384xf32>
    %cst_36 = arith.constant 1.000000e+00 : f32
    %213 = vector.broadcast %cst_36 : f32 to vector<8x384xf32>
    %214 = arith.addf %213, %212 : vector<8x384xf32>
    %215 = arith.divf %213, %214 : vector<8x384xf32>
    %216 = vector.extract_strided_slice %209 {offsets = [0, 384], sizes = [8, 128], strides = [1, 1]} : vector<8x512xf32> to vector<8x128xf32>
    %217 = math.tanh %216 : vector<8x128xf32>
    %218 = vector.extract_strided_slice %215 {offsets = [0, 0], sizes = [8, 128], strides = [1, 1]} : vector<8x384xf32> to vector<8x128xf32>
    %219 = vector.extract_strided_slice %215 {offsets = [0, 128], sizes = [8, 128], strides = [1, 1]} : vector<8x384xf32> to vector<8x128xf32>
    %220 = vector.extract_strided_slice %215 {offsets = [0, 256], sizes = [8, 128], strides = [1, 1]} : vector<8x384xf32> to vector<8x128xf32>
    %221 = arith.mulf %219, %181 : vector<8x128xf32>
    %222 = arith.mulf %218, %217 : vector<8x128xf32>
    %223 = arith.addf %221, %222 : vector<8x128xf32>
    %224 = math.tanh %223 : vector<8x128xf32>
    %225 = arith.mulf %220, %224 : vector<8x128xf32>
    %226 = arith.truncf %225 : vector<8x128xf32> to vector<8x128xbf16>
    %cst_37 = arith.constant dense<0.000000e+00> : vector<8x512xf32>
    %227 = tpu.matmul %226, %5, %cst_37 {dimension_numbers = #tpu.dot_dimension_numbers<[1], [0], [0], [1], [0, 0, 1, 1], [], []>} : vector<8x128xbf16>, vector<128x512xbf16>, vector<8x512xf32> -> vector<8x512xf32>
    %228 = arith.truncf %204 : vector<8x128xf32> to vector<8x128xbf16>
    %cst_38 = arith.constant dense<0.000000e+00> : vector<8x512xf32>
    %229 = tpu.matmul %228, %2, %cst_38 {dimension_numbers = #tpu.dot_dimension_numbers<[1], [0], [0], [1], [0, 0, 1, 1], [], []>} : vector<8x128xbf16>, vector<128x512xbf16>, vector<8x512xf32> -> vector<8x512xf32>
    %230 = arith.addf %38, %229 : vector<8x512xf32>
    %231 = vector.extract_strided_slice %230 {offsets = [0, 0], sizes = [8, 384], strides = [1, 1]} : vector<8x512xf32> to vector<8x384xf32>
    %232 = arith.negf %231 : vector<8x384xf32>
    %233 = math.exp %232 : vector<8x384xf32>
    %cst_39 = arith.constant 1.000000e+00 : f32
    %234 = vector.broadcast %cst_39 : f32 to vector<8x384xf32>
    %235 = arith.addf %234, %233 : vector<8x384xf32>
    %236 = arith.divf %234, %235 : vector<8x384xf32>
    %237 = vector.extract_strided_slice %230 {offsets = [0, 384], sizes = [8, 128], strides = [1, 1]} : vector<8x512xf32> to vector<8x128xf32>
    %238 = math.tanh %237 : vector<8x128xf32>
    %239 = vector.extract_strided_slice %236 {offsets = [0, 0], sizes = [8, 128], strides = [1, 1]} : vector<8x384xf32> to vector<8x128xf32>
    %240 = vector.extract_strided_slice %236 {offsets = [0, 128], sizes = [8, 128], strides = [1, 1]} : vector<8x384xf32> to vector<8x128xf32>
    %241 = vector.extract_strided_slice %236 {offsets = [0, 256], sizes = [8, 128], strides = [1, 1]} : vector<8x384xf32> to vector<8x128xf32>
    %242 = arith.mulf %240, %202 : vector<8x128xf32>
    %243 = arith.mulf %239, %238 : vector<8x128xf32>
    %244 = arith.addf %242, %243 : vector<8x128xf32>
    %245 = math.tanh %244 : vector<8x128xf32>
    %246 = arith.mulf %241, %245 : vector<8x128xf32>
    %247 = vector.broadcast %6 : vector<1x512xf32> to vector<8x512xf32>
    %248 = arith.addf %227, %247 : vector<8x512xf32>
    %249 = arith.truncf %246 : vector<8x128xf32> to vector<8x128xbf16>
    %cst_40 = arith.constant dense<0.000000e+00> : vector<8x512xf32>
    %250 = tpu.matmul %249, %4, %cst_40 {dimension_numbers = #tpu.dot_dimension_numbers<[1], [0], [0], [1], [0, 0, 1, 1], [], []>} : vector<8x128xbf16>, vector<128x512xbf16>, vector<8x512xf32> -> vector<8x512xf32>
    %251 = arith.addf %248, %250 : vector<8x512xf32>
    %252 = vector.extract_strided_slice %251 {offsets = [0, 0], sizes = [8, 384], strides = [1, 1]} : vector<8x512xf32> to vector<8x384xf32>
    %253 = arith.negf %252 : vector<8x384xf32>
    %254 = math.exp %253 : vector<8x384xf32>
    %cst_41 = arith.constant 1.000000e+00 : f32
    %255 = vector.broadcast %cst_41 : f32 to vector<8x384xf32>
    %256 = arith.addf %255, %254 : vector<8x384xf32>
    %257 = arith.divf %255, %256 : vector<8x384xf32>
    %258 = vector.extract_strided_slice %251 {offsets = [0, 384], sizes = [8, 128], strides = [1, 1]} : vector<8x512xf32> to vector<8x128xf32>
    %259 = math.tanh %258 : vector<8x128xf32>
    %260 = vector.extract_strided_slice %257 {offsets = [0, 0], sizes = [8, 128], strides = [1, 1]} : vector<8x384xf32> to vector<8x128xf32>
    %261 = vector.extract_strided_slice %257 {offsets = [0, 128], sizes = [8, 128], strides = [1, 1]} : vector<8x384xf32> to vector<8x128xf32>
    %262 = vector.extract_strided_slice %257 {offsets = [0, 256], sizes = [8, 128], strides = [1, 1]} : vector<8x384xf32> to vector<8x128xf32>
    %263 = arith.mulf %261, %223 : vector<8x128xf32>
    %264 = arith.mulf %260, %259 : vector<8x128xf32>
    %265 = arith.addf %263, %264 : vector<8x128xf32>
    %266 = math.tanh %265 : vector<8x128xf32>
    %267 = arith.mulf %262, %266 : vector<8x128xf32>
    %268 = arith.truncf %267 : vector<8x128xf32> to vector<8x128xbf16>
    %cst_42 = arith.constant dense<0.000000e+00> : vector<8x512xf32>
    %269 = tpu.matmul %268, %5, %cst_42 {dimension_numbers = #tpu.dot_dimension_numbers<[1], [0], [0], [1], [0, 0, 1, 1], [], []>} : vector<8x128xbf16>, vector<128x512xbf16>, vector<8x512xf32> -> vector<8x512xf32>
    %270 = arith.truncf %246 : vector<8x128xf32> to vector<8x128xbf16>
    %cst_43 = arith.constant dense<0.000000e+00> : vector<8x512xf32>
    %271 = tpu.matmul %270, %2, %cst_43 {dimension_numbers = #tpu.dot_dimension_numbers<[1], [0], [0], [1], [0, 0, 1, 1], [], []>} : vector<8x128xbf16>, vector<128x512xbf16>, vector<8x512xf32> -> vector<8x512xf32>
    %272 = arith.addf %44, %271 : vector<8x512xf32>
    %273 = vector.extract_strided_slice %272 {offsets = [0, 0], sizes = [8, 384], strides = [1, 1]} : vector<8x512xf32> to vector<8x384xf32>
    %274 = arith.negf %273 : vector<8x384xf32>
    %275 = math.exp %274 : vector<8x384xf32>
    %cst_44 = arith.constant 1.000000e+00 : f32
    %276 = vector.broadcast %cst_44 : f32 to vector<8x384xf32>
    %277 = arith.addf %276, %275 : vector<8x384xf32>
    %278 = arith.divf %276, %277 : vector<8x384xf32>
    %279 = vector.extract_strided_slice %272 {offsets = [0, 384], sizes = [8, 128], strides = [1, 1]} : vector<8x512xf32> to vector<8x128xf32>
    %280 = math.tanh %279 : vector<8x128xf32>
    %281 = vector.extract_strided_slice %278 {offsets = [0, 0], sizes = [8, 128], strides = [1, 1]} : vector<8x384xf32> to vector<8x128xf32>
    %282 = vector.extract_strided_slice %278 {offsets = [0, 128], sizes = [8, 128], strides = [1, 1]} : vector<8x384xf32> to vector<8x128xf32>
    %283 = vector.extract_strided_slice %278 {offsets = [0, 256], sizes = [8, 128], strides = [1, 1]} : vector<8x384xf32> to vector<8x128xf32>
    %284 = arith.mulf %282, %244 : vector<8x128xf32>
    %285 = arith.mulf %281, %280 : vector<8x128xf32>
    %286 = arith.addf %284, %285 : vector<8x128xf32>
    %287 = math.tanh %286 : vector<8x128xf32>
    %288 = arith.mulf %283, %287 : vector<8x128xf32>
    %289 = vector.broadcast %6 : vector<1x512xf32> to vector<8x512xf32>
    %290 = arith.addf %269, %289 : vector<8x512xf32>
    %291 = arith.truncf %288 : vector<8x128xf32> to vector<8x128xbf16>
    %cst_45 = arith.constant dense<0.000000e+00> : vector<8x512xf32>
    %292 = tpu.matmul %291, %4, %cst_45 {dimension_numbers = #tpu.dot_dimension_numbers<[1], [0], [0], [1], [0, 0, 1, 1], [], []>} : vector<8x128xbf16>, vector<128x512xbf16>, vector<8x512xf32> -> vector<8x512xf32>
    %293 = arith.addf %290, %292 : vector<8x512xf32>
    %294 = vector.extract_strided_slice %293 {offsets = [0, 0], sizes = [8, 384], strides = [1, 1]} : vector<8x512xf32> to vector<8x384xf32>
    %295 = arith.negf %294 : vector<8x384xf32>
    %296 = math.exp %295 : vector<8x384xf32>
    %cst_46 = arith.constant 1.000000e+00 : f32
    %297 = vector.broadcast %cst_46 : f32 to vector<8x384xf32>
    %298 = arith.addf %297, %296 : vector<8x384xf32>
    %299 = arith.divf %297, %298 : vector<8x384xf32>
    %300 = vector.extract_strided_slice %293 {offsets = [0, 384], sizes = [8, 128], strides = [1, 1]} : vector<8x512xf32> to vector<8x128xf32>
    %301 = math.tanh %300 : vector<8x128xf32>
    %302 = vector.extract_strided_slice %299 {offsets = [0, 0], sizes = [8, 128], strides = [1, 1]} : vector<8x384xf32> to vector<8x128xf32>
    %303 = vector.extract_strided_slice %299 {offsets = [0, 128], sizes = [8, 128], strides = [1, 1]} : vector<8x384xf32> to vector<8x128xf32>
    %304 = vector.extract_strided_slice %299 {offsets = [0, 256], sizes = [8, 128], strides = [1, 1]} : vector<8x384xf32> to vector<8x128xf32>
    %305 = arith.mulf %303, %265 : vector<8x128xf32>
    %306 = arith.mulf %302, %301 : vector<8x128xf32>
    %307 = arith.addf %305, %306 : vector<8x128xf32>
    %308 = math.tanh %307 : vector<8x128xf32>
    %309 = arith.mulf %304, %308 : vector<8x128xf32>
    %310 = arith.truncf %309 : vector<8x128xf32> to vector<8x128xbf16>
    %cst_47 = arith.constant dense<0.000000e+00> : vector<8x512xf32>
    %311 = tpu.matmul %310, %5, %cst_47 {dimension_numbers = #tpu.dot_dimension_numbers<[1], [0], [0], [1], [0, 0, 1, 1], [], []>} : vector<8x128xbf16>, vector<128x512xbf16>, vector<8x512xf32> -> vector<8x512xf32>
    %312 = arith.truncf %288 : vector<8x128xf32> to vector<8x128xbf16>
    %cst_48 = arith.constant dense<0.000000e+00> : vector<8x512xf32>
    %313 = tpu.matmul %312, %2, %cst_48 {dimension_numbers = #tpu.dot_dimension_numbers<[1], [0], [0], [1], [0, 0, 1, 1], [], []>} : vector<8x128xbf16>, vector<128x512xbf16>, vector<8x512xf32> -> vector<8x512xf32>
    %314 = arith.addf %50, %313 : vector<8x512xf32>
    %315 = vector.extract_strided_slice %314 {offsets = [0, 0], sizes = [8, 384], strides = [1, 1]} : vector<8x512xf32> to vector<8x384xf32>
    %316 = arith.negf %315 : vector<8x384xf32>
    %317 = math.exp %316 : vector<8x384xf32>
    %cst_49 = arith.constant 1.000000e+00 : f32
    %318 = vector.broadcast %cst_49 : f32 to vector<8x384xf32>
    %319 = arith.addf %318, %317 : vector<8x384xf32>
    %320 = arith.divf %318, %319 : vector<8x384xf32>
    %321 = vector.extract_strided_slice %314 {offsets = [0, 384], sizes = [8, 128], strides = [1, 1]} : vector<8x512xf32> to vector<8x128xf32>
    %322 = math.tanh %321 : vector<8x128xf32>
    %323 = vector.extract_strided_slice %320 {offsets = [0, 0], sizes = [8, 128], strides = [1, 1]} : vector<8x384xf32> to vector<8x128xf32>
    %324 = vector.extract_strided_slice %320 {offsets = [0, 128], sizes = [8, 128], strides = [1, 1]} : vector<8x384xf32> to vector<8x128xf32>
    %325 = vector.extract_strided_slice %320 {offsets = [0, 256], sizes = [8, 128], strides = [1, 1]} : vector<8x384xf32> to vector<8x128xf32>
    %326 = arith.mulf %324, %286 : vector<8x128xf32>
    %327 = arith.mulf %323, %322 : vector<8x128xf32>
    %328 = arith.addf %326, %327 : vector<8x128xf32>
    %329 = math.tanh %328 : vector<8x128xf32>
    %330 = arith.mulf %325, %329 : vector<8x128xf32>
    %331 = vector.broadcast %6 : vector<1x512xf32> to vector<8x512xf32>
    %332 = arith.addf %311, %331 : vector<8x512xf32>
    %333 = arith.truncf %330 : vector<8x128xf32> to vector<8x128xbf16>
    %cst_50 = arith.constant dense<0.000000e+00> : vector<8x512xf32>
    %334 = tpu.matmul %333, %4, %cst_50 {dimension_numbers = #tpu.dot_dimension_numbers<[1], [0], [0], [1], [0, 0, 1, 1], [], []>} : vector<8x128xbf16>, vector<128x512xbf16>, vector<8x512xf32> -> vector<8x512xf32>
    %335 = arith.addf %332, %334 : vector<8x512xf32>
    %336 = vector.extract_strided_slice %335 {offsets = [0, 0], sizes = [8, 384], strides = [1, 1]} : vector<8x512xf32> to vector<8x384xf32>
    %337 = arith.negf %336 : vector<8x384xf32>
    %338 = math.exp %337 : vector<8x384xf32>
    %cst_51 = arith.constant 1.000000e+00 : f32
    %339 = vector.broadcast %cst_51 : f32 to vector<8x384xf32>
    %340 = arith.addf %339, %338 : vector<8x384xf32>
    %341 = arith.divf %339, %340 : vector<8x384xf32>
    %342 = vector.extract_strided_slice %335 {offsets = [0, 384], sizes = [8, 128], strides = [1, 1]} : vector<8x512xf32> to vector<8x128xf32>
    %343 = math.tanh %342 : vector<8x128xf32>
    %344 = vector.extract_strided_slice %341 {offsets = [0, 0], sizes = [8, 128], strides = [1, 1]} : vector<8x384xf32> to vector<8x128xf32>
    %345 = vector.extract_strided_slice %341 {offsets = [0, 128], sizes = [8, 128], strides = [1, 1]} : vector<8x384xf32> to vector<8x128xf32>
    %346 = vector.extract_strided_slice %341 {offsets = [0, 256], sizes = [8, 128], strides = [1, 1]} : vector<8x384xf32> to vector<8x128xf32>
    %347 = arith.mulf %345, %307 : vector<8x128xf32>
    %348 = arith.mulf %344, %343 : vector<8x128xf32>
    %349 = arith.addf %347, %348 : vector<8x128xf32>
    %350 = math.tanh %349 : vector<8x128xf32>
    %351 = arith.mulf %346, %350 : vector<8x128xf32>
    %352 = arith.truncf %351 : vector<8x128xf32> to vector<8x128xbf16>
    %cst_52 = arith.constant dense<0.000000e+00> : vector<8x512xf32>
    %353 = tpu.matmul %352, %5, %cst_52 {dimension_numbers = #tpu.dot_dimension_numbers<[1], [0], [0], [1], [0, 0, 1, 1], [], []>} : vector<8x128xbf16>, vector<128x512xbf16>, vector<8x512xf32> -> vector<8x512xf32>
    %354 = arith.truncf %330 : vector<8x128xf32> to vector<8x128xbf16>
    %cst_53 = arith.constant dense<0.000000e+00> : vector<8x512xf32>
    %355 = tpu.matmul %354, %2, %cst_53 {dimension_numbers = #tpu.dot_dimension_numbers<[1], [0], [0], [1], [0, 0, 1, 1], [], []>} : vector<8x128xbf16>, vector<128x512xbf16>, vector<8x512xf32> -> vector<8x512xf32>
    %356 = arith.addf %56, %355 : vector<8x512xf32>
    %357 = vector.extract_strided_slice %356 {offsets = [0, 0], sizes = [8, 384], strides = [1, 1]} : vector<8x512xf32> to vector<8x384xf32>
    %358 = arith.negf %357 : vector<8x384xf32>
    %359 = math.exp %358 : vector<8x384xf32>
    %cst_54 = arith.constant 1.000000e+00 : f32
    %360 = vector.broadcast %cst_54 : f32 to vector<8x384xf32>
    %361 = arith.addf %360, %359 : vector<8x384xf32>
    %362 = arith.divf %360, %361 : vector<8x384xf32>
    %363 = vector.extract_strided_slice %356 {offsets = [0, 384], sizes = [8, 128], strides = [1, 1]} : vector<8x512xf32> to vector<8x128xf32>
    %364 = math.tanh %363 : vector<8x128xf32>
    %365 = vector.extract_strided_slice %362 {offsets = [0, 0], sizes = [8, 128], strides = [1, 1]} : vector<8x384xf32> to vector<8x128xf32>
    %366 = vector.extract_strided_slice %362 {offsets = [0, 128], sizes = [8, 128], strides = [1, 1]} : vector<8x384xf32> to vector<8x128xf32>
    %367 = vector.extract_strided_slice %362 {offsets = [0, 256], sizes = [8, 128], strides = [1, 1]} : vector<8x384xf32> to vector<8x128xf32>
    %368 = arith.mulf %366, %328 : vector<8x128xf32>
    %369 = arith.mulf %365, %364 : vector<8x128xf32>
    %370 = arith.addf %368, %369 : vector<8x128xf32>
    %371 = math.tanh %370 : vector<8x128xf32>
    %372 = arith.mulf %367, %371 : vector<8x128xf32>
    %373 = vector.broadcast %6 : vector<1x512xf32> to vector<8x512xf32>
    %374 = arith.addf %353, %373 : vector<8x512xf32>
    %375 = arith.truncf %372 : vector<8x128xf32> to vector<8x128xbf16>
    %cst_55 = arith.constant dense<0.000000e+00> : vector<8x512xf32>
    %376 = tpu.matmul %375, %4, %cst_55 {dimension_numbers = #tpu.dot_dimension_numbers<[1], [0], [0], [1], [0, 0, 1, 1], [], []>} : vector<8x128xbf16>, vector<128x512xbf16>, vector<8x512xf32> -> vector<8x512xf32>
    %377 = arith.addf %374, %376 : vector<8x512xf32>
    %378 = vector.extract_strided_slice %377 {offsets = [0, 0], sizes = [8, 384], strides = [1, 1]} : vector<8x512xf32> to vector<8x384xf32>
    %379 = arith.negf %378 : vector<8x384xf32>
    %380 = math.exp %379 : vector<8x384xf32>
    %cst_56 = arith.constant 1.000000e+00 : f32
    %381 = vector.broadcast %cst_56 : f32 to vector<8x384xf32>
    %382 = arith.addf %381, %380 : vector<8x384xf32>
    %383 = arith.divf %381, %382 : vector<8x384xf32>
    %384 = vector.extract_strided_slice %377 {offsets = [0, 384], sizes = [8, 128], strides = [1, 1]} : vector<8x512xf32> to vector<8x128xf32>
    %385 = math.tanh %384 : vector<8x128xf32>
    %386 = vector.extract_strided_slice %383 {offsets = [0, 0], sizes = [8, 128], strides = [1, 1]} : vector<8x384xf32> to vector<8x128xf32>
    %387 = vector.extract_strided_slice %383 {offsets = [0, 128], sizes = [8, 128], strides = [1, 1]} : vector<8x384xf32> to vector<8x128xf32>
    %388 = vector.extract_strided_slice %383 {offsets = [0, 256], sizes = [8, 128], strides = [1, 1]} : vector<8x384xf32> to vector<8x128xf32>
    %389 = arith.mulf %387, %349 : vector<8x128xf32>
    %390 = arith.mulf %386, %385 : vector<8x128xf32>
    %391 = arith.addf %389, %390 : vector<8x128xf32>
    %392 = math.tanh %391 : vector<8x128xf32>
    %393 = arith.mulf %388, %392 : vector<8x128xf32>
    %394 = tpu.concatenate %99, %141, %183, %225, %267, %309, %351, %393 in 0 : vector<8x128xf32>, vector<8x128xf32>, vector<8x128xf32>, vector<8x128xf32>, vector<8x128xf32>, vector<8x128xf32>, vector<8x128xf32>, vector<8x128xf32> -> vector<64x128xf32>
    %395 = vector.broadcast %7 : vector<1x128xf32> to vector<64x128xf32>
    %396 = arith.mulf %394, %395 : vector<64x128xf32>
    %cst_57 = arith.constant dense<0.000000e+00> : vector<64xf32>
    %397 = vector.multi_reduction <add>, %396, %cst_57 [1] : vector<64x128xf32> to vector<64xf32>
    %398 = vector.shape_cast %397 : vector<64xf32> to vector<64x1xf32>
    %399 = vector.broadcast %8 : vector<1x1xf32> to vector<64x1xf32>
    %400 = arith.addf %398, %399 : vector<64x1xf32>
    %401 = tpu.iota {dimensions = array<i32: 1>} : vector<1x8xi32>
    %402 = vector.extract_strided_slice %400 {offsets = [0, 0], sizes = [8, 1], strides = [1, 1]} : vector<64x1xf32> to vector<8x1xf32>
    %c0_i32 = arith.constant 0 : i32
    %403 = vector.broadcast %c0_i32 : i32 to vector<1x8xi32>
    %404 = arith.cmpi eq, %401, %403 : vector<1x8xi32>
    %405 = arith.extui %404 : vector<1x8xi1> to vector<1x8xi32>
    %406 = arith.sitofp %405 : vector<1x8xi32> to vector<1x8xf32>
    %407 = vector.broadcast %402 : vector<8x1xf32> to vector<8x8xf32>
    %408 = vector.broadcast %406 : vector<1x8xf32> to vector<8x8xf32>
    %409 = arith.mulf %407, %408 : vector<8x8xf32>
    %410 = vector.extract_strided_slice %400 {offsets = [8, 0], sizes = [8, 1], strides = [1, 1]} : vector<64x1xf32> to vector<8x1xf32>
    %c1_i32 = arith.constant 1 : i32
    %411 = vector.broadcast %c1_i32 : i32 to vector<1x8xi32>
    %412 = arith.cmpi eq, %401, %411 : vector<1x8xi32>
    %413 = arith.extui %412 : vector<1x8xi1> to vector<1x8xi32>
    %414 = arith.sitofp %413 : vector<1x8xi32> to vector<1x8xf32>
    %415 = vector.broadcast %410 : vector<8x1xf32> to vector<8x8xf32>
    %416 = vector.broadcast %414 : vector<1x8xf32> to vector<8x8xf32>
    %417 = arith.mulf %415, %416 : vector<8x8xf32>
    %418 = vector.extract_strided_slice %400 {offsets = [16, 0], sizes = [8, 1], strides = [1, 1]} : vector<64x1xf32> to vector<8x1xf32>
    %c2_i32 = arith.constant 2 : i32
    %419 = vector.broadcast %c2_i32 : i32 to vector<1x8xi32>
    %420 = arith.cmpi eq, %401, %419 : vector<1x8xi32>
    %421 = arith.extui %420 : vector<1x8xi1> to vector<1x8xi32>
    %422 = arith.sitofp %421 : vector<1x8xi32> to vector<1x8xf32>
    %423 = vector.broadcast %418 : vector<8x1xf32> to vector<8x8xf32>
    %424 = vector.broadcast %422 : vector<1x8xf32> to vector<8x8xf32>
    %425 = arith.mulf %423, %424 : vector<8x8xf32>
    %426 = vector.extract_strided_slice %400 {offsets = [24, 0], sizes = [8, 1], strides = [1, 1]} : vector<64x1xf32> to vector<8x1xf32>
    %c3_i32 = arith.constant 3 : i32
    %427 = vector.broadcast %c3_i32 : i32 to vector<1x8xi32>
    %428 = arith.cmpi eq, %401, %427 : vector<1x8xi32>
    %429 = arith.extui %428 : vector<1x8xi1> to vector<1x8xi32>
    %430 = arith.sitofp %429 : vector<1x8xi32> to vector<1x8xf32>
    %431 = vector.broadcast %426 : vector<8x1xf32> to vector<8x8xf32>
    %432 = vector.broadcast %430 : vector<1x8xf32> to vector<8x8xf32>
    %433 = arith.mulf %431, %432 : vector<8x8xf32>
    %434 = vector.extract_strided_slice %400 {offsets = [32, 0], sizes = [8, 1], strides = [1, 1]} : vector<64x1xf32> to vector<8x1xf32>
    %c4_i32 = arith.constant 4 : i32
    %435 = vector.broadcast %c4_i32 : i32 to vector<1x8xi32>
    %436 = arith.cmpi eq, %401, %435 : vector<1x8xi32>
    %437 = arith.extui %436 : vector<1x8xi1> to vector<1x8xi32>
    %438 = arith.sitofp %437 : vector<1x8xi32> to vector<1x8xf32>
    %439 = vector.broadcast %434 : vector<8x1xf32> to vector<8x8xf32>
    %440 = vector.broadcast %438 : vector<1x8xf32> to vector<8x8xf32>
    %441 = arith.mulf %439, %440 : vector<8x8xf32>
    %442 = vector.extract_strided_slice %400 {offsets = [40, 0], sizes = [8, 1], strides = [1, 1]} : vector<64x1xf32> to vector<8x1xf32>
    %c5_i32 = arith.constant 5 : i32
    %443 = vector.broadcast %c5_i32 : i32 to vector<1x8xi32>
    %444 = arith.cmpi eq, %401, %443 : vector<1x8xi32>
    %445 = arith.extui %444 : vector<1x8xi1> to vector<1x8xi32>
    %446 = arith.sitofp %445 : vector<1x8xi32> to vector<1x8xf32>
    %447 = vector.broadcast %442 : vector<8x1xf32> to vector<8x8xf32>
    %448 = vector.broadcast %446 : vector<1x8xf32> to vector<8x8xf32>
    %449 = arith.mulf %447, %448 : vector<8x8xf32>
    %450 = vector.extract_strided_slice %400 {offsets = [48, 0], sizes = [8, 1], strides = [1, 1]} : vector<64x1xf32> to vector<8x1xf32>
    %c6_i32 = arith.constant 6 : i32
    %451 = vector.broadcast %c6_i32 : i32 to vector<1x8xi32>
    %452 = arith.cmpi eq, %401, %451 : vector<1x8xi32>
    %453 = arith.extui %452 : vector<1x8xi1> to vector<1x8xi32>
    %454 = arith.sitofp %453 : vector<1x8xi32> to vector<1x8xf32>
    %455 = vector.broadcast %450 : vector<8x1xf32> to vector<8x8xf32>
    %456 = vector.broadcast %454 : vector<1x8xf32> to vector<8x8xf32>
    %457 = arith.mulf %455, %456 : vector<8x8xf32>
    %458 = vector.extract_strided_slice %400 {offsets = [56, 0], sizes = [8, 1], strides = [1, 1]} : vector<64x1xf32> to vector<8x1xf32>
    %c7_i32 = arith.constant 7 : i32
    %459 = vector.broadcast %c7_i32 : i32 to vector<1x8xi32>
    %460 = arith.cmpi eq, %401, %459 : vector<1x8xi32>
    %461 = arith.extui %460 : vector<1x8xi1> to vector<1x8xi32>
    %462 = arith.sitofp %461 : vector<1x8xi32> to vector<1x8xf32>
    %463 = vector.broadcast %458 : vector<8x1xf32> to vector<8x8xf32>
    %464 = vector.broadcast %462 : vector<1x8xf32> to vector<8x8xf32>
    %465 = arith.mulf %463, %464 : vector<8x8xf32>
    %466 = arith.addf %409, %417 : vector<8x8xf32>
    %467 = arith.addf %425, %433 : vector<8x8xf32>
    %468 = arith.addf %441, %449 : vector<8x8xf32>
    %469 = arith.addf %457, %465 : vector<8x8xf32>
    %470 = arith.addf %466, %467 : vector<8x8xf32>
    %471 = arith.addf %468, %469 : vector<8x8xf32>
    %472 = arith.addf %470, %471 : vector<8x8xf32>
    %c0_58 = arith.constant 0 : index
    %c0_59 = arith.constant 0 : index
    %473 = vector.load %arg9[%c0_58, %c0_59] : memref<8x8xf32, #tpu.memory_space<vmem>>, vector<8x8xf32>
    tpu.vector_store %arg9[%c0_58, %c0_59], %472 {strides = array<i32>} : memref<8x8xf32, #tpu.memory_space<vmem>>, vector<8x8xf32>,
    return
  }
}

</mosaic_0001>

<llo_original>
// kernel: tpu_custom_call.1
$region0: #{tpu_custom_call.1}
  #allocation0 [shape = 'u32[]', space=smem, size = 0x4, offset = 0x4, fixed_abs, tag = 'smem constant byte address 0x4 - core index']
  #allocation1 [shape = 'u32[72,128]{1,0:T(1,128)}', space=vmem, size = 0x9000, scoped, tag = 'internal scratch']
  #allocation2 [shape = 'f32[1,1]{1,0:T(1,128)S(1)}', space=vmem, size = 0x200, scoped, tag = 'scoped memory for tpu_custom_call.1']
  %s0 = inlined_call_operand.hbm [shape: f32[8,8], index: 0, kind: input, shape index: {}]
  %s1 = inlined_call_operand.hbm [shape: f32[1,512], index: 1, kind: input, shape index: {}]
  %s2 = inlined_call_operand.hbm [shape: bf16[128,512], index: 2, kind: input, shape index: {}]
  %s3 = inlined_call_operand.vmem [shape: f32[1,512], index: 3, kind: input, shape index: {}]
  %s4 = inlined_call_operand.hbm [shape: bf16[128,512], index: 4, kind: input, shape index: {}]
  %s5 = inlined_call_operand.hbm [shape: bf16[128,512], index: 5, kind: input, shape index: {}]
  %s6 = inlined_call_operand.hbm [shape: f32[1,512], index: 6, kind: input, shape index: {}]
  %s7 = inlined_call_operand.vmem [shape: f32[1,128], index: 7, kind: input, shape index: {}]
  %s8 = inlined_call_operand.<no memory space> [shape: f32[1,1], index: 8, kind: input, shape index: {}]
  %s9 = inlined_call_operand.hbm [shape: f32[8,8], index: 9, kind: output, shape index: {}]
  %s10 = sld [smem:[#allocation0]]
  $region70: #{tpu_custom_call.1} parent=0
    _
  %s12 = ssub.s32 1, %s10
  %s13 = scalar_select 0, %s12, %s10
  %v14 = vstv %s8
  %15 = vst [vmem:[#allocation2] sm:$0x1] %v14
  $region1: #{tpu_custom_call.1} parent=0
    #allocation3 [shape = 'u8[4096]{0}', space=vmem, size = 0x1000, scoped, tag = 'input window, operand 0, single buffered']
    #allocation4 [shape = 's32[1]{0}', space=sflag, size = 0x4, scoped, tag = 'scoped memory for tpu_custom_call.1']
    #allocation5 [shape = 's32[1]{0}', space=sflag, size = 0x4, scoped, tag = 'scoped memory for tpu_custom_call.1']
    #allocation6 [shape = 'u8[2048]{0}', space=vmem, size = 0x800, scoped, tag = 'input window, operand 1, single buffered']
    #allocation7 [shape = 's32[1]{0}', space=sflag, size = 0x4, scoped, tag = 'scoped memory for tpu_custom_call.1']
    #allocation8 [shape = 'u8[131072]{0}', space=vmem, size = 0x20000, scoped, tag = 'input window, operand 2, single buffered']
    #allocation9 [shape = 'u8[131072]{0}', space=vmem, size = 0x20000, scoped, tag = 'input window, operand 4, single buffered']
    #allocation10 [shape = 's32[1]{0}', space=sflag, size = 0x4, scoped, tag = 'scoped memory for tpu_custom_call.1']
    #allocation11 [shape = 'u8[131072]{0}', space=vmem, size = 0x20000, scoped, tag = 'input window, operand 5, single buffered']
    #allocation12 [shape = 'u8[2048]{0}', space=vmem, size = 0x800, scoped, tag = 'input window, operand 6, single buffered']
    #allocation13 [shape = 's32[1]{0}', space=sflag, size = 0x4, scoped, tag = 'scoped memory for tpu_custom_call.1']
    #allocation14 [shape = 'u8[4096]{0}', space=vmem, size = 0x1000, scoped, tag = 'output window, operand 0, single buffered']
    %16 = vsyncpa [#allocation4], 0
    %17 = vsyncpa [#allocation7], 0
    %18 = vsyncpa [#allocation10], 0
    %19 = vsyncpa [#allocation13], 0
    %20 = vsyncpa [#allocation5], 0
    // Predicated region
    $region2: #{tpu_custom_call.1} parent=1 // pred_check
      _
    $region3: #{tpu_custom_call.1} parent=1 // pred_check_branch
      %22 = sbr.rel (0) target = $region5
    $region4: #{tpu_custom_call.1} parent=1 // pred_region
      %24 = vsyncadd [#allocation4], 0
      %s26 = sshll.u32 %s0, 4
      %s27 = int_to_ptr.hbm [resolvable:$true] %s26
      %s28 = sshll.u32 [#allocation3], 4
      %s29 = int_to_ptr.vmem [resolvable:$true] %s28
      %31 = dma.hbm_to_vmem [thread:$0]  %s27, 128, %s29, [#allocation4]
    $region5: #{tpu_custom_call.1} parent=1 // pred_fallthru
      _
    // Predicated region
    $region6: #{tpu_custom_call.1} parent=1 // pred_check
      _
    $region7: #{tpu_custom_call.1} parent=1 // pred_check_branch
      %33 = sbr.rel (0) target = $region9
    $region8: #{tpu_custom_call.1} parent=1 // pred_region
      %35 = vsyncadd [#allocation7], 0
      %s37 = sshll.u32 %s1, 4
      %s38 = int_to_ptr.hbm [resolvable:$true] %s37
      %s39 = sshll.u32 [#allocation6], 4
      %s40 = int_to_ptr.vmem [resolvable:$true] %s39
      %42 = dma.hbm_to_vmem [thread:$0]  %s38, 64, %s40, [#allocation7]
    $region9: #{tpu_custom_call.1} parent=1 // pred_fallthru
      _
    // Predicated region
    $region10: #{tpu_custom_call.1} parent=1 // pred_check
      _
    $region11: #{tpu_custom_call.1} parent=1 // pred_check_branch
      %44 = sbr.rel (0) target = $region13
    $region12: #{tpu_custom_call.1} parent=1 // pred_region
      %46 = vsyncadd [#allocation7], 0
      %s47 = sshll.u32 %s2, 4
      %s48 = int_to_ptr.hbm [resolvable:$true] %s47
      %s49 = sshll.u32 [#allocation8], 4
      %s50 = int_to_ptr.vmem [resolvable:$true] %s49
      %55 = dma.hbm_to_vmem [thread:$0]  %s48, 4096, %s50, [#allocation7], 256, 256, 16
    $region13: #{tpu_custom_call.1} parent=1 // pred_fallthru
      _
    // Predicated region
    $region14: #{tpu_custom_call.1} parent=1 // pred_check
      _
    $region15: #{tpu_custom_call.1} parent=1 // pred_check_branch
      %57 = sbr.rel (0) target = $region17
    $region16: #{tpu_custom_call.1} parent=1 // pred_region
      _
    $region17: #{tpu_custom_call.1} parent=1 // pred_fallthru
      _
    // Predicated region
    $region18: #{tpu_custom_call.1} parent=1 // pred_check
      _
    $region19: #{tpu_custom_call.1} parent=1 // pred_check_branch
      %59 = sbr.rel (0) target = $region21
    $region20: #{tpu_custom_call.1} parent=1 // pred_region
      %61 = vsyncadd [#allocation10], 0
      %s62 = sshll.u32 %s4, 4
      %s63 = int_to_ptr.hbm [resolvable:$true] %s62
      %s64 = sshll.u32 [#allocation9], 4
      %s65 = int_to_ptr.vmem [resolvable:$true] %s64
      %70 = dma.hbm_to_vmem [thread:$0]  %s63, 4096, %s65, [#allocation10], 256, 256, 16
    $region21: #{tpu_custom_call.1} parent=1 // pred_fallthru
      _
    // Predicated region
    $region22: #{tpu_custom_call.1} parent=1 // pred_check
      _
    $region23: #{tpu_custom_call.1} parent=1 // pred_check_branch
      %72 = sbr.rel (0) target = $region25
    $region24: #{tpu_custom_call.1} parent=1 // pred_region
      %74 = vsyncadd [#allocation10], 0
      %s75 = sshll.u32 %s5, 4
      %s76 = int_to_ptr.hbm [resolvable:$true] %s75
      %s77 = sshll.u32 [#allocation11], 4
      %s78 = int_to_ptr.vmem [resolvable:$true] %s77
      %83 = dma.hbm_to_vmem [thread:$0]  %s76, 4096, %s78, [#allocation10], 256, 256, 16
    $region25: #{tpu_custom_call.1} parent=1 // pred_fallthru
      _
    // Predicated region
    $region26: #{tpu_custom_call.1} parent=1 // pred_check
      _
    $region27: #{tpu_custom_call.1} parent=1 // pred_check_branch
      %85 = sbr.rel (0) target = $region29
    $region28: #{tpu_custom_call.1} parent=1 // pred_region
      %87 = vsyncadd [#allocation13], 0
      %s89 = sshll.u32 %s6, 4
      %s90 = int_to_ptr.hbm [resolvable:$true] %s89
      %s91 = sshll.u32 [#allocation12], 4
      %s92 = int_to_ptr.vmem [resolvable:$true] %s91
      %94 = dma.hbm_to_vmem [thread:$0]  %s90, 64, %s92, [#allocation13]
    $region29: #{tpu_custom_call.1} parent=1 // pred_fallthru
      _
    // Predicated region
    $region30: #{tpu_custom_call.1} parent=1 // pred_check
      _
    $region31: #{tpu_custom_call.1} parent=1 // pred_check_branch
      %96 = sbr.rel (0) target = $region33
    $region32: #{tpu_custom_call.1} parent=1 // pred_region
      _
    $region33: #{tpu_custom_call.1} parent=1 // pred_fallthru
      _
    // Predicated region
    $region34: #{tpu_custom_call.1} parent=1 // pred_check
      _
    $region35: #{tpu_custom_call.1} parent=1 // pred_check_branch
      %98 = sbr.rel (0) target = $region37
    $region36: #{tpu_custom_call.1} parent=1 // pred_region
      _
    $region37: #{tpu_custom_call.1} parent=1 // pred_fallthru
      _
    // Predicated region
    $region38: #{tpu_custom_call.1} parent=1 // pred_check
      _
    $region39: #{tpu_custom_call.1} parent=1 // pred_check_branch
      %100 = sbr.rel (0) target = $region41
    $region40: #{tpu_custom_call.1} parent=1 // pred_region
      %102 = dma.done [#allocation4], 128
    $region41: #{tpu_custom_call.1} parent=1 // pred_fallthru
      _
    // Predicated region
    $region42: #{tpu_custom_call.1} parent=1 // pred_check
      _
    $region43: #{tpu_custom_call.1} parent=1 // pred_check_branch
      %104 = sbr.rel (0) target = $region45
    $region44: #{tpu_custom_call.1} parent=1 // pred_region
      %106 = dma.done [#allocation7], 64
    $region45: #{tpu_custom_call.1} parent=1 // pred_fallthru
      _
    // Predicated region
    $region46: #{tpu_custom_call.1} parent=1 // pred_check
      _
    $region47: #{tpu_custom_call.1} parent=1 // pred_check_branch
      %108 = sbr.rel (0) target = $region49
    $region48: #{tpu_custom_call.1} parent=1 // pred_region
      %110 = dma.done [#allocation7], 4096
    $region49: #{tpu_custom_call.1} parent=1 // pred_fallthru
      _
    // Predicated region
    $region50: #{tpu_custom_call.1} parent=1 // pred_check
      _
    $region51: #{tpu_custom_call.1} parent=1 // pred_check_branch
      %112 = sbr.rel (0) target = $region53
    $region52: #{tpu_custom_call.1} parent=1 // pred_region
      %114 = dma.done [#allocation10], 4096
    $region53: #{tpu_custom_call.1} parent=1 // pred_fallthru
      _
    // Predicated region
    $region54: #{tpu_custom_call.1} parent=1 // pred_check
      _
    $region55: #{tpu_custom_call.1} parent=1 // pred_check_branch
      %116 = sbr.rel (0) target = $region57
    $region56: #{tpu_custom_call.1} parent=1 // pred_region
      %118 = dma.done [#allocation10], 4096
    $region57: #{tpu_custom_call.1} parent=1 // pred_fallthru
      _
    // Predicated region
    $region58: #{tpu_custom_call.1} parent=1 // pred_check
      _
    $region59: #{tpu_custom_call.1} parent=1 // pred_check_branch
      %120 = sbr.rel (0) target = $region61
    $region60: #{tpu_custom_call.1} parent=1 // pred_region
      %122 = dma.done [#allocation13], 64
    $region61: #{tpu_custom_call.1} parent=1 // pred_fallthru
      _
    %v124 = vld [vmem:[#allocation3] sm:$0xff]
    %v125 = vld [vmem:[#allocation6] sm:$0xf]
    %v126 = vld [vmem:[#allocation8] sm:$0xff]
    %v127 = vld [vmem:[#allocation8 + $0x8] sm:$0xff]
    %v128 = vld [vmem:[#allocation8 + $0x10] sm:$0xff]
    %v129 = vld [vmem:[#allocation8 + $0x18] sm:$0xff]
    %v130 = vld [vmem:[#allocation8 + $0x20] sm:$0xff]
    %v131 = vld [vmem:[#allocation8 + $0x28] sm:$0xff]
    %v132 = vld [vmem:[#allocation8 + $0x30] sm:$0xff]
    %v133 = vld [vmem:[#allocation8 + $0x38] sm:$0xff]
    %v134 = vld [vmem:[#allocation8 + $0x40] sm:$0xff]
    %v135 = vld [vmem:[#allocation8 + $0x48] sm:$0xff]
    %v136 = vld [vmem:[#allocation8 + $0x50] sm:$0xff]
    %v137 = vld [vmem:[#allocation8 + $0x58] sm:$0xff]
    %v138 = vld [vmem:[#allocation8 + $0x60] sm:$0xff]
    %v139 = vld [vmem:[#allocation8 + $0x68] sm:$0xff]
    %v140 = vld [vmem:[#allocation8 + $0x70] sm:$0xff]
    %v141 = vld [vmem:[#allocation8 + $0x78] sm:$0xff]
    %v142 = vld [vmem:[#allocation8 + $0x80] sm:$0xff]
    %v143 = vld [vmem:[#allocation8 + $0x88] sm:$0xff]
    %v144 = vld [vmem:[#allocation8 + $0x90] sm:$0xff]
    %v145 = vld [vmem:[#allocation8 + $0x98] sm:$0xff]
    %v146 = vld [vmem:[#allocation8 + $0xa0] sm:$0xff]
    %v147 = vld [vmem:[#allocation8 + $0xa8] sm:$0xff]
    %v148 = vld [vmem:[#allocation8 + $0xb0] sm:$0xff]
    %v149 = vld [vmem:[#allocation8 + $0xb8] sm:$0xff]
    %v150 = vld [vmem:[#allocation8 + $0xc0] sm:$0xff]
    %v151 = vld [vmem:[#allocation8 + $0xc8] sm:$0xff]
    %v152 = vld [vmem:[#allocation8 + $0xd0] sm:$0xff]
    %v153 = vld [vmem:[#allocation8 + $0xd8] sm:$0xff]
    %v154 = vld [vmem:[#allocation8 + $0xe0] sm:$0xff]
    %v155 = vld [vmem:[#allocation8 + $0xe8] sm:$0xff]
    %v156 = vld [vmem:[#allocation8 + $0xf0] sm:$0xff]
    %v157 = vld [vmem:[#allocation8 + $0xf8] sm:$0xff]
    %v158 = vld [vmem:[%s3] sm:$0xf]
    %v159 = vld [vmem:[#allocation9] sm:$0xff]
    %v160 = vld [vmem:[#allocation9 + $0x8] sm:$0xff]
    %v161 = vld [vmem:[#allocation9 + $0x10] sm:$0xff]
    %v162 = vld [vmem:[#allocation9 + $0x18] sm:$0xff]
    %v163 = vld [vmem:[#allocation9 + $0x20] sm:$0xff]
    %v164 = vld [vmem:[#allocation9 + $0x28] sm:$0xff]
    %v165 = vld [vmem:[#allocation9 + $0x30] sm:$0xff]
    %v166 = vld [vmem:[#allocation9 + $0x38] sm:$0xff]
    %v167 = vld [vmem:[#allocation9 + $0x40] sm:$0xff]
    %v168 = vld [vmem:[#allocation9 + $0x48] sm:$0xff]
    %v169 = vld [vmem:[#allocation9 + $0x50] sm:$0xff]
    %v170 = vld [vmem:[#allocation9 + $0x58] sm:$0xff]
    %v171 = vld [vmem:[#allocation9 + $0x60] sm:$0xff]
    %v172 = vld [vmem:[#allocation9 + $0x68] sm:$0xff]
    %v173 = vld [vmem:[#allocation9 + $0x70] sm:$0xff]
    %v174 = vld [vmem:[#allocation9 + $0x78] sm:$0xff]
    %v175 = vld [vmem:[#allocation9 + $0x80] sm:$0xff]
    %v176 = vld [vmem:[#allocation9 + $0x88] sm:$0xff]
    %v177 = vld [vmem:[#allocation9 + $0x90] sm:$0xff]
    %v178 = vld [vmem:[#allocation9 + $0x98] sm:$0xff]
    %v179 = vld [vmem:[#allocation9 + $0xa0] sm:$0xff]
    %v180 = vld [vmem:[#allocation9 + $0xa8] sm:$0xff]
    %v181 = vld [vmem:[#allocation9 + $0xb0] sm:$0xff]
    %v182 = vld [vmem:[#allocation9 + $0xb8] sm:$0xff]
    %v183 = vld [vmem:[#allocation9 + $0xc0] sm:$0xff]
    %v184 = vld [vmem:[#allocation9 + $0xc8] sm:$0xff]
    %v185 = vld [vmem:[#allocation9 + $0xd0] sm:$0xff]
    %v186 = vld [vmem:[#allocation9 + $0xd8] sm:$0xff]
    %v187 = vld [vmem:[#allocation9 + $0xe0] sm:$0xff]
    %v188 = vld [vmem:[#allocation9 + $0xe8] sm:$0xff]
    %v189 = vld [vmem:[#allocation9 + $0xf0] sm:$0xff]
    %v190 = vld [vmem:[#allocation9 + $0xf8] sm:$0xff]
    %v191 = vld [vmem:[#allocation11] sm:$0xff]
    %v192 = vld [vmem:[#allocation11 + $0x8] sm:$0xff]
    %v193 = vld [vmem:[#allocation11 + $0x10] sm:$0xff]
    %v194 = vld [vmem:[#allocation11 + $0x18] sm:$0xff]
    %v195 = vld [vmem:[#allocation11 + $0x20] sm:$0xff]
    %v196 = vld [vmem:[#allocation11 + $0x28] sm:$0xff]
    %v197 = vld [vmem:[#allocation11 + $0x30] sm:$0xff]
    %v198 = vld [vmem:[#allocation11 + $0x38] sm:$0xff]
    %v199 = vld [vmem:[#allocation11 + $0x40] sm:$0xff]
    %v200 = vld [vmem:[#allocation11 + $0x48] sm:$0xff]
    %v201 = vld [vmem:[#allocation11 + $0x50] sm:$0xff]
    %v202 = vld [vmem:[#allocation11 + $0x58] sm:$0xff]
    %v203 = vld [vmem:[#allocation11 + $0x60] sm:$0xff]
    %v204 = vld [vmem:[#allocation11 + $0x68] sm:$0xff]
    %v205 = vld [vmem:[#allocation11 + $0x70] sm:$0xff]
    %v206 = vld [vmem:[#allocation11 + $0x78] sm:$0xff]
    %v207 = vld [vmem:[#allocation11 + $0x80] sm:$0xff]
    %v208 = vld [vmem:[#allocation11 + $0x88] sm:$0xff]
    %v209 = vld [vmem:[#allocation11 + $0x90] sm:$0xff]
    %v210 = vld [vmem:[#allocation11 + $0x98] sm:$0xff]
    %v211 = vld [vmem:[#allocation11 + $0xa0] sm:$0xff]
    %v212 = vld [vmem:[#allocation11 + $0xa8] sm:$0xff]
    %v213 = vld [vmem:[#allocation11 + $0xb0] sm:$0xff]
    %v214 = vld [vmem:[#allocation11 + $0xb8] sm:$0xff]
    %v215 = vld [vmem:[#allocation11 + $0xc0] sm:$0xff]
    %v216 = vld [vmem:[#allocation11 + $0xc8] sm:$0xff]
    %v217 = vld [vmem:[#allocation11 + $0xd0] sm:$0xff]
    %v218 = vld [vmem:[#allocation11 + $0xd8] sm:$0xff]
    %v219 = vld [vmem:[#allocation11 + $0xe0] sm:$0xff]
    %v220 = vld [vmem:[#allocation11 + $0xe8] sm:$0xff]
    %v221 = vld [vmem:[#allocation11 + $0xf0] sm:$0xff]
    %v222 = vld [vmem:[#allocation11 + $0xf8] sm:$0xff]
    %v223 = vld [vmem:[#allocation12] sm:$0xf]
    %v224 = vld [vmem:[%s7] sm:$0x1]
    %v225 = vld [vmem:[#allocation2] sm:$0x1]
    %227 = vset.pattern.permute.xlu0 0
    %228 = vperm.xlu0 %227, %v124
    %v229 = vpop.permute.xlu0 %228
    %v232 = vperm.slane %v125, 0
    %v233 = vperm.slane %v125, 1
    %v234 = vperm.slane %v125, 2
    %v235 = vperm.slane %v125, 3
    %v240 = vmul.f32 %v229, %v232
    %v241 = vmul.f32 %v229, %v233
    %v242 = vmul.f32 %v229, %v234
    %v243 = vmul.f32 %v229, %v235
    %v245 = vperm.slane %v158, 0
    %v246 = vperm.slane %v158, 1
    %v247 = vperm.slane %v158, 2
    %v248 = vperm.slane %v158, 3
    %v253 = vadd.f32 %v240, %v245
    %v254 = vadd.f32 %v241, %v246
    %v255 = vadd.f32 %v242, %v247
    %v256 = vadd.f32 %v243, %v248
    %257 = vset.pattern.permute.xlu0 1
    %258 = vperm.xlu0 %257, %v124
    %v259 = vpop.permute.xlu0 %258
    %v261 = vmul.f32 %v259, %v232
    %v262 = vmul.f32 %v259, %v233
    %v263 = vmul.f32 %v259, %v234
    %v264 = vmul.f32 %v259, %v235
    %v265 = vadd.f32 %v261, %v245
    %v266 = vadd.f32 %v262, %v246
    %v267 = vadd.f32 %v263, %v247
    %v268 = vadd.f32 %v264, %v248
    %269 = vset.pattern.permute.xlu0 2
    %270 = vperm.xlu0 %269, %v124
    %v271 = vpop.permute.xlu0 %270
    %v273 = vmul.f32 %v271, %v232
    %v274 = vmul.f32 %v271, %v233
    %v275 = vmul.f32 %v271, %v234
    %v276 = vmul.f32 %v271, %v235
    %v277 = vadd.f32 %v273, %v245
    %v278 = vadd.f32 %v274, %v246
    %v279 = vadd.f32 %v275, %v247
    %v280 = vadd.f32 %v276, %v248
    %281 = vset.pattern.permute.xlu0 3
    %282 = vperm.xlu0 %281, %v124
    %v283 = vpop.permute.xlu0 %282
    %v285 = vmul.f32 %v283, %v232
    %v286 = vmul.f32 %v283, %v233
    %v287 = vmul.f32 %v283, %v234
    %v288 = vmul.f32 %v283, %v235
    %v289 = vadd.f32 %v285, %v245
    %v290 = vadd.f32 %v286, %v246
    %v291 = vadd.f32 %v287, %v247
    %v292 = vadd.f32 %v288, %v248
    %293 = vset.pattern.permute.xlu0 4
    %294 = vperm.xlu0 %293, %v124
    %v295 = vpop.permute.xlu0 %294
    %v297 = vmul.f32 %v295, %v232
    %v298 = vmul.f32 %v295, %v233
    %v299 = vmul.f32 %v295, %v234
    %v300 = vmul.f32 %v295, %v235
    %v301 = vadd.f32 %v297, %v245
    %v302 = vadd.f32 %v298, %v246
    %v303 = vadd.f32 %v299, %v247
    %v304 = vadd.f32 %v300, %v248
    %305 = vset.pattern.permute.xlu0 5
    %306 = vperm.xlu0 %305, %v124
    %v307 = vpop.permute.xlu0 %306
    %v309 = vmul.f32 %v307, %v232
    %v310 = vmul.f32 %v307, %v233
    %v311 = vmul.f32 %v307, %v234
    %v312 = vmul.f32 %v307, %v235
    %v313 = vadd.f32 %v309, %v245
    %v314 = vadd.f32 %v310, %v246
    %v315 = vadd.f32 %v311, %v247
    %v316 = vadd.f32 %v312, %v248
    %317 = vset.pattern.permute.xlu0 6
    %318 = vperm.xlu0 %317, %v124
    %v319 = vpop.permute.xlu0 %318
    %v321 = vmul.f32 %v319, %v232
    %v322 = vmul.f32 %v319, %v233
    %v323 = vmul.f32 %v319, %v234
    %v324 = vmul.f32 %v319, %v235
    %v325 = vadd.f32 %v321, %v245
    %v326 = vadd.f32 %v322, %v246
    %v327 = vadd.f32 %v323, %v247
    %v328 = vadd.f32 %v324, %v248
    %329 = vset.pattern.permute.xlu0 7
    %330 = vperm.xlu0 %329, %v124
    %v331 = vpop.permute.xlu0 %330
    %v333 = vmul.f32 %v331, %v232
    %v334 = vmul.f32 %v331, %v233
    %v335 = vmul.f32 %v331, %v234
    %v336 = vmul.f32 %v331, %v235
    %v337 = vadd.f32 %v333, %v245
    %v338 = vadd.f32 %v334, %v246
    %v339 = vadd.f32 %v335, %v247
    %v340 = vadd.f32 %v336, %v248
    %v373 = vunpack.c.l.b16 %v126
    %v374 = vunpack.c.h.b16 %v126
    %v375 = vunpack.c.l.b16 %v127
    %v376 = vunpack.c.h.b16 %v127
    %v377 = vunpack.c.l.b16 %v128
    %v378 = vunpack.c.h.b16 %v128
    %v379 = vunpack.c.l.b16 %v129
    %v380 = vunpack.c.h.b16 %v129
    %v381 = vunpack.c.l.b16 %v130
    %v382 = vunpack.c.h.b16 %v130
    %v383 = vunpack.c.l.b16 %v131
    %v384 = vunpack.c.h.b16 %v131
    %v385 = vunpack.c.l.b16 %v132
    %v386 = vunpack.c.h.b16 %v132
    %v387 = vunpack.c.l.b16 %v133
    %v388 = vunpack.c.h.b16 %v133
    %v389 = vunpack.c.l.b16 %v134
    %v390 = vunpack.c.h.b16 %v134
    %v391 = vunpack.c.l.b16 %v135
    %v392 = vunpack.c.h.b16 %v135
    %v393 = vunpack.c.l.b16 %v136
    %v394 = vunpack.c.h.b16 %v136
    %v395 = vunpack.c.l.b16 %v137
    %v396 = vunpack.c.h.b16 %v137
    %v397 = vunpack.c.l.b16 %v138
    %v398 = vunpack.c.h.b16 %v138
    %v399 = vunpack.c.l.b16 %v139
    %v400 = vunpack.c.h.b16 %v139
    %v401 = vunpack.c.l.b16 %v140
    %v402 = vunpack.c.h.b16 %v140
    %v403 = vunpack.c.l.b16 %v141
    %v404 = vunpack.c.h.b16 %v141
    %v405 = vunpack.c.l.b16 %v142
    %v406 = vunpack.c.h.b16 %v142
    %v407 = vunpack.c.l.b16 %v143
    %v408 = vunpack.c.h.b16 %v143
    %v409 = vunpack.c.l.b16 %v144
    %v410 = vunpack.c.h.b16 %v144
    %v411 = vunpack.c.l.b16 %v145
    %v412 = vunpack.c.h.b16 %v145
    %v413 = vunpack.c.l.b16 %v146
    %v414 = vunpack.c.h.b16 %v146
    %v415 = vunpack.c.l.b16 %v147
    %v416 = vunpack.c.h.b16 %v147
    %v417 = vunpack.c.l.b16 %v148
    %v418 = vunpack.c.h.b16 %v148
    %v419 = vunpack.c.l.b16 %v149
    %v420 = vunpack.c.h.b16 %v149
    %v421 = vunpack.c.l.b16 %v150
    %v422 = vunpack.c.h.b16 %v150
    %v423 = vunpack.c.l.b16 %v151
    %v424 = vunpack.c.h.b16 %v151
    %v425 = vunpack.c.l.b16 %v152
    %v426 = vunpack.c.h.b16 %v152
    %v427 = vunpack.c.l.b16 %v153
    %v428 = vunpack.c.h.b16 %v153
    %v429 = vunpack.c.l.b16 %v154
    %v430 = vunpack.c.h.b16 %v154
    %v431 = vunpack.c.l.b16 %v155
    %v432 = vunpack.c.h.b16 %v155
    %v433 = vunpack.c.l.b16 %v156
    %v434 = vunpack.c.h.b16 %v156
    %v435 = vunpack.c.l.b16 %v157
    %v436 = vunpack.c.h.b16 %v157
    %v437 = vpack.c.b16 %v377, %v373
    %v438 = vpack.c.b16 %v378, %v374
    %v439 = vpack.c.b16 %v379, %v375
    %v440 = vpack.c.b16 %v380, %v376
    %v441 = vpack.c.b16 %v385, %v381
    %v442 = vpack.c.b16 %v386, %v382
    %v443 = vpack.c.b16 %v387, %v383
    %v444 = vpack.c.b16 %v388, %v384
    %v445 = vpack.c.b16 %v393, %v389
    %v446 = vpack.c.b16 %v394, %v390
    %v447 = vpack.c.b16 %v395, %v391
    %v448 = vpack.c.b16 %v396, %v392
    %v449 = vpack.c.b16 %v401, %v397
    %v450 = vpack.c.b16 %v402, %v398
    %v451 = vpack.c.b16 %v403, %v399
    %v452 = vpack.c.b16 %v404, %v400
    %v453 = vpack.c.b16 %v409, %v405
    %v454 = vpack.c.b16 %v410, %v406
    %v455 = vpack.c.b16 %v411, %v407
    %v456 = vpack.c.b16 %v412, %v408
    %v457 = vpack.c.b16 %v417, %v413
    %v458 = vpack.c.b16 %v418, %v414
    %v459 = vpack.c.b16 %v419, %v415
    %v460 = vpack.c.b16 %v420, %v416
    %v461 = vpack.c.b16 %v425, %v421
    %v462 = vpack.c.b16 %v426, %v422
    %v463 = vpack.c.b16 %v427, %v423
    %v464 = vpack.c.b16 %v428, %v424
    %v465 = vpack.c.b16 %v433, %v429
    %v466 = vpack.c.b16 %v434, %v430
    %v467 = vpack.c.b16 %v435, %v431
    %v468 = vpack.c.b16 %v436, %v432
    %501 = vmatpush.bf16.msra.mxu0 %v465
    %502 = vmatpush.bf16.msra.mxu0 %v461
    %503 = vmatpush.bf16.msra.mxu0 %v457
    %504 = vmatpush.bf16.msra.mxu0 %v453
    %505 = vmatpush.bf16.msra.mxu0 %v449
    %506 = vmatpush.bf16.msra.mxu0 %v445
    %507 = vmatpush.bf16.msra.mxu0 %v441
    %508 = vmatpush.bf16.msra.mxu0 %v437
    %509 = vmatmul.bf16.gmra.mxu0 0
    %v510 = vpop.f32.mrf.mxu0
    %v511 = vadd.f32 0.0, %v510
    %v512 = vpop.f32.mrf.mxu0
    %513 = vdwg.mxu0
    %514 = vmatpush.bf16.msra.mxu0 %v466
    %515 = vmatpush.bf16.msra.mxu0 %v462
    %516 = vmatpush.bf16.msra.mxu0 %v458
    %517 = vmatpush.bf16.msra.mxu0 %v454
    %518 = vmatpush.bf16.msra.mxu0 %v450
    %519 = vmatpush.bf16.msra.mxu0 %v446
    %520 = vmatpush.bf16.msra.mxu0 %v442
    %521 = vmatpush.bf16.msra.mxu0 %v438
    %522 = vmatmul.bf16.gmra.mxu0 0
    %v523 = vpop.f32.mrf.mxu0
    %v524 = vadd.f32 0.0, %v523
    %v525 = vpop.f32.mrf.mxu0
    %526 = vdwg.mxu0
    %527 = vmatpush.bf16.msra.mxu0 %v467
    %528 = vmatpush.bf16.msra.mxu0 %v463
    %529 = vmatpush.bf16.msra.mxu0 %v459
    %530 = vmatpush.bf16.msra.mxu0 %v455
    %531 = vmatpush.bf16.msra.mxu0 %v451
    %532 = vmatpush.bf16.msra.mxu0 %v447
    %533 = vmatpush.bf16.msra.mxu0 %v443
    %534 = vmatpush.bf16.msra.mxu0 %v439
    %535 = vmatmul.bf16.gmra.mxu0 0
    %v536 = vpop.f32.mrf.mxu0
    %v537 = vadd.f32 0.0, %v536
    %v538 = vpop.f32.mrf.mxu0
    %539 = vdwg.mxu0
    %540 = vmatpush.bf16.msra.mxu0 %v468
    %541 = vmatpush.bf16.msra.mxu0 %v464
    %542 = vmatpush.bf16.msra.mxu0 %v460
    %543 = vmatpush.bf16.msra.mxu0 %v456
    %544 = vmatpush.bf16.msra.mxu0 %v452
    %545 = vmatpush.bf16.msra.mxu0 %v448
    %546 = vmatpush.bf16.msra.mxu0 %v444
    %547 = vmatpush.bf16.msra.mxu0 %v440
    %548 = vmatmul.bf16.gmra.mxu0 0
    %v549 = vpop.f32.mrf.mxu0
    %v550 = vadd.f32 0.0, %v549
    %v551 = vpop.f32.mrf.mxu0
    %552 = vdwg.mxu0
    %v553 = vadd.f32 %v253, %v511
    %v554 = vadd.f32 %v254, %v524
    %v555 = vadd.f32 %v255, %v537
    %v556 = vadd.f32 %v256, %v550
    %v557 = vxor.u32 %v553, 2147483648
    %v558 = vxor.u32 %v554, 2147483648
    %v559 = vxor.u32 %v555, 2147483648
    %v560 = vmul.f32 %v557, 1.442695
    %v561 = vpow.pop %v560
    %v562 = vmul.f32 %v558, 1.442695
    %v563 = vpow.pop %v562
    %v564 = vmul.f32 %v559, 1.442695
    %v565 = vpow.pop %v564
    %v566 = vadd.f32 %v561, 1.0
    %v567 = vadd.f32 %v563, 1.0
    %v568 = vadd.f32 %v565, 1.0
    %v569 = vrcp.pop %v566
    %v570 = vmul.f32 %v566, %v569
    %v571 = vsub.f32 1.0, %v570
    %v572 = vmul.f32 %v569, %v571
    %v573 = vadd.f32 %v569, %v572
    %vm574 = vweird.f32 %v566
    %vm575 = vweird.f32 %v569
    %vm576 = vmor %vm574, %vm575
    %v577 = vsel %vm576, %v569, %v573
    %v578 = vand.u32 2147483647, %v566
    %vm579 = vcmp.eq.f32.partialorder %v578, 8.507059e+37
    %v580 = vand.u32 %v566, 2147483648
    %v581 = vor.u32 1.1754944e-38, %v580
    %v582 = vsel %vm579, %v581, %v577
    %v583 = vmul.f32 1.0, %v582
    %v584 = vrcp.pop %v567
    %v585 = vmul.f32 %v567, %v584
    %v586 = vsub.f32 1.0, %v585
    %v587 = vmul.f32 %v584, %v586
    %v588 = vadd.f32 %v584, %v587
    %vm589 = vweird.f32 %v567
    %vm590 = vweird.f32 %v584
    %vm591 = vmor %vm589, %vm590
    %v592 = vsel %vm591, %v584, %v588
    %v593 = vand.u32 2147483647, %v567
    %vm594 = vcmp.eq.f32.partialorder %v593, 8.507059e+37
    %v595 = vand.u32 %v567, 2147483648
    %v596 = vor.u32 1.1754944e-38, %v595
    %v597 = vsel %vm594, %v596, %v592
    %v598 = vmul.f32 1.0, %v597
    %v599 = vrcp.pop %v568
    %v600 = vmul.f32 %v568, %v599
    %v601 = vsub.f32 1.0, %v600
    %v602 = vmul.f32 %v599, %v601
    %v603 = vadd.f32 %v599, %v602
    %vm604 = vweird.f32 %v568
    %vm605 = vweird.f32 %v599
    %vm606 = vmor %vm604, %vm605
    %v607 = vsel %vm606, %v599, %v603
    %v608 = vand.u32 2147483647, %v568
    %vm609 = vcmp.eq.f32.partialorder %v608, 8.507059e+37
    %v610 = vand.u32 %v568, 2147483648
    %v611 = vor.u32 1.1754944e-38, %v610
    %v612 = vsel %vm609, %v611, %v607
    %v613 = vmul.f32 1.0, %v612
    %v614 = vtanh.pop %v556
    %v615 = vmul.f32 %v598, 0.0
    %v616 = vmul.f32 %v583, %v614
    %v617 = vadd.f32 %v615, %v616
    %v618 = vtanh.pop %v617
    %v619 = vmul.f32 %v613, %v618
    %v621 = vperm.slane %v223, 0
    %v622 = vperm.slane %v223, 1
    %v623 = vperm.slane %v223, 2
    %v624 = vperm.slane %v223, 3
    %v661 = vunpack.c.l.b16 %v191
    %v662 = vunpack.c.h.b16 %v191
    %v663 = vunpack.c.l.b16 %v192
    %v664 = vunpack.c.h.b16 %v192
    %v665 = vunpack.c.l.b16 %v193
    %v666 = vunpack.c.h.b16 %v193
    %v667 = vunpack.c.l.b16 %v194
    %v668 = vunpack.c.h.b16 %v194
    %v669 = vunpack.c.l.b16 %v195
    %v670 = vunpack.c.h.b16 %v195
    %v671 = vunpack.c.l.b16 %v196
    %v672 = vunpack.c.h.b16 %v196
    %v673 = vunpack.c.l.b16 %v197
    %v674 = vunpack.c.h.b16 %v197
    %v675 = vunpack.c.l.b16 %v198
    %v676 = vunpack.c.h.b16 %v198
    %v677 = vunpack.c.l.b16 %v199
    %v678 = vunpack.c.h.b16 %v199
    %v679 = vunpack.c.l.b16 %v200
    %v680 = vunpack.c.h.b16 %v200
    %v681 = vunpack.c.l.b16 %v201
    %v682 = vunpack.c.h.b16 %v201
    %v683 = vunpack.c.l.b16 %v202
    %v684 = vunpack.c.h.b16 %v202
    %v685 = vunpack.c.l.b16 %v203
    %v686 = vunpack.c.h.b16 %v203
    %v687 = vunpack.c.l.b16 %v204
    %v688 = vunpack.c.h.b16 %v204
    %v689 = vunpack.c.l.b16 %v205
    %v690 = vunpack.c.h.b16 %v205
    %v691 = vunpack.c.l.b16 %v206
    %v692 = vunpack.c.h.b16 %v206
    %v693 = vunpack.c.l.b16 %v207
    %v694 = vunpack.c.h.b16 %v207
    %v695 = vunpack.c.l.b16 %v208
    %v696 = vunpack.c.h.b16 %v208
    %v697 = vunpack.c.l.b16 %v209
    %v698 = vunpack.c.h.b16 %v209
    %v699 = vunpack.c.l.b16 %v210
    %v700 = vunpack.c.h.b16 %v210
    %v701 = vunpack.c.l.b16 %v211
    %v702 = vunpack.c.h.b16 %v211
    %v703 = vunpack.c.l.b16 %v212
    %v704 = vunpack.c.h.b16 %v212
    %v705 = vunpack.c.l.b16 %v213
    %v706 = vunpack.c.h.b16 %v213
    %v707 = vunpack.c.l.b16 %v214
    %v708 = vunpack.c.h.b16 %v214
    %v709 = vunpack.c.l.b16 %v215
    %v710 = vunpack.c.h.b16 %v215
    %v711 = vunpack.c.l.b16 %v216
    %v712 = vunpack.c.h.b16 %v216
    %v713 = vunpack.c.l.b16 %v217
    %v714 = vunpack.c.h.b16 %v217
    %v715 = vunpack.c.l.b16 %v218
    %v716 = vunpack.c.h.b16 %v218
    %v717 = vunpack.c.l.b16 %v219
    %v718 = vunpack.c.h.b16 %v219
    %v719 = vunpack.c.l.b16 %v220
    %v720 = vunpack.c.h.b16 %v220
    %v721 = vunpack.c.l.b16 %v221
    %v722 = vunpack.c.h.b16 %v221
    %v723 = vunpack.c.l.b16 %v222
    %v724 = vunpack.c.h.b16 %v222
    %v725 = vpack.c.b16 %v665, %v661
    %v726 = vpack.c.b16 %v666, %v662
    %v727 = vpack.c.b16 %v667, %v663
    %v728 = vpack.c.b16 %v668, %v664
    %v729 = vpack.c.b16 %v673, %v669
    %v730 = vpack.c.b16 %v674, %v670
    %v731 = vpack.c.b16 %v675, %v671
    %v732 = vpack.c.b16 %v676, %v672
    %v733 = vpack.c.b16 %v681, %v677
    %v734 = vpack.c.b16 %v682, %v678
    %v735 = vpack.c.b16 %v683, %v679
    %v736 = vpack.c.b16 %v684, %v680
    %v737 = vpack.c.b16 %v689, %v685
    %v738 = vpack.c.b16 %v690, %v686
    %v739 = vpack.c.b16 %v691, %v687
    %v740 = vpack.c.b16 %v692, %v688
    %v741 = vpack.c.b16 %v697, %v693
    %v742 = vpack.c.b16 %v698, %v694
    %v743 = vpack.c.b16 %v699, %v695
    %v744 = vpack.c.b16 %v700, %v696
    %v745 = vpack.c.b16 %v705, %v701
    %v746 = vpack.c.b16 %v706, %v702
    %v747 = vpack.c.b16 %v707, %v703
    %v748 = vpack.c.b16 %v708, %v704
    %v749 = vpack.c.b16 %v713, %v709
    %v750 = vpack.c.b16 %v714, %v710
    %v751 = vpack.c.b16 %v715, %v711
    %v752 = vpack.c.b16 %v716, %v712
    %v753 = vpack.c.b16 %v721, %v717
    %v754 = vpack.c.b16 %v722, %v718
    %v755 = vpack.c.b16 %v723, %v719
    %v756 = vpack.c.b16 %v724, %v720
    %789 = vmatpush.bf16.msra.mxu0 %v753
    %790 = vmatpush.bf16.msra.mxu0 %v749
    %791 = vmatpush.bf16.msra.mxu0 %v745
    %792 = vmatpush.bf16.msra.mxu0 %v741
    %793 = vmatpush.bf16.msra.mxu0 %v737
    %794 = vmatpush.bf16.msra.mxu0 %v733
    %795 = vmatpush.bf16.msra.mxu0 %v729
    %796 = vmatpush.bf16.msra.mxu0 %v725
    %797 = vmatmul.bf16.gmra.mxu0 0
    %v798 = vpop.f32.mrf.mxu0
    %v799 = vadd.f32 %v621, %v798
    %v800 = vpop.f32.mrf.mxu0
    %801 = vdwg.mxu0
    %802 = vmatpush.bf16.msra.mxu0 %v754
    %803 = vmatpush.bf16.msra.mxu0 %v750
    %804 = vmatpush.bf16.msra.mxu0 %v746
    %805 = vmatpush.bf16.msra.mxu0 %v742
    %806 = vmatpush.bf16.msra.mxu0 %v738
    %807 = vmatpush.bf16.msra.mxu0 %v734
    %808 = vmatpush.bf16.msra.mxu0 %v730
    %809 = vmatpush.bf16.msra.mxu0 %v726
    %810 = vmatmul.bf16.gmra.mxu0 0
    %v811 = vpop.f32.mrf.mxu0
    %v812 = vadd.f32 %v622, %v811
    %v813 = vpop.f32.mrf.mxu0
    %814 = vdwg.mxu0
    %815 = vmatpush.bf16.msra.mxu0 %v755
    %816 = vmatpush.bf16.msra.mxu0 %v751
    %817 = vmatpush.bf16.msra.mxu0 %v747
    %818 = vmatpush.bf16.msra.mxu0 %v743
    %819 = vmatpush.bf16.msra.mxu0 %v739
    %820 = vmatpush.bf16.msra.mxu0 %v735
    %821 = vmatpush.bf16.msra.mxu0 %v731
    %822 = vmatpush.bf16.msra.mxu0 %v727
    %823 = vmatmul.bf16.gmra.mxu0 0
    %v824 = vpop.f32.mrf.mxu0
    %v825 = vadd.f32 %v623, %v824
    %v826 = vpop.f32.mrf.mxu0
    %827 = vdwg.mxu0
    %828 = vmatpush.bf16.msra.mxu0 %v756
    %829 = vmatpush.bf16.msra.mxu0 %v752
    %830 = vmatpush.bf16.msra.mxu0 %v748
    %831 = vmatpush.bf16.msra.mxu0 %v744
    %832 = vmatpush.bf16.msra.mxu0 %v740
    %833 = vmatpush.bf16.msra.mxu0 %v736
    %834 = vmatpush.bf16.msra.mxu0 %v732
    %835 = vmatpush.bf16.msra.mxu0 %v728
    %836 = vmatmul.bf16.gmra.mxu0 0
    %v837 = vpop.f32.mrf.mxu0
    %v838 = vadd.f32 %v624, %v837
    %v839 = vpop.f32.mrf.mxu0
    %840 = vdwg.mxu0
    %v841 = vpack.c.bf16 %v619, %v619
    %v874 = vunpack.c.l.b16 %v159
    %v875 = vunpack.c.h.b16 %v159
    %v876 = vunpack.c.l.b16 %v160
    %v877 = vunpack.c.h.b16 %v160
    %v878 = vunpack.c.l.b16 %v161
    %v879 = vunpack.c.h.b16 %v161
    %v880 = vunpack.c.l.b16 %v162
    %v881 = vunpack.c.h.b16 %v162
    %v882 = vunpack.c.l.b16 %v163
    %v883 = vunpack.c.h.b16 %v163
    %v884 = vunpack.c.l.b16 %v164
    %v885 = vunpack.c.h.b16 %v164
    %v886 = vunpack.c.l.b16 %v165
    %v887 = vunpack.c.h.b16 %v165
    %v888 = vunpack.c.l.b16 %v166
    %v889 = vunpack.c.h.b16 %v166
    %v890 = vunpack.c.l.b16 %v167
    %v891 = vunpack.c.h.b16 %v167
    %v892 = vunpack.c.l.b16 %v168
    %v893 = vunpack.c.h.b16 %v168
    %v894 = vunpack.c.l.b16 %v169
    %v895 = vunpack.c.h.b16 %v169
    %v896 = vunpack.c.l.b16 %v170
    %v897 = vunpack.c.h.b16 %v170
    %v898 = vunpack.c.l.b16 %v171
    %v899 = vunpack.c.h.b16 %v171
    %v900 = vunpack.c.l.b16 %v172
    %v901 = vunpack.c.h.b16 %v172
    %v902 = vunpack.c.l.b16 %v173
    %v903 = vunpack.c.h.b16 %v173
    %v904 = vunpack.c.l.b16 %v174
    %v905 = vunpack.c.h.b16 %v174
    %v906 = vunpack.c.l.b16 %v175
    %v907 = vunpack.c.h.b16 %v175
    %v908 = vunpack.c.l.b16 %v176
    %v909 = vunpack.c.h.b16 %v176
    %v910 = vunpack.c.l.b16 %v177
    %v911 = vunpack.c.h.b16 %v177
    %v912 = vunpack.c.l.b16 %v178
    %v913 = vunpack.c.h.b16 %v178
    %v914 = vunpack.c.l.b16 %v179
    %v915 = vunpack.c.h.b16 %v179
    %v916 = vunpack.c.l.b16 %v180
    %v917 = vunpack.c.h.b16 %v180
    %v918 = vunpack.c.l.b16 %v181
    %v919 = vunpack.c.h.b16 %v181
    %v920 = vunpack.c.l.b16 %v182
    %v921 = vunpack.c.h.b16 %v182
    %v922 = vunpack.c.l.b16 %v183
    %v923 = vunpack.c.h.b16 %v183
    %v924 = vunpack.c.l.b16 %v184
    %v925 = vunpack.c.h.b16 %v184
    %v926 = vunpack.c.l.b16 %v185
    %v927 = vunpack.c.h.b16 %v185
    %v928 = vunpack.c.l.b16 %v186
    %v929 = vunpack.c.h.b16 %v186
    %v930 = vunpack.c.l.b16 %v187
    %v931 = vunpack.c.h.b16 %v187
    %v932 = vunpack.c.l.b16 %v188
    %v933 = vunpack.c.h.b16 %v188
    %v934 = vunpack.c.l.b16 %v189
    %v935 = vunpack.c.h.b16 %v189
    %v936 = vunpack.c.l.b16 %v190
    %v937 = vunpack.c.h.b16 %v190
    %v938 = vpack.c.b16 %v878, %v874
    %v939 = vpack.c.b16 %v879, %v875
    %v940 = vpack.c.b16 %v880, %v876
    %v941 = vpack.c.b16 %v881, %v877
    %v942 = vpack.c.b16 %v886, %v882
    %v943 = vpack.c.b16 %v887, %v883
    %v944 = vpack.c.b16 %v888, %v884
    %v945 = vpack.c.b16 %v889, %v885
    %v946 = vpack.c.b16 %v894, %v890
    %v947 = vpack.c.b16 %v895, %v891
    %v948 = vpack.c.b16 %v896, %v892
    %v949 = vpack.c.b16 %v897, %v893
    %v950 = vpack.c.b16 %v902, %v898
    %v951 = vpack.c.b16 %v903, %v899
    %v952 = vpack.c.b16 %v904, %v900
    %v953 = vpack.c.b16 %v905, %v901
    %v954 = vpack.c.b16 %v910, %v906
    %v955 = vpack.c.b16 %v911, %v907
    %v956 = vpack.c.b16 %v912, %v908
    %v957 = vpack.c.b16 %v913, %v909
    %v958 = vpack.c.b16 %v918, %v914
    %v959 = vpack.c.b16 %v919, %v915
    %v960 = vpack.c.b16 %v920, %v916
    %v961 = vpack.c.b16 %v921, %v917
    %v962 = vpack.c.b16 %v926, %v922
    %v963 = vpack.c.b16 %v927, %v923
    %v964 = vpack.c.b16 %v928, %v924
    %v965 = vpack.c.b16 %v929, %v925
    %v966 = vpack.c.b16 %v934, %v930
    %v967 = vpack.c.b16 %v935, %v931
    %v968 = vpack.c.b16 %v936, %v932
    %v969 = vpack.c.b16 %v937, %v933
    %1002 = vmatpush.bf16.msra.mxu0 %v966
    %1003 = vmatpush.bf16.msra.mxu0 %v962
    %1004 = vmatpush.bf16.msra.mxu0 %v958
    %1005 = vmatpush.bf16.msra.mxu0 %v954
    %1006 = vmatpush.bf16.msra.mxu0 %v950
    %1007 = vmatpush.bf16.msra.mxu0 %v946
    %1008 = vmatpush.bf16.msra.mxu0 %v942
    %1009 = vmatpush.bf16.msra.mxu0 %v938
    %1010 = vmatmul.bf16.gmra.mxu0 %v841
    %v1011 = vpop.f32.mrf.mxu0
    %v1012 = vadd.f32 0.0, %v1011
    %v1013 = vpop.f32.mrf.mxu0
    %1014 = vdwg.mxu0
    %1015 = vmatpush.bf16.msra.mxu0 %v967
    %1016 = vmatpush.bf16.msra.mxu0 %v963
    %1017 = vmatpush.bf16.msra.mxu0 %v959
    %1018 = vmatpush.bf16.msra.mxu0 %v955
    %1019 = vmatpush.bf16.msra.mxu0 %v951
    %1020 = vmatpush.bf16.msra.mxu0 %v947
    %1021 = vmatpush.bf16.msra.mxu0 %v943
    %1022 = vmatpush.bf16.msra.mxu0 %v939
    %1023 = vmatmul.bf16.gmra.mxu0 %v841
    %v1024 = vpop.f32.mrf.mxu0
    %v1025 = vadd.f32 0.0, %v1024
    %v1026 = vpop.f32.mrf.mxu0
    %1027 = vdwg.mxu0
    %1028 = vmatpush.bf16.msra.mxu0 %v968
    %1029 = vmatpush.bf16.msra.mxu0 %v964
    %1030 = vmatpush.bf16.msra.mxu0 %v960
    %1031 = vmatpush.bf16.msra.mxu0 %v956
    %1032 = vmatpush.bf16.msra.mxu0 %v952
    %1033 = vmatpush.bf16.msra.mxu0 %v948
    %1034 = vmatpush.bf16.msra.mxu0 %v944
    %1035 = vmatpush.bf16.msra.mxu0 %v940
    %1036 = vmatmul.bf16.gmra.mxu0 %v841
    %v1037 = vpop.f32.mrf.mxu0
    %v1038 = vadd.f32 0.0, %v1037
    %v1039 = vpop.f32.mrf.mxu0
    %1040 = vdwg.mxu0
    %1041 = vmatpush.bf16.msra.mxu0 %v969
    %1042 = vmatpush.bf16.msra.mxu0 %v965
    %1043 = vmatpush.bf16.msra.mxu0 %v961
    %1044 = vmatpush.bf16.msra.mxu0 %v957
    %1045 = vmatpush.bf16.msra.mxu0 %v953
    %1046 = vmatpush.bf16.msra.mxu0 %v949
    %1047 = vmatpush.bf16.msra.mxu0 %v945
    %1048 = vmatpush.bf16.msra.mxu0 %v941
    %1049 = vmatmul.bf16.gmra.mxu0 %v841
    %v1050 = vpop.f32.mrf.mxu0
    %v1051 = vadd.f32 0.0, %v1050
    %v1052 = vpop.f32.mrf.mxu0
    %1053 = vdwg.mxu0
    %v1054 = vadd.f32 %v799, %v1012
    %v1055 = vadd.f32 %v812, %v1025
    %v1056 = vadd.f32 %v825, %v1038
    %v1057 = vadd.f32 %v838, %v1051
    %v1058 = vxor.u32 %v1054, 2147483648
    %v1059 = vxor.u32 %v1055, 2147483648
    %v1060 = vxor.u32 %v1056, 2147483648
    %v1061 = vmul.f32 %v1058, 1.442695
    %v1062 = vpow.pop %v1061
    %v1063 = vmul.f32 %v1059, 1.442695
    %v1064 = vpow.pop %v1063
    %v1065 = vmul.f32 %v1060, 1.442695
    %v1066 = vpow.pop %v1065
    %v1067 = vadd.f32 %v1062, 1.0
    %v1068 = vadd.f32 %v1064, 1.0
    %v1069 = vadd.f32 %v1066, 1.0
    %v1070 = vrcp.pop %v1067
    %v1071 = vmul.f32 %v1067, %v1070
    %v1072 = vsub.f32 1.0, %v1071
    %v1073 = vmul.f32 %v1070, %v1072
    %v1074 = vadd.f32 %v1070, %v1073
    %vm1075 = vweird.f32 %v1067
    %vm1076 = vweird.f32 %v1070
    %vm1077 = vmor %vm1075, %vm1076
    %v1078 = vsel %vm1077, %v1070, %v1074
    %v1079 = vand.u32 2147483647, %v1067
    %vm1080 = vcmp.eq.f32.partialorder %v1079, 8.507059e+37
    %v1081 = vand.u32 %v1067, 2147483648
    %v1082 = vor.u32 1.1754944e-38, %v1081
    %v1083 = vsel %vm1080, %v1082, %v1078
    %v1084 = vmul.f32 1.0, %v1083
    %v1085 = vrcp.pop %v1068
    %v1086 = vmul.f32 %v1068, %v1085
    %v1087 = vsub.f32 1.0, %v1086
    %v1088 = vmul.f32 %v1085, %v1087
    %v1089 = vadd.f32 %v1085, %v1088
    %vm1090 = vweird.f32 %v1068
    %vm1091 = vweird.f32 %v1085
    %vm1092 = vmor %vm1090, %vm1091
    %v1093 = vsel %vm1092, %v1085, %v1089
    %v1094 = vand.u32 2147483647, %v1068
    %vm1095 = vcmp.eq.f32.partialorder %v1094, 8.507059e+37
    %v1096 = vand.u32 %v1068, 2147483648
    %v1097 = vor.u32 1.1754944e-38, %v1096
    %v1098 = vsel %vm1095, %v1097, %v1093
    %v1099 = vmul.f32 1.0, %v1098
    %v1100 = vrcp.pop %v1069
    %v1101 = vmul.f32 %v1069, %v1100
    %v1102 = vsub.f32 1.0, %v1101
    %v1103 = vmul.f32 %v1100, %v1102
    %v1104 = vadd.f32 %v1100, %v1103
    %vm1105 = vweird.f32 %v1069
    %vm1106 = vweird.f32 %v1100
    %vm1107 = vmor %vm1105, %vm1106
    %v1108 = vsel %vm1107, %v1100, %v1104
    %v1109 = vand.u32 2147483647, %v1069
    %vm1110 = vcmp.eq.f32.partialorder %v1109, 8.507059e+37
    %v1111 = vand.u32 %v1069, 2147483648
    %v1112 = vor.u32 1.1754944e-38, %v1111
    %v1113 = vsel %vm1110, %v1112, %v1108
    %v1114 = vmul.f32 1.0, %v1113
    %v1115 = vtanh.pop %v1057
    %v1116 = vmul.f32 %v1099, 0.0
    %v1117 = vmul.f32 %v1084, %v1115
    %v1118 = vadd.f32 %v1116, %v1117
    %v1119 = vtanh.pop %v1118
    %v1120 = vmul.f32 %v1114, %v1119
    %v1121 = vpack.c.bf16 %v1120, %v1120
    %1122 = vmatpush.bf16.msra.mxu0 %v465
    %1123 = vmatpush.bf16.msra.mxu0 %v461
    %1124 = vmatpush.bf16.msra.mxu0 %v457
    %1125 = vmatpush.bf16.msra.mxu0 %v453
    %1126 = vmatpush.bf16.msra.mxu0 %v449
    %1127 = vmatpush.bf16.msra.mxu0 %v445
    %1128 = vmatpush.bf16.msra.mxu0 %v441
    %1129 = vmatpush.bf16.msra.mxu0 %v437
    %1130 = vmatmul.bf16.gmra.mxu0 %v841
    %v1131 = vpop.f32.mrf.mxu0
    %v1132 = vadd.f32 0.0, %v1131
    %v1133 = vpop.f32.mrf.mxu0
    %1134 = vdwg.mxu0
    %1135 = vmatpush.bf16.msra.mxu0 %v466
    %1136 = vmatpush.bf16.msra.mxu0 %v462
    %1137 = vmatpush.bf16.msra.mxu0 %v458
    %1138 = vmatpush.bf16.msra.mxu0 %v454
    %1139 = vmatpush.bf16.msra.mxu0 %v450
    %1140 = vmatpush.bf16.msra.mxu0 %v446
    %1141 = vmatpush.bf16.msra.mxu0 %v442
    %1142 = vmatpush.bf16.msra.mxu0 %v438
    %1143 = vmatmul.bf16.gmra.mxu0 %v841
    %v1144 = vpop.f32.mrf.mxu0
    %v1145 = vadd.f32 0.0, %v1144
    %v1146 = vpop.f32.mrf.mxu0
    %1147 = vdwg.mxu0
    %1148 = vmatpush.bf16.msra.mxu0 %v467
    %1149 = vmatpush.bf16.msra.mxu0 %v463
    %1150 = vmatpush.bf16.msra.mxu0 %v459
    %1151 = vmatpush.bf16.msra.mxu0 %v455
    %1152 = vmatpush.bf16.msra.mxu0 %v451
    %1153 = vmatpush.bf16.msra.mxu0 %v447
    %1154 = vmatpush.bf16.msra.mxu0 %v443
    %1155 = vmatpush.bf16.msra.mxu0 %v439
    %1156 = vmatmul.bf16.gmra.mxu0 %v841
    %v1157 = vpop.f32.mrf.mxu0
    %v1158 = vadd.f32 0.0, %v1157
    %v1159 = vpop.f32.mrf.mxu0
    %1160 = vdwg.mxu0
    %1161 = vmatpush.bf16.msra.mxu0 %v468
    %1162 = vmatpush.bf16.msra.mxu0 %v464
    %1163 = vmatpush.bf16.msra.mxu0 %v460
    %1164 = vmatpush.bf16.msra.mxu0 %v456
    %1165 = vmatpush.bf16.msra.mxu0 %v452
    %1166 = vmatpush.bf16.msra.mxu0 %v448
    %1167 = vmatpush.bf16.msra.mxu0 %v444
    %1168 = vmatpush.bf16.msra.mxu0 %v440
    %1169 = vmatmul.bf16.gmra.mxu0 %v841
    %v1170 = vpop.f32.mrf.mxu0
    %v1171 = vadd.f32 0.0, %v1170
    %v1172 = vpop.f32.mrf.mxu0
    %1173 = vdwg.mxu0
    %v1174 = vadd.f32 %v265, %v1132
    %v1175 = vadd.f32 %v266, %v1145
    %v1176 = vadd.f32 %v267, %v1158
    %v1177 = vadd.f32 %v268, %v1171
    %v1178 = vxor.u32 %v1174, 2147483648
    %v1179 = vxor.u32 %v1175, 2147483648
    %v1180 = vxor.u32 %v1176, 2147483648
    %v1181 = vmul.f32 %v1178, 1.442695
    %v1182 = vpow.pop %v1181
    %v1183 = vmul.f32 %v1179, 1.442695
    %v1184 = vpow.pop %v1183
    %v1185 = vmul.f32 %v1180, 1.442695
    %v1186 = vpow.pop %v1185
    %v1187 = vadd.f32 %v1182, 1.0
    %v1188 = vadd.f32 %v1184, 1.0
    %v1189 = vadd.f32 %v1186, 1.0
    %v1190 = vrcp.pop %v1187
    %v1191 = vmul.f32 %v1187, %v1190
    %v1192 = vsub.f32 1.0, %v1191
    %v1193 = vmul.f32 %v1190, %v1192
    %v1194 = vadd.f32 %v1190, %v1193
    %vm1195 = vweird.f32 %v1187
    %vm1196 = vweird.f32 %v1190
    %vm1197 = vmor %vm1195, %vm1196
    %v1198 = vsel %vm1197, %v1190, %v1194
    %v1199 = vand.u32 2147483647, %v1187
    %vm1200 = vcmp.eq.f32.partialorder %v1199, 8.507059e+37
    %v1201 = vand.u32 %v1187, 2147483648
    %v1202 = vor.u32 1.1754944e-38, %v1201
    %v1203 = vsel %vm1200, %v1202, %v1198
    %v1204 = vmul.f32 1.0, %v1203
    %v1205 = vrcp.pop %v1188
    %v1206 = vmul.f32 %v1188, %v1205
    %v1207 = vsub.f32 1.0, %v1206
    %v1208 = vmul.f32 %v1205, %v1207
    %v1209 = vadd.f32 %v1205, %v1208
    %vm1210 = vweird.f32 %v1188
    %vm1211 = vweird.f32 %v1205
    %vm1212 = vmor %vm1210, %vm1211
    %v1213 = vsel %vm1212, %v1205, %v1209
    %v1214 = vand.u32 2147483647, %v1188
    %vm1215 = vcmp.eq.f32.partialorder %v1214, 8.507059e+37
    %v1216 = vand.u32 %v1188, 2147483648
    %v1217 = vor.u32 1.1754944e-38, %v1216
    %v1218 = vsel %vm1215, %v1217, %v1213
    %v1219 = vmul.f32 1.0, %v1218
    %v1220 = vrcp.pop %v1189
    %v1221 = vmul.f32 %v1189, %v1220
    %v1222 = vsub.f32 1.0, %v1221
    %v1223 = vmul.f32 %v1220, %v1222
    %v1224 = vadd.f32 %v1220, %v1223
    %vm1225 = vweird.f32 %v1189
    %vm1226 = vweird.f32 %v1220
    %vm1227 = vmor %vm1225, %vm1226
    %v1228 = vsel %vm1227, %v1220, %v1224
    %v1229 = vand.u32 2147483647, %v1189
    %vm1230 = vcmp.eq.f32.partialorder %v1229, 8.507059e+37
    %v1231 = vand.u32 %v1189, 2147483648
    %v1232 = vor.u32 1.1754944e-38, %v1231
    %v1233 = vsel %vm1230, %v1232, %v1228
    %v1234 = vmul.f32 1.0, %v1233
    %v1235 = vtanh.pop %v1177
    %v1236 = vmul.f32 %v1219, %v617
    %v1237 = vmul.f32 %v1204, %v1235
    %v1238 = vadd.f32 %v1236, %v1237
    %v1239 = vtanh.pop %v1238
    %v1240 = vmul.f32 %v1234, %v1239
    %1241 = vmatpush.bf16.msra.mxu0 %v753
    %1242 = vmatpush.bf16.msra.mxu0 %v749
    %1243 = vmatpush.bf16.msra.mxu0 %v745
    %1244 = vmatpush.bf16.msra.mxu0 %v741
    %1245 = vmatpush.bf16.msra.mxu0 %v737
    %1246 = vmatpush.bf16.msra.mxu0 %v733
    %1247 = vmatpush.bf16.msra.mxu0 %v729
    %1248 = vmatpush.bf16.msra.mxu0 %v725
    %1249 = vmatmul.bf16.gmra.mxu0 %v1121
    %v1250 = vpop.f32.mrf.mxu0
    %v1251 = vadd.f32 %v621, %v1250
    %v1252 = vpop.f32.mrf.mxu0
    %1253 = vdwg.mxu0
    %1254 = vmatpush.bf16.msra.mxu0 %v754
    %1255 = vmatpush.bf16.msra.mxu0 %v750
    %1256 = vmatpush.bf16.msra.mxu0 %v746
    %1257 = vmatpush.bf16.msra.mxu0 %v742
    %1258 = vmatpush.bf16.msra.mxu0 %v738
    %1259 = vmatpush.bf16.msra.mxu0 %v734
    %1260 = vmatpush.bf16.msra.mxu0 %v730
    %1261 = vmatpush.bf16.msra.mxu0 %v726
    %1262 = vmatmul.bf16.gmra.mxu0 %v1121
    %v1263 = vpop.f32.mrf.mxu0
    %v1264 = vadd.f32 %v622, %v1263
    %v1265 = vpop.f32.mrf.mxu0
    %1266 = vdwg.mxu0
    %1267 = vmatpush.bf16.msra.mxu0 %v755
    %1268 = vmatpush.bf16.msra.mxu0 %v751
    %1269 = vmatpush.bf16.msra.mxu0 %v747
    %1270 = vmatpush.bf16.msra.mxu0 %v743
    %1271 = vmatpush.bf16.msra.mxu0 %v739
    %1272 = vmatpush.bf16.msra.mxu0 %v735
    %1273 = vmatpush.bf16.msra.mxu0 %v731
    %1274 = vmatpush.bf16.msra.mxu0 %v727
    %1275 = vmatmul.bf16.gmra.mxu0 %v1121
    %v1276 = vpop.f32.mrf.mxu0
    %v1277 = vadd.f32 %v623, %v1276
    %v1278 = vpop.f32.mrf.mxu0
    %1279 = vdwg.mxu0
    %1280 = vmatpush.bf16.msra.mxu0 %v756
    %1281 = vmatpush.bf16.msra.mxu0 %v752
    %1282 = vmatpush.bf16.msra.mxu0 %v748
    %1283 = vmatpush.bf16.msra.mxu0 %v744
    %1284 = vmatpush.bf16.msra.mxu0 %v740
    %1285 = vmatpush.bf16.msra.mxu0 %v736
    %1286 = vmatpush.bf16.msra.mxu0 %v732
    %1287 = vmatpush.bf16.msra.mxu0 %v728
    %1288 = vmatmul.bf16.gmra.mxu0 %v1121
    %v1289 = vpop.f32.mrf.mxu0
    %v1290 = vadd.f32 %v624, %v1289
    %v1291 = vpop.f32.mrf.mxu0
    %1292 = vdwg.mxu0
    %v1293 = vpack.c.bf16 %v1240, %v1240
    %1294 = vmatpush.bf16.msra.mxu0 %v966
    %1295 = vmatpush.bf16.msra.mxu0 %v962
    %1296 = vmatpush.bf16.msra.mxu0 %v958
    %1297 = vmatpush.bf16.msra.mxu0 %v954
    %1298 = vmatpush.bf16.msra.mxu0 %v950
    %1299 = vmatpush.bf16.msra.mxu0 %v946
    %1300 = vmatpush.bf16.msra.mxu0 %v942
    %1301 = vmatpush.bf16.msra.mxu0 %v938
    %1302 = vmatmul.bf16.gmra.mxu0 %v1293
    %v1303 = vpop.f32.mrf.mxu0
    %v1304 = vadd.f32 0.0, %v1303
    %v1305 = vpop.f32.mrf.mxu0
    %1306 = vdwg.mxu0
    %1307 = vmatpush.bf16.msra.mxu0 %v967
    %1308 = vmatpush.bf16.msra.mxu0 %v963
    %1309 = vmatpush.bf16.msra.mxu0 %v959
    %1310 = vmatpush.bf16.msra.mxu0 %v955
    %1311 = vmatpush.bf16.msra.mxu0 %v951
    %1312 = vmatpush.bf16.msra.mxu0 %v947
    %1313 = vmatpush.bf16.msra.mxu0 %v943
    %1314 = vmatpush.bf16.msra.mxu0 %v939
    %1315 = vmatmul.bf16.gmra.mxu0 %v1293
    %v1316 = vpop.f32.mrf.mxu0
    %v1317 = vadd.f32 0.0, %v1316
    %v1318 = vpop.f32.mrf.mxu0
    %1319 = vdwg.mxu0
    %1320 = vmatpush.bf16.msra.mxu0 %v968
    %1321 = vmatpush.bf16.msra.mxu0 %v964
    %1322 = vmatpush.bf16.msra.mxu0 %v960
    %1323 = vmatpush.bf16.msra.mxu0 %v956
    %1324 = vmatpush.bf16.msra.mxu0 %v952
    %1325 = vmatpush.bf16.msra.mxu0 %v948
    %1326 = vmatpush.bf16.msra.mxu0 %v944
    %1327 = vmatpush.bf16.msra.mxu0 %v940
    %1328 = vmatmul.bf16.gmra.mxu0 %v1293
    %v1329 = vpop.f32.mrf.mxu0
    %v1330 = vadd.f32 0.0, %v1329
    %v1331 = vpop.f32.mrf.mxu0
    %1332 = vdwg.mxu0
    %1333 = vmatpush.bf16.msra.mxu0 %v969
    %1334 = vmatpush.bf16.msra.mxu0 %v965
    %1335 = vmatpush.bf16.msra.mxu0 %v961
    %1336 = vmatpush.bf16.msra.mxu0 %v957
    %1337 = vmatpush.bf16.msra.mxu0 %v953
    %1338 = vmatpush.bf16.msra.mxu0 %v949
    %1339 = vmatpush.bf16.msra.mxu0 %v945
    %1340 = vmatpush.bf16.msra.mxu0 %v941
    %1341 = vmatmul.bf16.gmra.mxu0 %v1293
    %v1342 = vpop.f32.mrf.mxu0
    %v1343 = vadd.f32 0.0, %v1342
    %v1344 = vpop.f32.mrf.mxu0
    %1345 = vdwg.mxu0
    %v1346 = vadd.f32 %v1251, %v1304
    %v1347 = vadd.f32 %v1264, %v1317
    %v1348 = vadd.f32 %v1277, %v1330
    %v1349 = vadd.f32 %v1290, %v1343
    %v1350 = vxor.u32 %v1346, 2147483648
    %v1351 = vxor.u32 %v1347, 2147483648
    %v1352 = vxor.u32 %v1348, 2147483648
    %v1353 = vmul.f32 %v1350, 1.442695
    %v1354 = vpow.pop %v1353
    %v1355 = vmul.f32 %v1351, 1.442695
    %v1356 = vpow.pop %v1355
    %v1357 = vmul.f32 %v1352, 1.442695
    %v1358 = vpow.pop %v1357
    %v1359 = vadd.f32 %v1354, 1.0
    %v1360 = vadd.f32 %v1356, 1.0
    %v1361 = vadd.f32 %v1358, 1.0
    %v1362 = vrcp.pop %v1359
    %v1363 = vmul.f32 %v1359, %v1362
    %v1364 = vsub.f32 1.0, %v1363
    %v1365 = vmul.f32 %v1362, %v1364
    %v1366 = vadd.f32 %v1362, %v1365
    %vm1367 = vweird.f32 %v1359
    %vm1368 = vweird.f32 %v1362
    %vm1369 = vmor %vm1367, %vm1368
    %v1370 = vsel %vm1369, %v1362, %v1366
    %v1371 = vand.u32 2147483647, %v1359
    %vm1372 = vcmp.eq.f32.partialorder %v1371, 8.507059e+37
    %v1373 = vand.u32 %v1359, 2147483648
    %v1374 = vor.u32 1.1754944e-38, %v1373
    %v1375 = vsel %vm1372, %v1374, %v1370
    %v1376 = vmul.f32 1.0, %v1375
    %v1377 = vrcp.pop %v1360
    %v1378 = vmul.f32 %v1360, %v1377
    %v1379 = vsub.f32 1.0, %v1378
    %v1380 = vmul.f32 %v1377, %v1379
    %v1381 = vadd.f32 %v1377, %v1380
    %vm1382 = vweird.f32 %v1360
    %vm1383 = vweird.f32 %v1377
    %vm1384 = vmor %vm1382, %vm1383
    %v1385 = vsel %vm1384, %v1377, %v1381
    %v1386 = vand.u32 2147483647, %v1360
    %vm1387 = vcmp.eq.f32.partialorder %v1386, 8.507059e+37
    %v1388 = vand.u32 %v1360, 2147483648
    %v1389 = vor.u32 1.1754944e-38, %v1388
    %v1390 = vsel %vm1387, %v1389, %v1385
    %v1391 = vmul.f32 1.0, %v1390
    %v1392 = vrcp.pop %v1361
    %v1393 = vmul.f32 %v1361, %v1392
    %v1394 = vsub.f32 1.0, %v1393
    %v1395 = vmul.f32 %v1392, %v1394
    %v1396 = vadd.f32 %v1392, %v1395
    %vm1397 = vweird.f32 %v1361
    %vm1398 = vweird.f32 %v1392
    %vm1399 = vmor %vm1397, %vm1398
    %v1400 = vsel %vm1399, %v1392, %v1396
    %v1401 = vand.u32 2147483647, %v1361
    %vm1402 = vcmp.eq.f32.partialorder %v1401, 8.507059e+37
    %v1403 = vand.u32 %v1361, 2147483648
    %v1404 = vor.u32 1.1754944e-38, %v1403
    %v1405 = vsel %vm1402, %v1404, %v1400
    %v1406 = vmul.f32 1.0, %v1405
    %v1407 = vtanh.pop %v1349
    %v1408 = vmul.f32 %v1391, %v1118
    %v1409 = vmul.f32 %v1376, %v1407
    %v1410 = vadd.f32 %v1408, %v1409
    %v1411 = vtanh.pop %v1410
    %v1412 = vmul.f32 %v1406, %v1411
    %v1413 = vpack.c.bf16 %v1412, %v1412
    %1414 = vmatpush.bf16.msra.mxu0 %v465
    %1415 = vmatpush.bf16.msra.mxu0 %v461
    %1416 = vmatpush.bf16.msra.mxu0 %v457
    %1417 = vmatpush.bf16.msra.mxu0 %v453
    %1418 = vmatpush.bf16.msra.mxu0 %v449
    %1419 = vmatpush.bf16.msra.mxu0 %v445
    %1420 = vmatpush.bf16.msra.mxu0 %v441
    %1421 = vmatpush.bf16.msra.mxu0 %v437
    %1422 = vmatmul.bf16.gmra.mxu0 %v1293
    %v1423 = vpop.f32.mrf.mxu0
    %v1424 = vadd.f32 0.0, %v1423
    %v1425 = vpop.f32.mrf.mxu0
    %1426 = vdwg.mxu0
    %1427 = vmatpush.bf16.msra.mxu0 %v466
    %1428 = vmatpush.bf16.msra.mxu0 %v462
    %1429 = vmatpush.bf16.msra.mxu0 %v458
    %1430 = vmatpush.bf16.msra.mxu0 %v454
    %1431 = vmatpush.bf16.msra.mxu0 %v450
    %1432 = vmatpush.bf16.msra.mxu0 %v446
    %1433 = vmatpush.bf16.msra.mxu0 %v442
    %1434 = vmatpush.bf16.msra.mxu0 %v438
    %1435 = vmatmul.bf16.gmra.mxu0 %v1293
    %v1436 = vpop.f32.mrf.mxu0
    %v1437 = vadd.f32 0.0, %v1436
    %v1438 = vpop.f32.mrf.mxu0
    %1439 = vdwg.mxu0
    %1440 = vmatpush.bf16.msra.mxu0 %v467
    %1441 = vmatpush.bf16.msra.mxu0 %v463
    %1442 = vmatpush.bf16.msra.mxu0 %v459
    %1443 = vmatpush.bf16.msra.mxu0 %v455
    %1444 = vmatpush.bf16.msra.mxu0 %v451
    %1445 = vmatpush.bf16.msra.mxu0 %v447
    %1446 = vmatpush.bf16.msra.mxu0 %v443
    %1447 = vmatpush.bf16.msra.mxu0 %v439
    %1448 = vmatmul.bf16.gmra.mxu0 %v1293
    %v1449 = vpop.f32.mrf.mxu0
    %v1450 = vadd.f32 0.0, %v1449
    %v1451 = vpop.f32.mrf.mxu0
    %1452 = vdwg.mxu0
    %1453 = vmatpush.bf16.msra.mxu0 %v468
    %1454 = vmatpush.bf16.msra.mxu0 %v464
    %1455 = vmatpush.bf16.msra.mxu0 %v460
    %1456 = vmatpush.bf16.msra.mxu0 %v456
    %1457 = vmatpush.bf16.msra.mxu0 %v452
    %1458 = vmatpush.bf16.msra.mxu0 %v448
    %1459 = vmatpush.bf16.msra.mxu0 %v444
    %1460 = vmatpush.bf16.msra.mxu0 %v440
    %1461 = vmatmul.bf16.gmra.mxu0 %v1293
    %v1462 = vpop.f32.mrf.mxu0
    %v1463 = vadd.f32 0.0, %v1462
    %v1464 = vpop.f32.mrf.mxu0
    %1465 = vdwg.mxu0
    %v1466 = vadd.f32 %v277, %v1424
    %v1467 = vadd.f32 %v278, %v1437
    %v1468 = vadd.f32 %v279, %v1450
    %v1469 = vadd.f32 %v280, %v1463
    %v1470 = vxor.u32 %v1466, 2147483648
    %v1471 = vxor.u32 %v1467, 2147483648
    %v1472 = vxor.u32 %v1468, 2147483648
    %v1473 = vmul.f32 %v1470, 1.442695
    %v1474 = vpow.pop %v1473
    %v1475 = vmul.f32 %v1471, 1.442695
    %v1476 = vpow.pop %v1475
    %v1477 = vmul.f32 %v1472, 1.442695
    %v1478 = vpow.pop %v1477
    %v1479 = vadd.f32 %v1474, 1.0
    %v1480 = vadd.f32 %v1476, 1.0
    %v1481 = vadd.f32 %v1478, 1.0
    %v1482 = vrcp.pop %v1479
    %v1483 = vmul.f32 %v1479, %v1482
    %v1484 = vsub.f32 1.0, %v1483
    %v1485 = vmul.f32 %v1482, %v1484
    %v1486 = vadd.f32 %v1482, %v1485
    %vm1487 = vweird.f32 %v1479
    %vm1488 = vweird.f32 %v1482
    %vm1489 = vmor %vm1487, %vm1488
    %v1490 = vsel %vm1489, %v1482, %v1486
    %v1491 = vand.u32 2147483647, %v1479
    %vm1492 = vcmp.eq.f32.partialorder %v1491, 8.507059e+37
    %v1493 = vand.u32 %v1479, 2147483648
    %v1494 = vor.u32 1.1754944e-38, %v1493
    %v1495 = vsel %vm1492, %v1494, %v1490
    %v1496 = vmul.f32 1.0, %v1495
    %v1497 = vrcp.pop %v1480
    %v1498 = vmul.f32 %v1480, %v1497
    %v1499 = vsub.f32 1.0, %v1498
    %v1500 = vmul.f32 %v1497, %v1499
    %v1501 = vadd.f32 %v1497, %v1500
    %vm1502 = vweird.f32 %v1480
    %vm1503 = vweird.f32 %v1497
    %vm1504 = vmor %vm1502, %vm1503
    %v1505 = vsel %vm1504, %v1497, %v1501
    %v1506 = vand.u32 2147483647, %v1480
    %vm1507 = vcmp.eq.f32.partialorder %v1506, 8.507059e+37
    %v1508 = vand.u32 %v1480, 2147483648
    %v1509 = vor.u32 1.1754944e-38, %v1508
    %v1510 = vsel %vm1507, %v1509, %v1505
    %v1511 = vmul.f32 1.0, %v1510
    %v1512 = vrcp.pop %v1481
    %v1513 = vmul.f32 %v1481, %v1512
    %v1514 = vsub.f32 1.0, %v1513
    %v1515 = vmul.f32 %v1512, %v1514
    %v1516 = vadd.f32 %v1512, %v1515
    %vm1517 = vweird.f32 %v1481
    %vm1518 = vweird.f32 %v1512
    %vm1519 = vmor %vm1517, %vm1518
    %v1520 = vsel %vm1519, %v1512, %v1516
    %v1521 = vand.u32 2147483647, %v1481
    %vm1522 = vcmp.eq.f32.partialorder %v1521, 8.507059e+37
    %v1523 = vand.u32 %v1481, 2147483648
    %v1524 = vor.u32 1.1754944e-38, %v1523
    %v1525 = vsel %vm1522, %v1524, %v1520
    %v1526 = vmul.f32 1.0, %v1525
    %v1527 = vtanh.pop %v1469
    %v1528 = vmul.f32 %v1511, %v1238
    %v1529 = vmul.f32 %v1496, %v1527
    %v1530 = vadd.f32 %v1528, %v1529
    %v1531 = vtanh.pop %v1530
    %v1532 = vmul.f32 %v1526, %v1531
    %1533 = vmatpush.bf16.msra.mxu0 %v753
    %1534 = vmatpush.bf16.msra.mxu0 %v749
    %1535 = vmatpush.bf16.msra.mxu0 %v745
    %1536 = vmatpush.bf16.msra.mxu0 %v741
    %1537 = vmatpush.bf16.msra.mxu0 %v737
    %1538 = vmatpush.bf16.msra.mxu0 %v733
    %1539 = vmatpush.bf16.msra.mxu0 %v729
    %1540 = vmatpush.bf16.msra.mxu0 %v725
    %1541 = vmatmul.bf16.gmra.mxu0 %v1413
    %v1542 = vpop.f32.mrf.mxu0
    %v1543 = vadd.f32 %v621, %v1542
    %v1544 = vpop.f32.mrf.mxu0
    %1545 = vdwg.mxu0
    %1546 = vmatpush.bf16.msra.mxu0 %v754
    %1547 = vmatpush.bf16.msra.mxu0 %v750
    %1548 = vmatpush.bf16.msra.mxu0 %v746
    %1549 = vmatpush.bf16.msra.mxu0 %v742
    %1550 = vmatpush.bf16.msra.mxu0 %v738
    %1551 = vmatpush.bf16.msra.mxu0 %v734
    %1552 = vmatpush.bf16.msra.mxu0 %v730
    %1553 = vmatpush.bf16.msra.mxu0 %v726
    %1554 = vmatmul.bf16.gmra.mxu0 %v1413
    %v1555 = vpop.f32.mrf.mxu0
    %v1556 = vadd.f32 %v622, %v1555
    %v1557 = vpop.f32.mrf.mxu0
    %1558 = vdwg.mxu0
    %1559 = vmatpush.bf16.msra.mxu0 %v755
    %1560 = vmatpush.bf16.msra.mxu0 %v751
    %1561 = vmatpush.bf16.msra.mxu0 %v747
    %1562 = vmatpush.bf16.msra.mxu0 %v743
    %1563 = vmatpush.bf16.msra.mxu0 %v739
    %1564 = vmatpush.bf16.msra.mxu0 %v735
    %1565 = vmatpush.bf16.msra.mxu0 %v731
    %1566 = vmatpush.bf16.msra.mxu0 %v727
    %1567 = vmatmul.bf16.gmra.mxu0 %v1413
    %v1568 = vpop.f32.mrf.mxu0
    %v1569 = vadd.f32 %v623, %v1568
    %v1570 = vpop.f32.mrf.mxu0
    %1571 = vdwg.mxu0
    %1572 = vmatpush.bf16.msra.mxu0 %v756
    %1573 = vmatpush.bf16.msra.mxu0 %v752
    %1574 = vmatpush.bf16.msra.mxu0 %v748
    %1575 = vmatpush.bf16.msra.mxu0 %v744
    %1576 = vmatpush.bf16.msra.mxu0 %v740
    %1577 = vmatpush.bf16.msra.mxu0 %v736
    %1578 = vmatpush.bf16.msra.mxu0 %v732
    %1579 = vmatpush.bf16.msra.mxu0 %v728
    %1580 = vmatmul.bf16.gmra.mxu0 %v1413
    %v1581 = vpop.f32.mrf.mxu0
    %v1582 = vadd.f32 %v624, %v1581
    %v1583 = vpop.f32.mrf.mxu0
    %1584 = vdwg.mxu0
    %v1585 = vpack.c.bf16 %v1532, %v1532
    %1586 = vmatpush.bf16.msra.mxu0 %v966
    %1587 = vmatpush.bf16.msra.mxu0 %v962
    %1588 = vmatpush.bf16.msra.mxu0 %v958
    %1589 = vmatpush.bf16.msra.mxu0 %v954
    %1590 = vmatpush.bf16.msra.mxu0 %v950
    %1591 = vmatpush.bf16.msra.mxu0 %v946
    %1592 = vmatpush.bf16.msra.mxu0 %v942
    %1593 = vmatpush.bf16.msra.mxu0 %v938
    %1594 = vmatmul.bf16.gmra.mxu0 %v1585
    %v1595 = vpop.f32.mrf.mxu0
    %v1596 = vadd.f32 0.0, %v1595
    %v1597 = vpop.f32.mrf.mxu0
    %1598 = vdwg.mxu0
    %1599 = vmatpush.bf16.msra.mxu0 %v967
    %1600 = vmatpush.bf16.msra.mxu0 %v963
    %1601 = vmatpush.bf16.msra.mxu0 %v959
    %1602 = vmatpush.bf16.msra.mxu0 %v955
    %1603 = vmatpush.bf16.msra.mxu0 %v951
    %1604 = vmatpush.bf16.msra.mxu0 %v947
    %1605 = vmatpush.bf16.msra.mxu0 %v943
    %1606 = vmatpush.bf16.msra.mxu0 %v939
    %1607 = vmatmul.bf16.gmra.mxu0 %v1585
    %v1608 = vpop.f32.mrf.mxu0
    %v1609 = vadd.f32 0.0, %v1608
    %v1610 = vpop.f32.mrf.mxu0
    %1611 = vdwg.mxu0
    %1612 = vmatpush.bf16.msra.mxu0 %v968
    %1613 = vmatpush.bf16.msra.mxu0 %v964
    %1614 = vmatpush.bf16.msra.mxu0 %v960
    %1615 = vmatpush.bf16.msra.mxu0 %v956
    %1616 = vmatpush.bf16.msra.mxu0 %v952
    %1617 = vmatpush.bf16.msra.mxu0 %v948
    %1618 = vmatpush.bf16.msra.mxu0 %v944
    %1619 = vmatpush.bf16.msra.mxu0 %v940
    %1620 = vmatmul.bf16.gmra.mxu0 %v1585
    %v1621 = vpop.f32.mrf.mxu0
    %v1622 = vadd.f32 0.0, %v1621
    %v1623 = vpop.f32.mrf.mxu0
    %1624 = vdwg.mxu0
    %1625 = vmatpush.bf16.msra.mxu0 %v969
    %1626 = vmatpush.bf16.msra.mxu0 %v965
    %1627 = vmatpush.bf16.msra.mxu0 %v961
    %1628 = vmatpush.bf16.msra.mxu0 %v957
    %1629 = vmatpush.bf16.msra.mxu0 %v953
    %1630 = vmatpush.bf16.msra.mxu0 %v949
    %1631 = vmatpush.bf16.msra.mxu0 %v945
    %1632 = vmatpush.bf16.msra.mxu0 %v941
    %1633 = vmatmul.bf16.gmra.mxu0 %v1585
    %v1634 = vpop.f32.mrf.mxu0
    %v1635 = vadd.f32 0.0, %v1634
    %v1636 = vpop.f32.mrf.mxu0
    %1637 = vdwg.mxu0
    %v1638 = vadd.f32 %v1543, %v1596
    %v1639 = vadd.f32 %v1556, %v1609
    %v1640 = vadd.f32 %v1569, %v1622
    %v1641 = vadd.f32 %v1582, %v1635
    %v1642 = vxor.u32 %v1638, 2147483648
    %v1643 = vxor.u32 %v1639, 2147483648
    %v1644 = vxor.u32 %v1640, 2147483648
    %v1645 = vmul.f32 %v1642, 1.442695
    %v1646 = vpow.pop %v1645
    %v1647 = vmul.f32 %v1643, 1.442695
    %v1648 = vpow.pop %v1647
    %v1649 = vmul.f32 %v1644, 1.442695
    %v1650 = vpow.pop %v1649
    %v1651 = vadd.f32 %v1646, 1.0
    %v1652 = vadd.f32 %v1648, 1.0
    %v1653 = vadd.f32 %v1650, 1.0
    %v1654 = vrcp.pop %v1651
    %v1655 = vmul.f32 %v1651, %v1654
    %v1656 = vsub.f32 1.0, %v1655
    %v1657 = vmul.f32 %v1654, %v1656
    %v1658 = vadd.f32 %v1654, %v1657
    %vm1659 = vweird.f32 %v1651
    %vm1660 = vweird.f32 %v1654
    %vm1661 = vmor %vm1659, %vm1660
    %v1662 = vsel %vm1661, %v1654, %v1658
    %v1663 = vand.u32 2147483647, %v1651
    %vm1664 = vcmp.eq.f32.partialorder %v1663, 8.507059e+37
    %v1665 = vand.u32 %v1651, 2147483648
    %v1666 = vor.u32 1.1754944e-38, %v1665
    %v1667 = vsel %vm1664, %v1666, %v1662
    %v1668 = vmul.f32 1.0, %v1667
    %v1669 = vrcp.pop %v1652
    %v1670 = vmul.f32 %v1652, %v1669
    %v1671 = vsub.f32 1.0, %v1670
    %v1672 = vmul.f32 %v1669, %v1671
    %v1673 = vadd.f32 %v1669, %v1672
    %vm1674 = vweird.f32 %v1652
    %vm1675 = vweird.f32 %v1669
    %vm1676 = vmor %vm1674, %vm1675
    %v1677 = vsel %vm1676, %v1669, %v1673
    %v1678 = vand.u32 2147483647, %v1652
    %vm1679 = vcmp.eq.f32.partialorder %v1678, 8.507059e+37
    %v1680 = vand.u32 %v1652, 2147483648
    %v1681 = vor.u32 1.1754944e-38, %v1680
    %v1682 = vsel %vm1679, %v1681, %v1677
    %v1683 = vmul.f32 1.0, %v1682
    %v1684 = vrcp.pop %v1653
    %v1685 = vmul.f32 %v1653, %v1684
    %v1686 = vsub.f32 1.0, %v1685
    %v1687 = vmul.f32 %v1684, %v1686
    %v1688 = vadd.f32 %v1684, %v1687
    %vm1689 = vweird.f32 %v1653
    %vm1690 = vweird.f32 %v1684
    %vm1691 = vmor %vm1689, %vm1690
    %v1692 = vsel %vm1691, %v1684, %v1688
    %v1693 = vand.u32 2147483647, %v1653
    %vm1694 = vcmp.eq.f32.partialorder %v1693, 8.507059e+37
    %v1695 = vand.u32 %v1653, 2147483648
    %v1696 = vor.u32 1.1754944e-38, %v1695
    %v1697 = vsel %vm1694, %v1696, %v1692
    %v1698 = vmul.f32 1.0, %v1697
    %v1699 = vtanh.pop %v1641
    %v1700 = vmul.f32 %v1683, %v1410
    %v1701 = vmul.f32 %v1668, %v1699
    %v1702 = vadd.f32 %v1700, %v1701
    %v1703 = vtanh.pop %v1702
    %v1704 = vmul.f32 %v1698, %v1703
    %v1705 = vpack.c.bf16 %v1704, %v1704
    %1706 = vmatpush.bf16.msra.mxu0 %v465
    %1707 = vmatpush.bf16.msra.mxu0 %v461
    %1708 = vmatpush.bf16.msra.mxu0 %v457
    %1709 = vmatpush.bf16.msra.mxu0 %v453
    %1710 = vmatpush.bf16.msra.mxu0 %v449
    %1711 = vmatpush.bf16.msra.mxu0 %v445
    %1712 = vmatpush.bf16.msra.mxu0 %v441
    %1713 = vmatpush.bf16.msra.mxu0 %v437
    %1714 = vmatmul.bf16.gmra.mxu0 %v1585
    %v1715 = vpop.f32.mrf.mxu0
    %v1716 = vadd.f32 0.0, %v1715
    %v1717 = vpop.f32.mrf.mxu0
    %1718 = vdwg.mxu0
    %1719 = vmatpush.bf16.msra.mxu0 %v466
    %1720 = vmatpush.bf16.msra.mxu0 %v462
    %1721 = vmatpush.bf16.msra.mxu0 %v458
    %1722 = vmatpush.bf16.msra.mxu0 %v454
    %1723 = vmatpush.bf16.msra.mxu0 %v450
    %1724 = vmatpush.bf16.msra.mxu0 %v446
    %1725 = vmatpush.bf16.msra.mxu0 %v442
    %1726 = vmatpush.bf16.msra.mxu0 %v438
    %1727 = vmatmul.bf16.gmra.mxu0 %v1585
    %v1728 = vpop.f32.mrf.mxu0
    %v1729 = vadd.f32 0.0, %v1728
    %v1730 = vpop.f32.mrf.mxu0
    %1731 = vdwg.mxu0
    %1732 = vmatpush.bf16.msra.mxu0 %v467
    %1733 = vmatpush.bf16.msra.mxu0 %v463
    %1734 = vmatpush.bf16.msra.mxu0 %v459
    %1735 = vmatpush.bf16.msra.mxu0 %v455
    %1736 = vmatpush.bf16.msra.mxu0 %v451
    %1737 = vmatpush.bf16.msra.mxu0 %v447
    %1738 = vmatpush.bf16.msra.mxu0 %v443
    %1739 = vmatpush.bf16.msra.mxu0 %v439
    %1740 = vmatmul.bf16.gmra.mxu0 %v1585
    %v1741 = vpop.f32.mrf.mxu0
    %v1742 = vadd.f32 0.0, %v1741
    %v1743 = vpop.f32.mrf.mxu0
    %1744 = vdwg.mxu0
    %1745 = vmatpush.bf16.msra.mxu0 %v468
    %1746 = vmatpush.bf16.msra.mxu0 %v464
    %1747 = vmatpush.bf16.msra.mxu0 %v460
    %1748 = vmatpush.bf16.msra.mxu0 %v456
    %1749 = vmatpush.bf16.msra.mxu0 %v452
    %1750 = vmatpush.bf16.msra.mxu0 %v448
    %1751 = vmatpush.bf16.msra.mxu0 %v444
    %1752 = vmatpush.bf16.msra.mxu0 %v440
    %1753 = vmatmul.bf16.gmra.mxu0 %v1585
    %v1754 = vpop.f32.mrf.mxu0
    %v1755 = vadd.f32 0.0, %v1754
    %v1756 = vpop.f32.mrf.mxu0
    %1757 = vdwg.mxu0
    %v1758 = vadd.f32 %v289, %v1716
    %v1759 = vadd.f32 %v290, %v1729
    %v1760 = vadd.f32 %v291, %v1742
    %v1761 = vadd.f32 %v292, %v1755
    %v1762 = vxor.u32 %v1758, 2147483648
    %v1763 = vxor.u32 %v1759, 2147483648
    %v1764 = vxor.u32 %v1760, 2147483648
    %v1765 = vmul.f32 %v1762, 1.442695
    %v1766 = vpow.pop %v1765
    %v1767 = vmul.f32 %v1763, 1.442695
    %v1768 = vpow.pop %v1767
    %v1769 = vmul.f32 %v1764, 1.442695
    %v1770 = vpow.pop %v1769
    %v1771 = vadd.f32 %v1766, 1.0
    %v1772 = vadd.f32 %v1768, 1.0
    %v1773 = vadd.f32 %v1770, 1.0
    %v1774 = vrcp.pop %v1771
    %v1775 = vmul.f32 %v1771, %v1774
    %v1776 = vsub.f32 1.0, %v1775
    %v1777 = vmul.f32 %v1774, %v1776
    %v1778 = vadd.f32 %v1774, %v1777
    %vm1779 = vweird.f32 %v1771
    %vm1780 = vweird.f32 %v1774
    %vm1781 = vmor %vm1779, %vm1780
    %v1782 = vsel %vm1781, %v1774, %v1778
    %v1783 = vand.u32 2147483647, %v1771
    %vm1784 = vcmp.eq.f32.partialorder %v1783, 8.507059e+37
    %v1785 = vand.u32 %v1771, 2147483648
    %v1786 = vor.u32 1.1754944e-38, %v1785
    %v1787 = vsel %vm1784, %v1786, %v1782
    %v1788 = vmul.f32 1.0, %v1787
    %v1789 = vrcp.pop %v1772
    %v1790 = vmul.f32 %v1772, %v1789
    %v1791 = vsub.f32 1.0, %v1790
    %v1792 = vmul.f32 %v1789, %v1791
    %v1793 = vadd.f32 %v1789, %v1792
    %vm1794 = vweird.f32 %v1772
    %vm1795 = vweird.f32 %v1789
    %vm1796 = vmor %vm1794, %vm1795
    %v1797 = vsel %vm1796, %v1789, %v1793
    %v1798 = vand.u32 2147483647, %v1772
    %vm1799 = vcmp.eq.f32.partialorder %v1798, 8.507059e+37
    %v1800 = vand.u32 %v1772, 2147483648
    %v1801 = vor.u32 1.1754944e-38, %v1800
    %v1802 = vsel %vm1799, %v1801, %v1797
    %v1803 = vmul.f32 1.0, %v1802
    %v1804 = vrcp.pop %v1773
    %v1805 = vmul.f32 %v1773, %v1804
    %v1806 = vsub.f32 1.0, %v1805
    %v1807 = vmul.f32 %v1804, %v1806
    %v1808 = vadd.f32 %v1804, %v1807
    %vm1809 = vweird.f32 %v1773
    %vm1810 = vweird.f32 %v1804
    %vm1811 = vmor %vm1809, %vm1810
    %v1812 = vsel %vm1811, %v1804, %v1808
    %v1813 = vand.u32 2147483647, %v1773
    %vm1814 = vcmp.eq.f32.partialorder %v1813, 8.507059e+37
    %v1815 = vand.u32 %v1773, 2147483648
    %v1816 = vor.u32 1.1754944e-38, %v1815
    %v1817 = vsel %vm1814, %v1816, %v1812
    %v1818 = vmul.f32 1.0, %v1817
    %v1819 = vtanh.pop %v1761
    %v1820 = vmul.f32 %v1803, %v1530
    %v1821 = vmul.f32 %v1788, %v1819
    %v1822 = vadd.f32 %v1820, %v1821
    %v1823 = vtanh.pop %v1822
    %v1824 = vmul.f32 %v1818, %v1823
    %1825 = vmatpush.bf16.msra.mxu0 %v753
    %1826 = vmatpush.bf16.msra.mxu0 %v749
    %1827 = vmatpush.bf16.msra.mxu0 %v745
    %1828 = vmatpush.bf16.msra.mxu0 %v741
    %1829 = vmatpush.bf16.msra.mxu0 %v737
    %1830 = vmatpush.bf16.msra.mxu0 %v733
    %1831 = vmatpush.bf16.msra.mxu0 %v729
    %1832 = vmatpush.bf16.msra.mxu0 %v725
    %1833 = vmatmul.bf16.gmra.mxu0 %v1705
    %v1834 = vpop.f32.mrf.mxu0
    %v1835 = vadd.f32 %v621, %v1834
    %v1836 = vpop.f32.mrf.mxu0
    %1837 = vdwg.mxu0
    %1838 = vmatpush.bf16.msra.mxu0 %v754
    %1839 = vmatpush.bf16.msra.mxu0 %v750
    %1840 = vmatpush.bf16.msra.mxu0 %v746
    %1841 = vmatpush.bf16.msra.mxu0 %v742
    %1842 = vmatpush.bf16.msra.mxu0 %v738
    %1843 = vmatpush.bf16.msra.mxu0 %v734
    %1844 = vmatpush.bf16.msra.mxu0 %v730
    %1845 = vmatpush.bf16.msra.mxu0 %v726
    %1846 = vmatmul.bf16.gmra.mxu0 %v1705
    %v1847 = vpop.f32.mrf.mxu0
    %v1848 = vadd.f32 %v622, %v1847
    %v1849 = vpop.f32.mrf.mxu0
    %1850 = vdwg.mxu0
    %1851 = vmatpush.bf16.msra.mxu0 %v755
    %1852 = vmatpush.bf16.msra.mxu0 %v751
    %1853 = vmatpush.bf16.msra.mxu0 %v747
    %1854 = vmatpush.bf16.msra.mxu0 %v743
    %1855 = vmatpush.bf16.msra.mxu0 %v739
    %1856 = vmatpush.bf16.msra.mxu0 %v735
    %1857 = vmatpush.bf16.msra.mxu0 %v731
    %1858 = vmatpush.bf16.msra.mxu0 %v727
    %1859 = vmatmul.bf16.gmra.mxu0 %v1705
    %v1860 = vpop.f32.mrf.mxu0
    %v1861 = vadd.f32 %v623, %v1860
    %v1862 = vpop.f32.mrf.mxu0
    %1863 = vdwg.mxu0
    %1864 = vmatpush.bf16.msra.mxu0 %v756
    %1865 = vmatpush.bf16.msra.mxu0 %v752
    %1866 = vmatpush.bf16.msra.mxu0 %v748
    %1867 = vmatpush.bf16.msra.mxu0 %v744
    %1868 = vmatpush.bf16.msra.mxu0 %v740
    %1869 = vmatpush.bf16.msra.mxu0 %v736
    %1870 = vmatpush.bf16.msra.mxu0 %v732
    %1871 = vmatpush.bf16.msra.mxu0 %v728
    %1872 = vmatmul.bf16.gmra.mxu0 %v1705
    %v1873 = vpop.f32.mrf.mxu0
    %v1874 = vadd.f32 %v624, %v1873
    %v1875 = vpop.f32.mrf.mxu0
    %1876 = vdwg.mxu0
    %v1877 = vpack.c.bf16 %v1824, %v1824
    %1878 = vmatpush.bf16.msra.mxu0 %v966
    %1879 = vmatpush.bf16.msra.mxu0 %v962
    %1880 = vmatpush.bf16.msra.mxu0 %v958
    %1881 = vmatpush.bf16.msra.mxu0 %v954
    %1882 = vmatpush.bf16.msra.mxu0 %v950
    %1883 = vmatpush.bf16.msra.mxu0 %v946
    %1884 = vmatpush.bf16.msra.mxu0 %v942
    %1885 = vmatpush.bf16.msra.mxu0 %v938
    %1886 = vmatmul.bf16.gmra.mxu0 %v1877
    %v1887 = vpop.f32.mrf.mxu0
    %v1888 = vadd.f32 0.0, %v1887
    %v1889 = vpop.f32.mrf.mxu0
    %1890 = vdwg.mxu0
    %1891 = vmatpush.bf16.msra.mxu0 %v967
    %1892 = vmatpush.bf16.msra.mxu0 %v963
    %1893 = vmatpush.bf16.msra.mxu0 %v959
    %1894 = vmatpush.bf16.msra.mxu0 %v955
    %1895 = vmatpush.bf16.msra.mxu0 %v951
    %1896 = vmatpush.bf16.msra.mxu0 %v947
    %1897 = vmatpush.bf16.msra.mxu0 %v943
    %1898 = vmatpush.bf16.msra.mxu0 %v939
    %1899 = vmatmul.bf16.gmra.mxu0 %v1877
    %v1900 = vpop.f32.mrf.mxu0
    %v1901 = vadd.f32 0.0, %v1900
    %v1902 = vpop.f32.mrf.mxu0
    %1903 = vdwg.mxu0
    %1904 = vmatpush.bf16.msra.mxu0 %v968
    %1905 = vmatpush.bf16.msra.mxu0 %v964
    %1906 = vmatpush.bf16.msra.mxu0 %v960
    %1907 = vmatpush.bf16.msra.mxu0 %v956
    %1908 = vmatpush.bf16.msra.mxu0 %v952
    %1909 = vmatpush.bf16.msra.mxu0 %v948
    %1910 = vmatpush.bf16.msra.mxu0 %v944
    %1911 = vmatpush.bf16.msra.mxu0 %v940
    %1912 = vmatmul.bf16.gmra.mxu0 %v1877
    %v1913 = vpop.f32.mrf.mxu0
    %v1914 = vadd.f32 0.0, %v1913
    %v1915 = vpop.f32.mrf.mxu0
    %1916 = vdwg.mxu0
    %1917 = vmatpush.bf16.msra.mxu0 %v969
    %1918 = vmatpush.bf16.msra.mxu0 %v965
    %1919 = vmatpush.bf16.msra.mxu0 %v961
    %1920 = vmatpush.bf16.msra.mxu0 %v957
    %1921 = vmatpush.bf16.msra.mxu0 %v953
    %1922 = vmatpush.bf16.msra.mxu0 %v949
    %1923 = vmatpush.bf16.msra.mxu0 %v945
    %1924 = vmatpush.bf16.msra.mxu0 %v941
    %1925 = vmatmul.bf16.gmra.mxu0 %v1877
    %v1926 = vpop.f32.mrf.mxu0
    %v1927 = vadd.f32 0.0, %v1926
    %v1928 = vpop.f32.mrf.mxu0
    %1929 = vdwg.mxu0
    %v1930 = vadd.f32 %v1835, %v1888
    %v1931 = vadd.f32 %v1848, %v1901
    %v1932 = vadd.f32 %v1861, %v1914
    %v1933 = vadd.f32 %v1874, %v1927
    %v1934 = vxor.u32 %v1930, 2147483648
    %v1935 = vxor.u32 %v1931, 2147483648
    %v1936 = vxor.u32 %v1932, 2147483648
    %v1937 = vmul.f32 %v1934, 1.442695
    %v1938 = vpow.pop %v1937
    %v1939 = vmul.f32 %v1935, 1.442695
    %v1940 = vpow.pop %v1939
    %v1941 = vmul.f32 %v1936, 1.442695
    %v1942 = vpow.pop %v1941
    %v1943 = vadd.f32 %v1938, 1.0
    %v1944 = vadd.f32 %v1940, 1.0
    %v1945 = vadd.f32 %v1942, 1.0
    %v1946 = vrcp.pop %v1943
    %v1947 = vmul.f32 %v1943, %v1946
    %v1948 = vsub.f32 1.0, %v1947
    %v1949 = vmul.f32 %v1946, %v1948
    %v1950 = vadd.f32 %v1946, %v1949
    %vm1951 = vweird.f32 %v1943
    %vm1952 = vweird.f32 %v1946
    %vm1953 = vmor %vm1951, %vm1952
    %v1954 = vsel %vm1953, %v1946, %v1950
    %v1955 = vand.u32 2147483647, %v1943
    %vm1956 = vcmp.eq.f32.partialorder %v1955, 8.507059e+37
    %v1957 = vand.u32 %v1943, 2147483648
    %v1958 = vor.u32 1.1754944e-38, %v1957
    %v1959 = vsel %vm1956, %v1958, %v1954
    %v1960 = vmul.f32 1.0, %v1959
    %v1961 = vrcp.pop %v1944
    %v1962 = vmul.f32 %v1944, %v1961
    %v1963 = vsub.f32 1.0, %v1962
    %v1964 = vmul.f32 %v1961, %v1963
    %v1965 = vadd.f32 %v1961, %v1964
    %vm1966 = vweird.f32 %v1944
    %vm1967 = vweird.f32 %v1961
    %vm1968 = vmor %vm1966, %vm1967
    %v1969 = vsel %vm1968, %v1961, %v1965
    %v1970 = vand.u32 2147483647, %v1944
    %vm1971 = vcmp.eq.f32.partialorder %v1970, 8.507059e+37
    %v1972 = vand.u32 %v1944, 2147483648
    %v1973 = vor.u32 1.1754944e-38, %v1972
    %v1974 = vsel %vm1971, %v1973, %v1969
    %v1975 = vmul.f32 1.0, %v1974
    %v1976 = vrcp.pop %v1945
    %v1977 = vmul.f32 %v1945, %v1976
    %v1978 = vsub.f32 1.0, %v1977
    %v1979 = vmul.f32 %v1976, %v1978
    %v1980 = vadd.f32 %v1976, %v1979
    %vm1981 = vweird.f32 %v1945
    %vm1982 = vweird.f32 %v1976
    %vm1983 = vmor %vm1981, %vm1982
    %v1984 = vsel %vm1983, %v1976, %v1980
    %v1985 = vand.u32 2147483647, %v1945
    %vm1986 = vcmp.eq.f32.partialorder %v1985, 8.507059e+37
    %v1987 = vand.u32 %v1945, 2147483648
    %v1988 = vor.u32 1.1754944e-38, %v1987
    %v1989 = vsel %vm1986, %v1988, %v1984
    %v1990 = vmul.f32 1.0, %v1989
    %v1991 = vtanh.pop %v1933
    %v1992 = vmul.f32 %v1975, %v1702
    %v1993 = vmul.f32 %v1960, %v1991
    %v1994 = vadd.f32 %v1992, %v1993
    %v1995 = vtanh.pop %v1994
    %v1996 = vmul.f32 %v1990, %v1995
    %v1997 = vpack.c.bf16 %v1996, %v1996
    %1998 = vmatpush.bf16.msra.mxu0 %v465
    %1999 = vmatpush.bf16.msra.mxu0 %v461
    %2000 = vmatpush.bf16.msra.mxu0 %v457
    %2001 = vmatpush.bf16.msra.mxu0 %v453
    %2002 = vmatpush.bf16.msra.mxu0 %v449
    %2003 = vmatpush.bf16.msra.mxu0 %v445
    %2004 = vmatpush.bf16.msra.mxu0 %v441
    %2005 = vmatpush.bf16.msra.mxu0 %v437
    %2006 = vmatmul.bf16.gmra.mxu0 %v1877
    %v2007 = vpop.f32.mrf.mxu0
    %v2008 = vadd.f32 0.0, %v2007
    %v2009 = vpop.f32.mrf.mxu0
    %2010 = vdwg.mxu0
    %2011 = vmatpush.bf16.msra.mxu0 %v466
    %2012 = vmatpush.bf16.msra.mxu0 %v462
    %2013 = vmatpush.bf16.msra.mxu0 %v458
    %2014 = vmatpush.bf16.msra.mxu0 %v454
    %2015 = vmatpush.bf16.msra.mxu0 %v450
    %2016 = vmatpush.bf16.msra.mxu0 %v446
    %2017 = vmatpush.bf16.msra.mxu0 %v442
    %2018 = vmatpush.bf16.msra.mxu0 %v438
    %2019 = vmatmul.bf16.gmra.mxu0 %v1877
    %v2020 = vpop.f32.mrf.mxu0
    %v2021 = vadd.f32 0.0, %v2020
    %v2022 = vpop.f32.mrf.mxu0
    %2023 = vdwg.mxu0
    %2024 = vmatpush.bf16.msra.mxu0 %v467
    %2025 = vmatpush.bf16.msra.mxu0 %v463
    %2026 = vmatpush.bf16.msra.mxu0 %v459
    %2027 = vmatpush.bf16.msra.mxu0 %v455
    %2028 = vmatpush.bf16.msra.mxu0 %v451
    %2029 = vmatpush.bf16.msra.mxu0 %v447
    %2030 = vmatpush.bf16.msra.mxu0 %v443
    %2031 = vmatpush.bf16.msra.mxu0 %v439
    %2032 = vmatmul.bf16.gmra.mxu0 %v1877
    %v2033 = vpop.f32.mrf.mxu0
    %v2034 = vadd.f32 0.0, %v2033
    %v2035 = vpop.f32.mrf.mxu0
    %2036 = vdwg.mxu0
    %2037 = vmatpush.bf16.msra.mxu0 %v468
    %2038 = vmatpush.bf16.msra.mxu0 %v464
    %2039 = vmatpush.bf16.msra.mxu0 %v460
    %2040 = vmatpush.bf16.msra.mxu0 %v456
    %2041 = vmatpush.bf16.msra.mxu0 %v452
    %2042 = vmatpush.bf16.msra.mxu0 %v448
    %2043 = vmatpush.bf16.msra.mxu0 %v444
    %2044 = vmatpush.bf16.msra.mxu0 %v440
    %2045 = vmatmul.bf16.gmra.mxu0 %v1877
    %v2046 = vpop.f32.mrf.mxu0
    %v2047 = vadd.f32 0.0, %v2046
    %v2048 = vpop.f32.mrf.mxu0
    %2049 = vdwg.mxu0
    %v2050 = vadd.f32 %v301, %v2008
    %v2051 = vadd.f32 %v302, %v2021
    %v2052 = vadd.f32 %v303, %v2034
    %v2053 = vadd.f32 %v304, %v2047
    %v2054 = vxor.u32 %v2050, 2147483648
    %v2055 = vxor.u32 %v2051, 2147483648
    %v2056 = vxor.u32 %v2052, 2147483648
    %v2057 = vmul.f32 %v2054, 1.442695
    %v2058 = vpow.pop %v2057
    %v2059 = vmul.f32 %v2055, 1.442695
    %v2060 = vpow.pop %v2059
    %v2061 = vmul.f32 %v2056, 1.442695
    %v2062 = vpow.pop %v2061
    %v2063 = vadd.f32 %v2058, 1.0
    %v2064 = vadd.f32 %v2060, 1.0
    %v2065 = vadd.f32 %v2062, 1.0
    %v2066 = vrcp.pop %v2063
    %v2067 = vmul.f32 %v2063, %v2066
    %v2068 = vsub.f32 1.0, %v2067
    %v2069 = vmul.f32 %v2066, %v2068
    %v2070 = vadd.f32 %v2066, %v2069
    %vm2071 = vweird.f32 %v2063
    %vm2072 = vweird.f32 %v2066
    %vm2073 = vmor %vm2071, %vm2072
    %v2074 = vsel %vm2073, %v2066, %v2070
    %v2075 = vand.u32 2147483647, %v2063
    %vm2076 = vcmp.eq.f32.partialorder %v2075, 8.507059e+37
    %v2077 = vand.u32 %v2063, 2147483648
    %v2078 = vor.u32 1.1754944e-38, %v2077
    %v2079 = vsel %vm2076, %v2078, %v2074
    %v2080 = vmul.f32 1.0, %v2079
    %v2081 = vrcp.pop %v2064
    %v2082 = vmul.f32 %v2064, %v2081
    %v2083 = vsub.f32 1.0, %v2082
    %v2084 = vmul.f32 %v2081, %v2083
    %v2085 = vadd.f32 %v2081, %v2084
    %vm2086 = vweird.f32 %v2064
    %vm2087 = vweird.f32 %v2081
    %vm2088 = vmor %vm2086, %vm2087
    %v2089 = vsel %vm2088, %v2081, %v2085
    %v2090 = vand.u32 2147483647, %v2064
    %vm2091 = vcmp.eq.f32.partialorder %v2090, 8.507059e+37
    %v2092 = vand.u32 %v2064, 2147483648
    %v2093 = vor.u32 1.1754944e-38, %v2092
    %v2094 = vsel %vm2091, %v2093, %v2089
    %v2095 = vmul.f32 1.0, %v2094
    %v2096 = vrcp.pop %v2065
    %v2097 = vmul.f32 %v2065, %v2096
    %v2098 = vsub.f32 1.0, %v2097
    %v2099 = vmul.f32 %v2096, %v2098
    %v2100 = vadd.f32 %v2096, %v2099
    %vm2101 = vweird.f32 %v2065
    %vm2102 = vweird.f32 %v2096
    %vm2103 = vmor %vm2101, %vm2102
    %v2104 = vsel %vm2103, %v2096, %v2100
    %v2105 = vand.u32 2147483647, %v2065
    %vm2106 = vcmp.eq.f32.partialorder %v2105, 8.507059e+37
    %v2107 = vand.u32 %v2065, 2147483648
    %v2108 = vor.u32 1.1754944e-38, %v2107
    %v2109 = vsel %vm2106, %v2108, %v2104
    %v2110 = vmul.f32 1.0, %v2109
    %v2111 = vtanh.pop %v2053
    %v2112 = vmul.f32 %v2095, %v1822
    %v2113 = vmul.f32 %v2080, %v2111
    %v2114 = vadd.f32 %v2112, %v2113
    %v2115 = vtanh.pop %v2114
    %v2116 = vmul.f32 %v2110, %v2115
    %2117 = vmatpush.bf16.msra.mxu0 %v753
    %2118 = vmatpush.bf16.msra.mxu0 %v749
    %2119 = vmatpush.bf16.msra.mxu0 %v745
    %2120 = vmatpush.bf16.msra.mxu0 %v741
    %2121 = vmatpush.bf16.msra.mxu0 %v737
    %2122 = vmatpush.bf16.msra.mxu0 %v733
    %2123 = vmatpush.bf16.msra.mxu0 %v729
    %2124 = vmatpush.bf16.msra.mxu0 %v725
    %2125 = vmatmul.bf16.gmra.mxu0 %v1997
    %v2126 = vpop.f32.mrf.mxu0
    %v2127 = vadd.f32 %v621, %v2126
    %v2128 = vpop.f32.mrf.mxu0
    %2129 = vdwg.mxu0
    %2130 = vmatpush.bf16.msra.mxu0 %v754
    %2131 = vmatpush.bf16.msra.mxu0 %v750
    %2132 = vmatpush.bf16.msra.mxu0 %v746
    %2133 = vmatpush.bf16.msra.mxu0 %v742
    %2134 = vmatpush.bf16.msra.mxu0 %v738
    %2135 = vmatpush.bf16.msra.mxu0 %v734
    %2136 = vmatpush.bf16.msra.mxu0 %v730
    %2137 = vmatpush.bf16.msra.mxu0 %v726
    %2138 = vmatmul.bf16.gmra.mxu0 %v1997
    %v2139 = vpop.f32.mrf.mxu0
    %v2140 = vadd.f32 %v622, %v2139
    %v2141 = vpop.f32.mrf.mxu0
    %2142 = vdwg.mxu0
    %2143 = vmatpush.bf16.msra.mxu0 %v755
    %2144 = vmatpush.bf16.msra.mxu0 %v751
    %2145 = vmatpush.bf16.msra.mxu0 %v747
    %2146 = vmatpush.bf16.msra.mxu0 %v743
    %2147 = vmatpush.bf16.msra.mxu0 %v739
    %2148 = vmatpush.bf16.msra.mxu0 %v735
    %2149 = vmatpush.bf16.msra.mxu0 %v731
    %2150 = vmatpush.bf16.msra.mxu0 %v727
    %2151 = vmatmul.bf16.gmra.mxu0 %v1997
    %v2152 = vpop.f32.mrf.mxu0
    %v2153 = vadd.f32 %v623, %v2152
    %v2154 = vpop.f32.mrf.mxu0
    %2155 = vdwg.mxu0
    %2156 = vmatpush.bf16.msra.mxu0 %v756
    %2157 = vmatpush.bf16.msra.mxu0 %v752
    %2158 = vmatpush.bf16.msra.mxu0 %v748
    %2159 = vmatpush.bf16.msra.mxu0 %v744
    %2160 = vmatpush.bf16.msra.mxu0 %v740
    %2161 = vmatpush.bf16.msra.mxu0 %v736
    %2162 = vmatpush.bf16.msra.mxu0 %v732
    %2163 = vmatpush.bf16.msra.mxu0 %v728
    %2164 = vmatmul.bf16.gmra.mxu0 %v1997
    %v2165 = vpop.f32.mrf.mxu0
    %v2166 = vadd.f32 %v624, %v2165
    %v2167 = vpop.f32.mrf.mxu0
    %2168 = vdwg.mxu0
    %v2169 = vpack.c.bf16 %v2116, %v2116
    %2170 = vmatpush.bf16.msra.mxu0 %v966
    %2171 = vmatpush.bf16.msra.mxu0 %v962
    %2172 = vmatpush.bf16.msra.mxu0 %v958
    %2173 = vmatpush.bf16.msra.mxu0 %v954
    %2174 = vmatpush.bf16.msra.mxu0 %v950
    %2175 = vmatpush.bf16.msra.mxu0 %v946
    %2176 = vmatpush.bf16.msra.mxu0 %v942
    %2177 = vmatpush.bf16.msra.mxu0 %v938
    %2178 = vmatmul.bf16.gmra.mxu0 %v2169
    %v2179 = vpop.f32.mrf.mxu0
    %v2180 = vadd.f32 0.0, %v2179
    %v2181 = vpop.f32.mrf.mxu0
    %2182 = vdwg.mxu0
    %2183 = vmatpush.bf16.msra.mxu0 %v967
    %2184 = vmatpush.bf16.msra.mxu0 %v963
    %2185 = vmatpush.bf16.msra.mxu0 %v959
    %2186 = vmatpush.bf16.msra.mxu0 %v955
    %2187 = vmatpush.bf16.msra.mxu0 %v951
    %2188 = vmatpush.bf16.msra.mxu0 %v947
    %2189 = vmatpush.bf16.msra.mxu0 %v943
    %2190 = vmatpush.bf16.msra.mxu0 %v939
    %2191 = vmatmul.bf16.gmra.mxu0 %v2169
    %v2192 = vpop.f32.mrf.mxu0
    %v2193 = vadd.f32 0.0, %v2192
    %v2194 = vpop.f32.mrf.mxu0
    %2195 = vdwg.mxu0
    %2196 = vmatpush.bf16.msra.mxu0 %v968
    %2197 = vmatpush.bf16.msra.mxu0 %v964
    %2198 = vmatpush.bf16.msra.mxu0 %v960
    %2199 = vmatpush.bf16.msra.mxu0 %v956
    %2200 = vmatpush.bf16.msra.mxu0 %v952
    %2201 = vmatpush.bf16.msra.mxu0 %v948
    %2202 = vmatpush.bf16.msra.mxu0 %v944
    %2203 = vmatpush.bf16.msra.mxu0 %v940
    %2204 = vmatmul.bf16.gmra.mxu0 %v2169
    %v2205 = vpop.f32.mrf.mxu0
    %v2206 = vadd.f32 0.0, %v2205
    %v2207 = vpop.f32.mrf.mxu0
    %2208 = vdwg.mxu0
    %2209 = vmatpush.bf16.msra.mxu0 %v969
    %2210 = vmatpush.bf16.msra.mxu0 %v965
    %2211 = vmatpush.bf16.msra.mxu0 %v961
    %2212 = vmatpush.bf16.msra.mxu0 %v957
    %2213 = vmatpush.bf16.msra.mxu0 %v953
    %2214 = vmatpush.bf16.msra.mxu0 %v949
    %2215 = vmatpush.bf16.msra.mxu0 %v945
    %2216 = vmatpush.bf16.msra.mxu0 %v941
    %2217 = vmatmul.bf16.gmra.mxu0 %v2169
    %v2218 = vpop.f32.mrf.mxu0
    %v2219 = vadd.f32 0.0, %v2218
    %v2220 = vpop.f32.mrf.mxu0
    %2221 = vdwg.mxu0
    %v2222 = vadd.f32 %v2127, %v2180
    %v2223 = vadd.f32 %v2140, %v2193
    %v2224 = vadd.f32 %v2153, %v2206
    %v2225 = vadd.f32 %v2166, %v2219
    %v2226 = vxor.u32 %v2222, 2147483648
    %v2227 = vxor.u32 %v2223, 2147483648
    %v2228 = vxor.u32 %v2224, 2147483648
    %v2229 = vmul.f32 %v2226, 1.442695
    %v2230 = vpow.pop %v2229
    %v2231 = vmul.f32 %v2227, 1.442695
    %v2232 = vpow.pop %v2231
    %v2233 = vmul.f32 %v2228, 1.442695
    %v2234 = vpow.pop %v2233
    %v2235 = vadd.f32 %v2230, 1.0
    %v2236 = vadd.f32 %v2232, 1.0
    %v2237 = vadd.f32 %v2234, 1.0
    %v2238 = vrcp.pop %v2235
    %v2239 = vmul.f32 %v2235, %v2238
    %v2240 = vsub.f32 1.0, %v2239
    %v2241 = vmul.f32 %v2238, %v2240
    %v2242 = vadd.f32 %v2238, %v2241
    %vm2243 = vweird.f32 %v2235
    %vm2244 = vweird.f32 %v2238
    %vm2245 = vmor %vm2243, %vm2244
    %v2246 = vsel %vm2245, %v2238, %v2242
    %v2247 = vand.u32 2147483647, %v2235
    %vm2248 = vcmp.eq.f32.partialorder %v2247, 8.507059e+37
    %v2249 = vand.u32 %v2235, 2147483648
    %v2250 = vor.u32 1.1754944e-38, %v2249
    %v2251 = vsel %vm2248, %v2250, %v2246
    %v2252 = vmul.f32 1.0, %v2251
    %v2253 = vrcp.pop %v2236
    %v2254 = vmul.f32 %v2236, %v2253
    %v2255 = vsub.f32 1.0, %v2254
    %v2256 = vmul.f32 %v2253, %v2255
    %v2257 = vadd.f32 %v2253, %v2256
    %vm2258 = vweird.f32 %v2236
    %vm2259 = vweird.f32 %v2253
    %vm2260 = vmor %vm2258, %vm2259
    %v2261 = vsel %vm2260, %v2253, %v2257
    %v2262 = vand.u32 2147483647, %v2236
    %vm2263 = vcmp.eq.f32.partialorder %v2262, 8.507059e+37
    %v2264 = vand.u32 %v2236, 2147483648
    %v2265 = vor.u32 1.1754944e-38, %v2264
    %v2266 = vsel %vm2263, %v2265, %v2261
    %v2267 = vmul.f32 1.0, %v2266
    %v2268 = vrcp.pop %v2237
    %v2269 = vmul.f32 %v2237, %v2268
    %v2270 = vsub.f32 1.0, %v2269
    %v2271 = vmul.f32 %v2268, %v2270
    %v2272 = vadd.f32 %v2268, %v2271
    %vm2273 = vweird.f32 %v2237
    %vm2274 = vweird.f32 %v2268
    %vm2275 = vmor %vm2273, %vm2274
    %v2276 = vsel %vm2275, %v2268, %v2272
    %v2277 = vand.u32 2147483647, %v2237
    %vm2278 = vcmp.eq.f32.partialorder %v2277, 8.507059e+37
    %v2279 = vand.u32 %v2237, 2147483648
    %v2280 = vor.u32 1.1754944e-38, %v2279
    %v2281 = vsel %vm2278, %v2280, %v2276
    %v2282 = vmul.f32 1.0, %v2281
    %v2283 = vtanh.pop %v2225
    %v2284 = vmul.f32 %v2267, %v1994
    %v2285 = vmul.f32 %v2252, %v2283
    %v2286 = vadd.f32 %v2284, %v2285
    %v2287 = vtanh.pop %v2286
    %v2288 = vmul.f32 %v2282, %v2287
    %v2289 = vpack.c.bf16 %v2288, %v2288
    %2290 = vmatpush.bf16.msra.mxu0 %v465
    %2291 = vmatpush.bf16.msra.mxu0 %v461
    %2292 = vmatpush.bf16.msra.mxu0 %v457
    %2293 = vmatpush.bf16.msra.mxu0 %v453
    %2294 = vmatpush.bf16.msra.mxu0 %v449
    %2295 = vmatpush.bf16.msra.mxu0 %v445
    %2296 = vmatpush.bf16.msra.mxu0 %v441
    %2297 = vmatpush.bf16.msra.mxu0 %v437
    %2298 = vmatmul.bf16.gmra.mxu0 %v2169
    %v2299 = vpop.f32.mrf.mxu0
    %v2300 = vadd.f32 0.0, %v2299
    %v2301 = vpop.f32.mrf.mxu0
    %2302 = vdwg.mxu0
    %2303 = vmatpush.bf16.msra.mxu0 %v466
    %2304 = vmatpush.bf16.msra.mxu0 %v462
    %2305 = vmatpush.bf16.msra.mxu0 %v458
    %2306 = vmatpush.bf16.msra.mxu0 %v454
    %2307 = vmatpush.bf16.msra.mxu0 %v450
    %2308 = vmatpush.bf16.msra.mxu0 %v446
    %2309 = vmatpush.bf16.msra.mxu0 %v442
    %2310 = vmatpush.bf16.msra.mxu0 %v438
    %2311 = vmatmul.bf16.gmra.mxu0 %v2169
    %v2312 = vpop.f32.mrf.mxu0
    %v2313 = vadd.f32 0.0, %v2312
    %v2314 = vpop.f32.mrf.mxu0
    %2315 = vdwg.mxu0
    %2316 = vmatpush.bf16.msra.mxu0 %v467
    %2317 = vmatpush.bf16.msra.mxu0 %v463
    %2318 = vmatpush.bf16.msra.mxu0 %v459
    %2319 = vmatpush.bf16.msra.mxu0 %v455
    %2320 = vmatpush.bf16.msra.mxu0 %v451
    %2321 = vmatpush.bf16.msra.mxu0 %v447
    %2322 = vmatpush.bf16.msra.mxu0 %v443
    %2323 = vmatpush.bf16.msra.mxu0 %v439
    %2324 = vmatmul.bf16.gmra.mxu0 %v2169
    %v2325 = vpop.f32.mrf.mxu0
    %v2326 = vadd.f32 0.0, %v2325
    %v2327 = vpop.f32.mrf.mxu0
    %2328 = vdwg.mxu0
    %2329 = vmatpush.bf16.msra.mxu0 %v468
    %2330 = vmatpush.bf16.msra.mxu0 %v464
    %2331 = vmatpush.bf16.msra.mxu0 %v460
    %2332 = vmatpush.bf16.msra.mxu0 %v456
    %2333 = vmatpush.bf16.msra.mxu0 %v452
    %2334 = vmatpush.bf16.msra.mxu0 %v448
    %2335 = vmatpush.bf16.msra.mxu0 %v444
    %2336 = vmatpush.bf16.msra.mxu0 %v440
    %2337 = vmatmul.bf16.gmra.mxu0 %v2169
    %v2338 = vpop.f32.mrf.mxu0
    %v2339 = vadd.f32 0.0, %v2338
    %v2340 = vpop.f32.mrf.mxu0
    %2341 = vdwg.mxu0
    %v2342 = vadd.f32 %v313, %v2300
    %v2343 = vadd.f32 %v314, %v2313
    %v2344 = vadd.f32 %v315, %v2326
    %v2345 = vadd.f32 %v316, %v2339
    %v2346 = vxor.u32 %v2342, 2147483648
    %v2347 = vxor.u32 %v2343, 2147483648
    %v2348 = vxor.u32 %v2344, 2147483648
    %v2349 = vmul.f32 %v2346, 1.442695
    %v2350 = vpow.pop %v2349
    %v2351 = vmul.f32 %v2347, 1.442695
    %v2352 = vpow.pop %v2351
    %v2353 = vmul.f32 %v2348, 1.442695
    %v2354 = vpow.pop %v2353
    %v2355 = vadd.f32 %v2350, 1.0
    %v2356 = vadd.f32 %v2352, 1.0
    %v2357 = vadd.f32 %v2354, 1.0
    %v2358 = vrcp.pop %v2355
    %v2359 = vmul.f32 %v2355, %v2358
    %v2360 = vsub.f32 1.0, %v2359
    %v2361 = vmul.f32 %v2358, %v2360
    %v2362 = vadd.f32 %v2358, %v2361
    %vm2363 = vweird.f32 %v2355
    %vm2364 = vweird.f32 %v2358
    %vm2365 = vmor %vm2363, %vm2364
    %v2366 = vsel %vm2365, %v2358, %v2362
    %v2367 = vand.u32 2147483647, %v2355
    %vm2368 = vcmp.eq.f32.partialorder %v2367, 8.507059e+37
    %v2369 = vand.u32 %v2355, 2147483648
    %v2370 = vor.u32 1.1754944e-38, %v2369
    %v2371 = vsel %vm2368, %v2370, %v2366
    %v2372 = vmul.f32 1.0, %v2371
    %v2373 = vrcp.pop %v2356
    %v2374 = vmul.f32 %v2356, %v2373
    %v2375 = vsub.f32 1.0, %v2374
    %v2376 = vmul.f32 %v2373, %v2375
    %v2377 = vadd.f32 %v2373, %v2376
    %vm2378 = vweird.f32 %v2356
    %vm2379 = vweird.f32 %v2373
    %vm2380 = vmor %vm2378, %vm2379
    %v2381 = vsel %vm2380, %v2373, %v2377
    %v2382 = vand.u32 2147483647, %v2356
    %vm2383 = vcmp.eq.f32.partialorder %v2382, 8.507059e+37
    %v2384 = vand.u32 %v2356, 2147483648
    %v2385 = vor.u32 1.1754944e-38, %v2384
    %v2386 = vsel %vm2383, %v2385, %v2381
    %v2387 = vmul.f32 1.0, %v2386
    %v2388 = vrcp.pop %v2357
    %v2389 = vmul.f32 %v2357, %v2388
    %v2390 = vsub.f32 1.0, %v2389
    %v2391 = vmul.f32 %v2388, %v2390
    %v2392 = vadd.f32 %v2388, %v2391
    %vm2393 = vweird.f32 %v2357
    %vm2394 = vweird.f32 %v2388
    %vm2395 = vmor %vm2393, %vm2394
    %v2396 = vsel %vm2395, %v2388, %v2392
    %v2397 = vand.u32 2147483647, %v2357
    %vm2398 = vcmp.eq.f32.partialorder %v2397, 8.507059e+37
    %v2399 = vand.u32 %v2357, 2147483648
    %v2400 = vor.u32 1.1754944e-38, %v2399
    %v2401 = vsel %vm2398, %v2400, %v2396
    %v2402 = vmul.f32 1.0, %v2401
    %v2403 = vtanh.pop %v2345
    %v2404 = vmul.f32 %v2387, %v2114
    %v2405 = vmul.f32 %v2372, %v2403
    %v2406 = vadd.f32 %v2404, %v2405
    %v2407 = vtanh.pop %v2406
    %v2408 = vmul.f32 %v2402, %v2407
    %2409 = vmatpush.bf16.msra.mxu0 %v753
    %2410 = vmatpush.bf16.msra.mxu0 %v749
    %2411 = vmatpush.bf16.msra.mxu0 %v745
    %2412 = vmatpush.bf16.msra.mxu0 %v741
    %2413 = vmatpush.bf16.msra.mxu0 %v737
    %2414 = vmatpush.bf16.msra.mxu0 %v733
    %2415 = vmatpush.bf16.msra.mxu0 %v729
    %2416 = vmatpush.bf16.msra.mxu0 %v725
    %2417 = vmatmul.bf16.gmra.mxu0 %v2289
    %v2418 = vpop.f32.mrf.mxu0
    %v2419 = vadd.f32 %v621, %v2418
    %v2420 = vpop.f32.mrf.mxu0
    %2421 = vdwg.mxu0
    %2422 = vmatpush.bf16.msra.mxu0 %v754
    %2423 = vmatpush.bf16.msra.mxu0 %v750
    %2424 = vmatpush.bf16.msra.mxu0 %v746
    %2425 = vmatpush.bf16.msra.mxu0 %v742
    %2426 = vmatpush.bf16.msra.mxu0 %v738
    %2427 = vmatpush.bf16.msra.mxu0 %v734
    %2428 = vmatpush.bf16.msra.mxu0 %v730
    %2429 = vmatpush.bf16.msra.mxu0 %v726
    %2430 = vmatmul.bf16.gmra.mxu0 %v2289
    %v2431 = vpop.f32.mrf.mxu0
    %v2432 = vadd.f32 %v622, %v2431
    %v2433 = vpop.f32.mrf.mxu0
    %2434 = vdwg.mxu0
    %2435 = vmatpush.bf16.msra.mxu0 %v755
    %2436 = vmatpush.bf16.msra.mxu0 %v751
    %2437 = vmatpush.bf16.msra.mxu0 %v747
    %2438 = vmatpush.bf16.msra.mxu0 %v743
    %2439 = vmatpush.bf16.msra.mxu0 %v739
    %2440 = vmatpush.bf16.msra.mxu0 %v735
    %2441 = vmatpush.bf16.msra.mxu0 %v731
    %2442 = vmatpush.bf16.msra.mxu0 %v727
    %2443 = vmatmul.bf16.gmra.mxu0 %v2289
    %v2444 = vpop.f32.mrf.mxu0
    %v2445 = vadd.f32 %v623, %v2444
    %v2446 = vpop.f32.mrf.mxu0
    %2447 = vdwg.mxu0
    %2448 = vmatpush.bf16.msra.mxu0 %v756
    %2449 = vmatpush.bf16.msra.mxu0 %v752
    %2450 = vmatpush.bf16.msra.mxu0 %v748
    %2451 = vmatpush.bf16.msra.mxu0 %v744
    %2452 = vmatpush.bf16.msra.mxu0 %v740
    %2453 = vmatpush.bf16.msra.mxu0 %v736
    %2454 = vmatpush.bf16.msra.mxu0 %v732
    %2455 = vmatpush.bf16.msra.mxu0 %v728
    %2456 = vmatmul.bf16.gmra.mxu0 %v2289
    %v2457 = vpop.f32.mrf.mxu0
    %v2458 = vadd.f32 %v624, %v2457
    %v2459 = vpop.f32.mrf.mxu0
    %2460 = vdwg.mxu0
    %v2461 = vpack.c.bf16 %v2408, %v2408
    %2462 = vmatpush.bf16.msra.mxu0 %v966
    %2463 = vmatpush.bf16.msra.mxu0 %v962
    %2464 = vmatpush.bf16.msra.mxu0 %v958
    %2465 = vmatpush.bf16.msra.mxu0 %v954
    %2466 = vmatpush.bf16.msra.mxu0 %v950
    %2467 = vmatpush.bf16.msra.mxu0 %v946
    %2468 = vmatpush.bf16.msra.mxu0 %v942
    %2469 = vmatpush.bf16.msra.mxu0 %v938
    %2470 = vmatmul.bf16.gmra.mxu0 %v2461
    %v2471 = vpop.f32.mrf.mxu0
    %v2472 = vadd.f32 0.0, %v2471
    %v2473 = vpop.f32.mrf.mxu0
    %2474 = vdwg.mxu0
    %2475 = vmatpush.bf16.msra.mxu0 %v967
    %2476 = vmatpush.bf16.msra.mxu0 %v963
    %2477 = vmatpush.bf16.msra.mxu0 %v959
    %2478 = vmatpush.bf16.msra.mxu0 %v955
    %2479 = vmatpush.bf16.msra.mxu0 %v951
    %2480 = vmatpush.bf16.msra.mxu0 %v947
    %2481 = vmatpush.bf16.msra.mxu0 %v943
    %2482 = vmatpush.bf16.msra.mxu0 %v939
    %2483 = vmatmul.bf16.gmra.mxu0 %v2461
    %v2484 = vpop.f32.mrf.mxu0
    %v2485 = vadd.f32 0.0, %v2484
    %v2486 = vpop.f32.mrf.mxu0
    %2487 = vdwg.mxu0
    %2488 = vmatpush.bf16.msra.mxu0 %v968
    %2489 = vmatpush.bf16.msra.mxu0 %v964
    %2490 = vmatpush.bf16.msra.mxu0 %v960
    %2491 = vmatpush.bf16.msra.mxu0 %v956
    %2492 = vmatpush.bf16.msra.mxu0 %v952
    %2493 = vmatpush.bf16.msra.mxu0 %v948
    %2494 = vmatpush.bf16.msra.mxu0 %v944
    %2495 = vmatpush.bf16.msra.mxu0 %v940
    %2496 = vmatmul.bf16.gmra.mxu0 %v2461
    %v2497 = vpop.f32.mrf.mxu0
    %v2498 = vadd.f32 0.0, %v2497
    %v2499 = vpop.f32.mrf.mxu0
    %2500 = vdwg.mxu0
    %2501 = vmatpush.bf16.msra.mxu0 %v969
    %2502 = vmatpush.bf16.msra.mxu0 %v965
    %2503 = vmatpush.bf16.msra.mxu0 %v961
    %2504 = vmatpush.bf16.msra.mxu0 %v957
    %2505 = vmatpush.bf16.msra.mxu0 %v953
    %2506 = vmatpush.bf16.msra.mxu0 %v949
    %2507 = vmatpush.bf16.msra.mxu0 %v945
    %2508 = vmatpush.bf16.msra.mxu0 %v941
    %2509 = vmatmul.bf16.gmra.mxu0 %v2461
    %v2510 = vpop.f32.mrf.mxu0
    %v2511 = vadd.f32 0.0, %v2510
    %v2512 = vpop.f32.mrf.mxu0
    %2513 = vdwg.mxu0
    %v2514 = vadd.f32 %v2419, %v2472
    %v2515 = vadd.f32 %v2432, %v2485
    %v2516 = vadd.f32 %v2445, %v2498
    %v2517 = vadd.f32 %v2458, %v2511
    %v2518 = vxor.u32 %v2514, 2147483648
    %v2519 = vxor.u32 %v2515, 2147483648
    %v2520 = vxor.u32 %v2516, 2147483648
    %v2521 = vmul.f32 %v2518, 1.442695
    %v2522 = vpow.pop %v2521
    %v2523 = vmul.f32 %v2519, 1.442695
    %v2524 = vpow.pop %v2523
    %v2525 = vmul.f32 %v2520, 1.442695
    %v2526 = vpow.pop %v2525
    %v2527 = vadd.f32 %v2522, 1.0
    %v2528 = vadd.f32 %v2524, 1.0
    %v2529 = vadd.f32 %v2526, 1.0
    %v2530 = vrcp.pop %v2527
    %v2531 = vmul.f32 %v2527, %v2530
    %v2532 = vsub.f32 1.0, %v2531
    %v2533 = vmul.f32 %v2530, %v2532
    %v2534 = vadd.f32 %v2530, %v2533
    %vm2535 = vweird.f32 %v2527
    %vm2536 = vweird.f32 %v2530
    %vm2537 = vmor %vm2535, %vm2536
    %v2538 = vsel %vm2537, %v2530, %v2534
    %v2539 = vand.u32 2147483647, %v2527
    %vm2540 = vcmp.eq.f32.partialorder %v2539, 8.507059e+37
    %v2541 = vand.u32 %v2527, 2147483648
    %v2542 = vor.u32 1.1754944e-38, %v2541
    %v2543 = vsel %vm2540, %v2542, %v2538
    %v2544 = vmul.f32 1.0, %v2543
    %v2545 = vrcp.pop %v2528
    %v2546 = vmul.f32 %v2528, %v2545
    %v2547 = vsub.f32 1.0, %v2546
    %v2548 = vmul.f32 %v2545, %v2547
    %v2549 = vadd.f32 %v2545, %v2548
    %vm2550 = vweird.f32 %v2528
    %vm2551 = vweird.f32 %v2545
    %vm2552 = vmor %vm2550, %vm2551
    %v2553 = vsel %vm2552, %v2545, %v2549
    %v2554 = vand.u32 2147483647, %v2528
    %vm2555 = vcmp.eq.f32.partialorder %v2554, 8.507059e+37
    %v2556 = vand.u32 %v2528, 2147483648
    %v2557 = vor.u32 1.1754944e-38, %v2556
    %v2558 = vsel %vm2555, %v2557, %v2553
    %v2559 = vmul.f32 1.0, %v2558
    %v2560 = vrcp.pop %v2529
    %v2561 = vmul.f32 %v2529, %v2560
    %v2562 = vsub.f32 1.0, %v2561
    %v2563 = vmul.f32 %v2560, %v2562
    %v2564 = vadd.f32 %v2560, %v2563
    %vm2565 = vweird.f32 %v2529
    %vm2566 = vweird.f32 %v2560
    %vm2567 = vmor %vm2565, %vm2566
    %v2568 = vsel %vm2567, %v2560, %v2564
    %v2569 = vand.u32 2147483647, %v2529
    %vm2570 = vcmp.eq.f32.partialorder %v2569, 8.507059e+37
    %v2571 = vand.u32 %v2529, 2147483648
    %v2572 = vor.u32 1.1754944e-38, %v2571
    %v2573 = vsel %vm2570, %v2572, %v2568
    %v2574 = vmul.f32 1.0, %v2573
    %v2575 = vtanh.pop %v2517
    %v2576 = vmul.f32 %v2559, %v2286
    %v2577 = vmul.f32 %v2544, %v2575
    %v2578 = vadd.f32 %v2576, %v2577
    %v2579 = vtanh.pop %v2578
    %v2580 = vmul.f32 %v2574, %v2579
    %v2581 = vpack.c.bf16 %v2580, %v2580
    %2582 = vmatpush.bf16.msra.mxu0 %v465
    %2583 = vmatpush.bf16.msra.mxu0 %v461
    %2584 = vmatpush.bf16.msra.mxu0 %v457
    %2585 = vmatpush.bf16.msra.mxu0 %v453
    %2586 = vmatpush.bf16.msra.mxu0 %v449
    %2587 = vmatpush.bf16.msra.mxu0 %v445
    %2588 = vmatpush.bf16.msra.mxu0 %v441
    %2589 = vmatpush.bf16.msra.mxu0 %v437
    %2590 = vmatmul.bf16.gmra.mxu0 %v2461
    %v2591 = vpop.f32.mrf.mxu0
    %v2592 = vadd.f32 0.0, %v2591
    %v2593 = vpop.f32.mrf.mxu0
    %2594 = vdwg.mxu0
    %2595 = vmatpush.bf16.msra.mxu0 %v466
    %2596 = vmatpush.bf16.msra.mxu0 %v462
    %2597 = vmatpush.bf16.msra.mxu0 %v458
    %2598 = vmatpush.bf16.msra.mxu0 %v454
    %2599 = vmatpush.bf16.msra.mxu0 %v450
    %2600 = vmatpush.bf16.msra.mxu0 %v446
    %2601 = vmatpush.bf16.msra.mxu0 %v442
    %2602 = vmatpush.bf16.msra.mxu0 %v438
    %2603 = vmatmul.bf16.gmra.mxu0 %v2461
    %v2604 = vpop.f32.mrf.mxu0
    %v2605 = vadd.f32 0.0, %v2604
    %v2606 = vpop.f32.mrf.mxu0
    %2607 = vdwg.mxu0
    %2608 = vmatpush.bf16.msra.mxu0 %v467
    %2609 = vmatpush.bf16.msra.mxu0 %v463
    %2610 = vmatpush.bf16.msra.mxu0 %v459
    %2611 = vmatpush.bf16.msra.mxu0 %v455
    %2612 = vmatpush.bf16.msra.mxu0 %v451
    %2613 = vmatpush.bf16.msra.mxu0 %v447
    %2614 = vmatpush.bf16.msra.mxu0 %v443
    %2615 = vmatpush.bf16.msra.mxu0 %v439
    %2616 = vmatmul.bf16.gmra.mxu0 %v2461
    %v2617 = vpop.f32.mrf.mxu0
    %v2618 = vadd.f32 0.0, %v2617
    %v2619 = vpop.f32.mrf.mxu0
    %2620 = vdwg.mxu0
    %2621 = vmatpush.bf16.msra.mxu0 %v468
    %2622 = vmatpush.bf16.msra.mxu0 %v464
    %2623 = vmatpush.bf16.msra.mxu0 %v460
    %2624 = vmatpush.bf16.msra.mxu0 %v456
    %2625 = vmatpush.bf16.msra.mxu0 %v452
    %2626 = vmatpush.bf16.msra.mxu0 %v448
    %2627 = vmatpush.bf16.msra.mxu0 %v444
    %2628 = vmatpush.bf16.msra.mxu0 %v440
    %2629 = vmatmul.bf16.gmra.mxu0 %v2461
    %v2630 = vpop.f32.mrf.mxu0
    %v2631 = vadd.f32 0.0, %v2630
    %v2632 = vpop.f32.mrf.mxu0
    %2633 = vdwg.mxu0
    %v2634 = vadd.f32 %v325, %v2592
    %v2635 = vadd.f32 %v326, %v2605
    %v2636 = vadd.f32 %v327, %v2618
    %v2637 = vadd.f32 %v328, %v2631
    %v2638 = vxor.u32 %v2634, 2147483648
    %v2639 = vxor.u32 %v2635, 2147483648
    %v2640 = vxor.u32 %v2636, 2147483648
    %v2641 = vmul.f32 %v2638, 1.442695
    %v2642 = vpow.pop %v2641
    %v2643 = vmul.f32 %v2639, 1.442695
    %v2644 = vpow.pop %v2643
    %v2645 = vmul.f32 %v2640, 1.442695
    %v2646 = vpow.pop %v2645
    %v2647 = vadd.f32 %v2642, 1.0
    %v2648 = vadd.f32 %v2644, 1.0
    %v2649 = vadd.f32 %v2646, 1.0
    %v2650 = vrcp.pop %v2647
    %v2651 = vmul.f32 %v2647, %v2650
    %v2652 = vsub.f32 1.0, %v2651
    %v2653 = vmul.f32 %v2650, %v2652
    %v2654 = vadd.f32 %v2650, %v2653
    %vm2655 = vweird.f32 %v2647
    %vm2656 = vweird.f32 %v2650
    %vm2657 = vmor %vm2655, %vm2656
    %v2658 = vsel %vm2657, %v2650, %v2654
    %v2659 = vand.u32 2147483647, %v2647
    %vm2660 = vcmp.eq.f32.partialorder %v2659, 8.507059e+37
    %v2661 = vand.u32 %v2647, 2147483648
    %v2662 = vor.u32 1.1754944e-38, %v2661
    %v2663 = vsel %vm2660, %v2662, %v2658
    %v2664 = vmul.f32 1.0, %v2663
    %v2665 = vrcp.pop %v2648
    %v2666 = vmul.f32 %v2648, %v2665
    %v2667 = vsub.f32 1.0, %v2666
    %v2668 = vmul.f32 %v2665, %v2667
    %v2669 = vadd.f32 %v2665, %v2668
    %vm2670 = vweird.f32 %v2648
    %vm2671 = vweird.f32 %v2665
    %vm2672 = vmor %vm2670, %vm2671
    %v2673 = vsel %vm2672, %v2665, %v2669
    %v2674 = vand.u32 2147483647, %v2648
    %vm2675 = vcmp.eq.f32.partialorder %v2674, 8.507059e+37
    %v2676 = vand.u32 %v2648, 2147483648
    %v2677 = vor.u32 1.1754944e-38, %v2676
    %v2678 = vsel %vm2675, %v2677, %v2673
    %v2679 = vmul.f32 1.0, %v2678
    %v2680 = vrcp.pop %v2649
    %v2681 = vmul.f32 %v2649, %v2680
    %v2682 = vsub.f32 1.0, %v2681
    %v2683 = vmul.f32 %v2680, %v2682
    %v2684 = vadd.f32 %v2680, %v2683
    %vm2685 = vweird.f32 %v2649
    %vm2686 = vweird.f32 %v2680
    %vm2687 = vmor %vm2685, %vm2686
    %v2688 = vsel %vm2687, %v2680, %v2684
    %v2689 = vand.u32 2147483647, %v2649
    %vm2690 = vcmp.eq.f32.partialorder %v2689, 8.507059e+37
    %v2691 = vand.u32 %v2649, 2147483648
    %v2692 = vor.u32 1.1754944e-38, %v2691
    %v2693 = vsel %vm2690, %v2692, %v2688
    %v2694 = vmul.f32 1.0, %v2693
    %v2695 = vtanh.pop %v2637
    %v2696 = vmul.f32 %v2679, %v2406
    %v2697 = vmul.f32 %v2664, %v2695
    %v2698 = vadd.f32 %v2696, %v2697
    %v2699 = vtanh.pop %v2698
    %v2700 = vmul.f32 %v2694, %v2699
    %2701 = vmatpush.bf16.msra.mxu0 %v753
    %2702 = vmatpush.bf16.msra.mxu0 %v749
    %2703 = vmatpush.bf16.msra.mxu0 %v745
    %2704 = vmatpush.bf16.msra.mxu0 %v741
    %2705 = vmatpush.bf16.msra.mxu0 %v737
    %2706 = vmatpush.bf16.msra.mxu0 %v733
    %2707 = vmatpush.bf16.msra.mxu0 %v729
    %2708 = vmatpush.bf16.msra.mxu0 %v725
    %2709 = vmatmul.bf16.gmra.mxu0 %v2581
    %v2710 = vpop.f32.mrf.mxu0
    %v2711 = vadd.f32 %v621, %v2710
    %v2712 = vpop.f32.mrf.mxu0
    %2713 = vdwg.mxu0
    %2714 = vmatpush.bf16.msra.mxu0 %v754
    %2715 = vmatpush.bf16.msra.mxu0 %v750
    %2716 = vmatpush.bf16.msra.mxu0 %v746
    %2717 = vmatpush.bf16.msra.mxu0 %v742
    %2718 = vmatpush.bf16.msra.mxu0 %v738
    %2719 = vmatpush.bf16.msra.mxu0 %v734
    %2720 = vmatpush.bf16.msra.mxu0 %v730
    %2721 = vmatpush.bf16.msra.mxu0 %v726
    %2722 = vmatmul.bf16.gmra.mxu0 %v2581
    %v2723 = vpop.f32.mrf.mxu0
    %v2724 = vadd.f32 %v622, %v2723
    %v2725 = vpop.f32.mrf.mxu0
    %2726 = vdwg.mxu0
    %2727 = vmatpush.bf16.msra.mxu0 %v755
    %2728 = vmatpush.bf16.msra.mxu0 %v751
    %2729 = vmatpush.bf16.msra.mxu0 %v747
    %2730 = vmatpush.bf16.msra.mxu0 %v743
    %2731 = vmatpush.bf16.msra.mxu0 %v739
    %2732 = vmatpush.bf16.msra.mxu0 %v735
    %2733 = vmatpush.bf16.msra.mxu0 %v731
    %2734 = vmatpush.bf16.msra.mxu0 %v727
    %2735 = vmatmul.bf16.gmra.mxu0 %v2581
    %v2736 = vpop.f32.mrf.mxu0
    %v2737 = vadd.f32 %v623, %v2736
    %v2738 = vpop.f32.mrf.mxu0
    %2739 = vdwg.mxu0
    %2740 = vmatpush.bf16.msra.mxu0 %v756
    %2741 = vmatpush.bf16.msra.mxu0 %v752
    %2742 = vmatpush.bf16.msra.mxu0 %v748
    %2743 = vmatpush.bf16.msra.mxu0 %v744
    %2744 = vmatpush.bf16.msra.mxu0 %v740
    %2745 = vmatpush.bf16.msra.mxu0 %v736
    %2746 = vmatpush.bf16.msra.mxu0 %v732
    %2747 = vmatpush.bf16.msra.mxu0 %v728
    %2748 = vmatmul.bf16.gmra.mxu0 %v2581
    %v2749 = vpop.f32.mrf.mxu0
    %v2750 = vadd.f32 %v624, %v2749
    %v2751 = vpop.f32.mrf.mxu0
    %2752 = vdwg.mxu0
    %v2753 = vpack.c.bf16 %v2700, %v2700
    %2754 = vmatpush.bf16.msra.mxu0 %v966
    %2755 = vmatpush.bf16.msra.mxu0 %v962
    %2756 = vmatpush.bf16.msra.mxu0 %v958
    %2757 = vmatpush.bf16.msra.mxu0 %v954
    %2758 = vmatpush.bf16.msra.mxu0 %v950
    %2759 = vmatpush.bf16.msra.mxu0 %v946
    %2760 = vmatpush.bf16.msra.mxu0 %v942
    %2761 = vmatpush.bf16.msra.mxu0 %v938
    %2762 = vmatmul.bf16.gmra.mxu0 %v2753
    %v2763 = vpop.f32.mrf.mxu0
    %v2764 = vadd.f32 0.0, %v2763
    %v2765 = vpop.f32.mrf.mxu0
    %2766 = vdwg.mxu0
    %2767 = vmatpush.bf16.msra.mxu0 %v967
    %2768 = vmatpush.bf16.msra.mxu0 %v963
    %2769 = vmatpush.bf16.msra.mxu0 %v959
    %2770 = vmatpush.bf16.msra.mxu0 %v955
    %2771 = vmatpush.bf16.msra.mxu0 %v951
    %2772 = vmatpush.bf16.msra.mxu0 %v947
    %2773 = vmatpush.bf16.msra.mxu0 %v943
    %2774 = vmatpush.bf16.msra.mxu0 %v939
    %2775 = vmatmul.bf16.gmra.mxu0 %v2753
    %v2776 = vpop.f32.mrf.mxu0
    %v2777 = vadd.f32 0.0, %v2776
    %v2778 = vpop.f32.mrf.mxu0
    %2779 = vdwg.mxu0
    %2780 = vmatpush.bf16.msra.mxu0 %v968
    %2781 = vmatpush.bf16.msra.mxu0 %v964
    %2782 = vmatpush.bf16.msra.mxu0 %v960
    %2783 = vmatpush.bf16.msra.mxu0 %v956
    %2784 = vmatpush.bf16.msra.mxu0 %v952
    %2785 = vmatpush.bf16.msra.mxu0 %v948
    %2786 = vmatpush.bf16.msra.mxu0 %v944
    %2787 = vmatpush.bf16.msra.mxu0 %v940
    %2788 = vmatmul.bf16.gmra.mxu0 %v2753
    %v2789 = vpop.f32.mrf.mxu0
    %v2790 = vadd.f32 0.0, %v2789
    %v2791 = vpop.f32.mrf.mxu0
    %2792 = vdwg.mxu0
    %2793 = vmatpush.bf16.msra.mxu0 %v969
    %2794 = vmatpush.bf16.msra.mxu0 %v965
    %2795 = vmatpush.bf16.msra.mxu0 %v961
    %2796 = vmatpush.bf16.msra.mxu0 %v957
    %2797 = vmatpush.bf16.msra.mxu0 %v953
    %2798 = vmatpush.bf16.msra.mxu0 %v949
    %2799 = vmatpush.bf16.msra.mxu0 %v945
    %2800 = vmatpush.bf16.msra.mxu0 %v941
    %2801 = vmatmul.bf16.gmra.mxu0 %v2753
    %v2802 = vpop.f32.mrf.mxu0
    %v2803 = vadd.f32 0.0, %v2802
    %v2804 = vpop.f32.mrf.mxu0
    %2805 = vdwg.mxu0
    %v2806 = vadd.f32 %v2711, %v2764
    %v2807 = vadd.f32 %v2724, %v2777
    %v2808 = vadd.f32 %v2737, %v2790
    %v2809 = vadd.f32 %v2750, %v2803
    %v2810 = vxor.u32 %v2806, 2147483648
    %v2811 = vxor.u32 %v2807, 2147483648
    %v2812 = vxor.u32 %v2808, 2147483648
    %v2813 = vmul.f32 %v2810, 1.442695
    %v2814 = vpow.pop %v2813
    %v2815 = vmul.f32 %v2811, 1.442695
    %v2816 = vpow.pop %v2815
    %v2817 = vmul.f32 %v2812, 1.442695
    %v2818 = vpow.pop %v2817
    %v2819 = vadd.f32 %v2814, 1.0
    %v2820 = vadd.f32 %v2816, 1.0
    %v2821 = vadd.f32 %v2818, 1.0
    %v2822 = vrcp.pop %v2819
    %v2823 = vmul.f32 %v2819, %v2822
    %v2824 = vsub.f32 1.0, %v2823
    %v2825 = vmul.f32 %v2822, %v2824
    %v2826 = vadd.f32 %v2822, %v2825
    %vm2827 = vweird.f32 %v2819
    %vm2828 = vweird.f32 %v2822
    %vm2829 = vmor %vm2827, %vm2828
    %v2830 = vsel %vm2829, %v2822, %v2826
    %v2831 = vand.u32 2147483647, %v2819
    %vm2832 = vcmp.eq.f32.partialorder %v2831, 8.507059e+37
    %v2833 = vand.u32 %v2819, 2147483648
    %v2834 = vor.u32 1.1754944e-38, %v2833
    %v2835 = vsel %vm2832, %v2834, %v2830
    %v2836 = vmul.f32 1.0, %v2835
    %v2837 = vrcp.pop %v2820
    %v2838 = vmul.f32 %v2820, %v2837
    %v2839 = vsub.f32 1.0, %v2838
    %v2840 = vmul.f32 %v2837, %v2839
    %v2841 = vadd.f32 %v2837, %v2840
    %vm2842 = vweird.f32 %v2820
    %vm2843 = vweird.f32 %v2837
    %vm2844 = vmor %vm2842, %vm2843
    %v2845 = vsel %vm2844, %v2837, %v2841
    %v2846 = vand.u32 2147483647, %v2820
    %vm2847 = vcmp.eq.f32.partialorder %v2846, 8.507059e+37
    %v2848 = vand.u32 %v2820, 2147483648
    %v2849 = vor.u32 1.1754944e-38, %v2848
    %v2850 = vsel %vm2847, %v2849, %v2845
    %v2851 = vmul.f32 1.0, %v2850
    %v2852 = vrcp.pop %v2821
    %v2853 = vmul.f32 %v2821, %v2852
    %v2854 = vsub.f32 1.0, %v2853
    %v2855 = vmul.f32 %v2852, %v2854
    %v2856 = vadd.f32 %v2852, %v2855
    %vm2857 = vweird.f32 %v2821
    %vm2858 = vweird.f32 %v2852
    %vm2859 = vmor %vm2857, %vm2858
    %v2860 = vsel %vm2859, %v2852, %v2856
    %v2861 = vand.u32 2147483647, %v2821
    %vm2862 = vcmp.eq.f32.partialorder %v2861, 8.507059e+37
    %v2863 = vand.u32 %v2821, 2147483648
    %v2864 = vor.u32 1.1754944e-38, %v2863
    %v2865 = vsel %vm2862, %v2864, %v2860
    %v2866 = vmul.f32 1.0, %v2865
    %v2867 = vtanh.pop %v2809
    %v2868 = vmul.f32 %v2851, %v2578
    %v2869 = vmul.f32 %v2836, %v2867
    %v2870 = vadd.f32 %v2868, %v2869
    %v2871 = vtanh.pop %v2870
    %v2872 = vmul.f32 %v2866, %v2871
    %v2873 = vpack.c.bf16 %v2872, %v2872
    %2874 = vmatpush.bf16.msra.mxu0 %v465
    %2875 = vmatpush.bf16.msra.mxu0 %v461
    %2876 = vmatpush.bf16.msra.mxu0 %v457
    %2877 = vmatpush.bf16.msra.mxu0 %v453
    %2878 = vmatpush.bf16.msra.mxu0 %v449
    %2879 = vmatpush.bf16.msra.mxu0 %v445
    %2880 = vmatpush.bf16.msra.mxu0 %v441
    %2881 = vmatpush.bf16.msra.mxu0 %v437
    %2882 = vmatmul.bf16.gmra.mxu0 %v2753
    %v2883 = vpop.f32.mrf.mxu0
    %v2884 = vadd.f32 0.0, %v2883
    %v2885 = vpop.f32.mrf.mxu0
    %2886 = vdwg.mxu0
    %2887 = vmatpush.bf16.msra.mxu0 %v466
    %2888 = vmatpush.bf16.msra.mxu0 %v462
    %2889 = vmatpush.bf16.msra.mxu0 %v458
    %2890 = vmatpush.bf16.msra.mxu0 %v454
    %2891 = vmatpush.bf16.msra.mxu0 %v450
    %2892 = vmatpush.bf16.msra.mxu0 %v446
    %2893 = vmatpush.bf16.msra.mxu0 %v442
    %2894 = vmatpush.bf16.msra.mxu0 %v438
    %2895 = vmatmul.bf16.gmra.mxu0 %v2753
    %v2896 = vpop.f32.mrf.mxu0
    %v2897 = vadd.f32 0.0, %v2896
    %v2898 = vpop.f32.mrf.mxu0
    %2899 = vdwg.mxu0
    %2900 = vmatpush.bf16.msra.mxu0 %v467
    %2901 = vmatpush.bf16.msra.mxu0 %v463
    %2902 = vmatpush.bf16.msra.mxu0 %v459
    %2903 = vmatpush.bf16.msra.mxu0 %v455
    %2904 = vmatpush.bf16.msra.mxu0 %v451
    %2905 = vmatpush.bf16.msra.mxu0 %v447
    %2906 = vmatpush.bf16.msra.mxu0 %v443
    %2907 = vmatpush.bf16.msra.mxu0 %v439
    %2908 = vmatmul.bf16.gmra.mxu0 %v2753
    %v2909 = vpop.f32.mrf.mxu0
    %v2910 = vadd.f32 0.0, %v2909
    %v2911 = vpop.f32.mrf.mxu0
    %2912 = vdwg.mxu0
    %2913 = vmatpush.bf16.msra.mxu0 %v468
    %2914 = vmatpush.bf16.msra.mxu0 %v464
    %2915 = vmatpush.bf16.msra.mxu0 %v460
    %2916 = vmatpush.bf16.msra.mxu0 %v456
    %2917 = vmatpush.bf16.msra.mxu0 %v452
    %2918 = vmatpush.bf16.msra.mxu0 %v448
    %2919 = vmatpush.bf16.msra.mxu0 %v444
    %2920 = vmatpush.bf16.msra.mxu0 %v440
    %2921 = vmatmul.bf16.gmra.mxu0 %v2753
    %v2922 = vpop.f32.mrf.mxu0
    %v2923 = vadd.f32 0.0, %v2922
    %v2924 = vpop.f32.mrf.mxu0
    %2925 = vdwg.mxu0
    %v2926 = vadd.f32 %v337, %v2884
    %v2927 = vadd.f32 %v338, %v2897
    %v2928 = vadd.f32 %v339, %v2910
    %v2929 = vadd.f32 %v340, %v2923
    %v2930 = vxor.u32 %v2926, 2147483648
    %v2931 = vxor.u32 %v2927, 2147483648
    %v2932 = vxor.u32 %v2928, 2147483648
    %v2933 = vmul.f32 %v2930, 1.442695
    %v2934 = vpow.pop %v2933
    %v2935 = vmul.f32 %v2931, 1.442695
    %v2936 = vpow.pop %v2935
    %v2937 = vmul.f32 %v2932, 1.442695
    %v2938 = vpow.pop %v2937
    %v2939 = vadd.f32 %v2934, 1.0
    %v2940 = vadd.f32 %v2936, 1.0
    %v2941 = vadd.f32 %v2938, 1.0
    %v2942 = vrcp.pop %v2939
    %v2943 = vmul.f32 %v2939, %v2942
    %v2944 = vsub.f32 1.0, %v2943
    %v2945 = vmul.f32 %v2942, %v2944
    %v2946 = vadd.f32 %v2942, %v2945
    %vm2947 = vweird.f32 %v2939
    %vm2948 = vweird.f32 %v2942
    %vm2949 = vmor %vm2947, %vm2948
    %v2950 = vsel %vm2949, %v2942, %v2946
    %v2951 = vand.u32 2147483647, %v2939
    %vm2952 = vcmp.eq.f32.partialorder %v2951, 8.507059e+37
    %v2953 = vand.u32 %v2939, 2147483648
    %v2954 = vor.u32 1.1754944e-38, %v2953
    %v2955 = vsel %vm2952, %v2954, %v2950
    %v2956 = vmul.f32 1.0, %v2955
    %v2957 = vrcp.pop %v2940
    %v2958 = vmul.f32 %v2940, %v2957
    %v2959 = vsub.f32 1.0, %v2958
    %v2960 = vmul.f32 %v2957, %v2959
    %v2961 = vadd.f32 %v2957, %v2960
    %vm2962 = vweird.f32 %v2940
    %vm2963 = vweird.f32 %v2957
    %vm2964 = vmor %vm2962, %vm2963
    %v2965 = vsel %vm2964, %v2957, %v2961
    %v2966 = vand.u32 2147483647, %v2940
    %vm2967 = vcmp.eq.f32.partialorder %v2966, 8.507059e+37
    %v2968 = vand.u32 %v2940, 2147483648
    %v2969 = vor.u32 1.1754944e-38, %v2968
    %v2970 = vsel %vm2967, %v2969, %v2965
    %v2971 = vmul.f32 1.0, %v2970
    %v2972 = vrcp.pop %v2941
    %v2973 = vmul.f32 %v2941, %v2972
    %v2974 = vsub.f32 1.0, %v2973
    %v2975 = vmul.f32 %v2972, %v2974
    %v2976 = vadd.f32 %v2972, %v2975
    %vm2977 = vweird.f32 %v2941
    %vm2978 = vweird.f32 %v2972
    %vm2979 = vmor %vm2977, %vm2978
    %v2980 = vsel %vm2979, %v2972, %v2976
    %v2981 = vand.u32 2147483647, %v2941
    %vm2982 = vcmp.eq.f32.partialorder %v2981, 8.507059e+37
    %v2983 = vand.u32 %v2941, 2147483648
    %v2984 = vor.u32 1.1754944e-38, %v2983
    %v2985 = vsel %vm2982, %v2984, %v2980
    %v2986 = vmul.f32 1.0, %v2985
    %v2987 = vtanh.pop %v2929
    %v2988 = vmul.f32 %v2971, %v2698
    %v2989 = vmul.f32 %v2956, %v2987
    %v2990 = vadd.f32 %v2988, %v2989
    %v2991 = vtanh.pop %v2990
    %v2992 = vmul.f32 %v2986, %v2991
    %2993 = vmatpush.bf16.msra.mxu0 %v753
    %2994 = vmatpush.bf16.msra.mxu0 %v749
    %2995 = vmatpush.bf16.msra.mxu0 %v745
    %2996 = vmatpush.bf16.msra.mxu0 %v741
    %2997 = vmatpush.bf16.msra.mxu0 %v737
    %2998 = vmatpush.bf16.msra.mxu0 %v733
    %2999 = vmatpush.bf16.msra.mxu0 %v729
    %3000 = vmatpush.bf16.msra.mxu0 %v725
    %3001 = vmatmul.bf16.gmra.mxu0 %v2873
    %v3002 = vpop.f32.mrf.mxu0
    %v3003 = vadd.f32 %v621, %v3002
    %v3004 = vpop.f32.mrf.mxu0
    %3005 = vdwg.mxu0
    %3006 = vmatpush.bf16.msra.mxu0 %v754
    %3007 = vmatpush.bf16.msra.mxu0 %v750
    %3008 = vmatpush.bf16.msra.mxu0 %v746
    %3009 = vmatpush.bf16.msra.mxu0 %v742
    %3010 = vmatpush.bf16.msra.mxu0 %v738
    %3011 = vmatpush.bf16.msra.mxu0 %v734
    %3012 = vmatpush.bf16.msra.mxu0 %v730
    %3013 = vmatpush.bf16.msra.mxu0 %v726
    %3014 = vmatmul.bf16.gmra.mxu0 %v2873
    %v3015 = vpop.f32.mrf.mxu0
    %v3016 = vadd.f32 %v622, %v3015
    %v3017 = vpop.f32.mrf.mxu0
    %3018 = vdwg.mxu0
    %3019 = vmatpush.bf16.msra.mxu0 %v755
    %3020 = vmatpush.bf16.msra.mxu0 %v751
    %3021 = vmatpush.bf16.msra.mxu0 %v747
    %3022 = vmatpush.bf16.msra.mxu0 %v743
    %3023 = vmatpush.bf16.msra.mxu0 %v739
    %3024 = vmatpush.bf16.msra.mxu0 %v735
    %3025 = vmatpush.bf16.msra.mxu0 %v731
    %3026 = vmatpush.bf16.msra.mxu0 %v727
    %3027 = vmatmul.bf16.gmra.mxu0 %v2873
    %v3028 = vpop.f32.mrf.mxu0
    %v3029 = vadd.f32 %v623, %v3028
    %v3030 = vpop.f32.mrf.mxu0
    %3031 = vdwg.mxu0
    %3032 = vmatpush.bf16.msra.mxu0 %v756
    %3033 = vmatpush.bf16.msra.mxu0 %v752
    %3034 = vmatpush.bf16.msra.mxu0 %v748
    %3035 = vmatpush.bf16.msra.mxu0 %v744
    %3036 = vmatpush.bf16.msra.mxu0 %v740
    %3037 = vmatpush.bf16.msra.mxu0 %v736
    %3038 = vmatpush.bf16.msra.mxu0 %v732
    %3039 = vmatpush.bf16.msra.mxu0 %v728
    %3040 = vmatmul.bf16.gmra.mxu0 %v2873
    %v3041 = vpop.f32.mrf.mxu0
    %v3042 = vadd.f32 %v624, %v3041
    %v3043 = vpop.f32.mrf.mxu0
    %3044 = vdwg.mxu0
    %v3045 = vpack.c.bf16 %v2992, %v2992
    %3046 = vmatpush.bf16.msra.mxu0 %v966
    %3047 = vmatpush.bf16.msra.mxu0 %v962
    %3048 = vmatpush.bf16.msra.mxu0 %v958
    %3049 = vmatpush.bf16.msra.mxu0 %v954
    %3050 = vmatpush.bf16.msra.mxu0 %v950
    %3051 = vmatpush.bf16.msra.mxu0 %v946
    %3052 = vmatpush.bf16.msra.mxu0 %v942
    %3053 = vmatpush.bf16.msra.mxu0 %v938
    %3054 = vmatmul.bf16.gmra.mxu0 %v3045
    %v3055 = vpop.f32.mrf.mxu0
    %v3056 = vadd.f32 0.0, %v3055
    %v3057 = vpop.f32.mrf.mxu0
    %3058 = vdwg.mxu0
    %3059 = vmatpush.bf16.msra.mxu0 %v967
    %3060 = vmatpush.bf16.msra.mxu0 %v963
    %3061 = vmatpush.bf16.msra.mxu0 %v959
    %3062 = vmatpush.bf16.msra.mxu0 %v955
    %3063 = vmatpush.bf16.msra.mxu0 %v951
    %3064 = vmatpush.bf16.msra.mxu0 %v947
    %3065 = vmatpush.bf16.msra.mxu0 %v943
    %3066 = vmatpush.bf16.msra.mxu0 %v939
    %3067 = vmatmul.bf16.gmra.mxu0 %v3045
    %v3068 = vpop.f32.mrf.mxu0
    %v3069 = vadd.f32 0.0, %v3068
    %v3070 = vpop.f32.mrf.mxu0
    %3071 = vdwg.mxu0
    %3072 = vmatpush.bf16.msra.mxu0 %v968
    %3073 = vmatpush.bf16.msra.mxu0 %v964
    %3074 = vmatpush.bf16.msra.mxu0 %v960
    %3075 = vmatpush.bf16.msra.mxu0 %v956
    %3076 = vmatpush.bf16.msra.mxu0 %v952
    %3077 = vmatpush.bf16.msra.mxu0 %v948
    %3078 = vmatpush.bf16.msra.mxu0 %v944
    %3079 = vmatpush.bf16.msra.mxu0 %v940
    %3080 = vmatmul.bf16.gmra.mxu0 %v3045
    %v3081 = vpop.f32.mrf.mxu0
    %v3082 = vadd.f32 0.0, %v3081
    %v3083 = vpop.f32.mrf.mxu0
    %3084 = vdwg.mxu0
    %3085 = vmatpush.bf16.msra.mxu0 %v969
    %3086 = vmatpush.bf16.msra.mxu0 %v965
    %3087 = vmatpush.bf16.msra.mxu0 %v961
    %3088 = vmatpush.bf16.msra.mxu0 %v957
    %3089 = vmatpush.bf16.msra.mxu0 %v953
    %3090 = vmatpush.bf16.msra.mxu0 %v949
    %3091 = vmatpush.bf16.msra.mxu0 %v945
    %3092 = vmatpush.bf16.msra.mxu0 %v941
    %3093 = vmatmul.bf16.gmra.mxu0 %v3045
    %v3094 = vpop.f32.mrf.mxu0
    %v3095 = vadd.f32 0.0, %v3094
    %v3096 = vpop.f32.mrf.mxu0
    %3097 = vdwg.mxu0
    %v3098 = vadd.f32 %v3003, %v3056
    %v3099 = vadd.f32 %v3016, %v3069
    %v3100 = vadd.f32 %v3029, %v3082
    %v3101 = vadd.f32 %v3042, %v3095
    %v3102 = vxor.u32 %v3098, 2147483648
    %v3103 = vxor.u32 %v3099, 2147483648
    %v3104 = vxor.u32 %v3100, 2147483648
    %v3105 = vmul.f32 %v3102, 1.442695
    %v3106 = vpow.pop %v3105
    %v3107 = vmul.f32 %v3103, 1.442695
    %v3108 = vpow.pop %v3107
    %v3109 = vmul.f32 %v3104, 1.442695
    %v3110 = vpow.pop %v3109
    %v3111 = vadd.f32 %v3106, 1.0
    %v3112 = vadd.f32 %v3108, 1.0
    %v3113 = vadd.f32 %v3110, 1.0
    %v3114 = vrcp.pop %v3111
    %v3115 = vmul.f32 %v3111, %v3114
    %v3116 = vsub.f32 1.0, %v3115
    %v3117 = vmul.f32 %v3114, %v3116
    %v3118 = vadd.f32 %v3114, %v3117
    %vm3119 = vweird.f32 %v3111
    %vm3120 = vweird.f32 %v3114
    %vm3121 = vmor %vm3119, %vm3120
    %v3122 = vsel %vm3121, %v3114, %v3118
    %v3123 = vand.u32 2147483647, %v3111
    %vm3124 = vcmp.eq.f32.partialorder %v3123, 8.507059e+37
    %v3125 = vand.u32 %v3111, 2147483648
    %v3126 = vor.u32 1.1754944e-38, %v3125
    %v3127 = vsel %vm3124, %v3126, %v3122
    %v3128 = vmul.f32 1.0, %v3127
    %v3129 = vrcp.pop %v3112
    %v3130 = vmul.f32 %v3112, %v3129
    %v3131 = vsub.f32 1.0, %v3130
    %v3132 = vmul.f32 %v3129, %v3131
    %v3133 = vadd.f32 %v3129, %v3132
    %vm3134 = vweird.f32 %v3112
    %vm3135 = vweird.f32 %v3129
    %vm3136 = vmor %vm3134, %vm3135
    %v3137 = vsel %vm3136, %v3129, %v3133
    %v3138 = vand.u32 2147483647, %v3112
    %vm3139 = vcmp.eq.f32.partialorder %v3138, 8.507059e+37
    %v3140 = vand.u32 %v3112, 2147483648
    %v3141 = vor.u32 1.1754944e-38, %v3140
    %v3142 = vsel %vm3139, %v3141, %v3137
    %v3143 = vmul.f32 1.0, %v3142
    %v3144 = vrcp.pop %v3113
    %v3145 = vmul.f32 %v3113, %v3144
    %v3146 = vsub.f32 1.0, %v3145
    %v3147 = vmul.f32 %v3144, %v3146
    %v3148 = vadd.f32 %v3144, %v3147
    %vm3149 = vweird.f32 %v3113
    %vm3150 = vweird.f32 %v3144
    %vm3151 = vmor %vm3149, %vm3150
    %v3152 = vsel %vm3151, %v3144, %v3148
    %v3153 = vand.u32 2147483647, %v3113
    %vm3154 = vcmp.eq.f32.partialorder %v3153, 8.507059e+37
    %v3155 = vand.u32 %v3113, 2147483648
    %v3156 = vor.u32 1.1754944e-38, %v3155
    %v3157 = vsel %vm3154, %v3156, %v3152
    %v3158 = vmul.f32 1.0, %v3157
    %v3159 = vtanh.pop %v3101
    %v3160 = vmul.f32 %v3143, %v2870
    %v3161 = vmul.f32 %v3128, %v3159
    %v3162 = vadd.f32 %v3160, %v3161
    %v3163 = vtanh.pop %v3162
    %v3164 = vmul.f32 %v3158, %v3163
    %v3166 = vperm.slane %v224, 0
    %v3168 = vmul.f32 %v1120, %v3166
    %v3169 = vmul.f32 %v1412, %v3166
    %v3170 = vmul.f32 %v1704, %v3166
    %v3171 = vmul.f32 %v1996, %v3166
    %v3172 = vmul.f32 %v2288, %v3166
    %v3173 = vmul.f32 %v2580, %v3166
    %v3174 = vmul.f32 %v2872, %v3166
    %v3175 = vmul.f32 %v3164, %v3166
    %3176 = vadd.xlane.f32.xlu0 %v3168
    %v3177 = vpop.xlane.xlu0 %3176
    %3178 = vadd.xlane.f32.xlu0 %v3169
    %v3179 = vpop.xlane.xlu0 %3178
    %3180 = vadd.xlane.f32.xlu0 %v3170
    %v3181 = vpop.xlane.xlu0 %3180
    %3182 = vadd.xlane.f32.xlu0 %v3171
    %v3183 = vpop.xlane.xlu0 %3182
    %3184 = vadd.xlane.f32.xlu0 %v3172
    %v3185 = vpop.xlane.xlu0 %3184
    %3186 = vadd.xlane.f32.xlu0 %v3173
    %v3187 = vpop.xlane.xlu0 %3186
    %3188 = vadd.xlane.f32.xlu0 %v3174
    %v3189 = vpop.xlane.xlu0 %3188
    %3190 = vadd.xlane.f32.xlu0 %v3175
    %v3191 = vpop.xlane.xlu0 %3190
    %v3193 = vperm.slane %v225, 0
    %v3195 = vadd.f32 %v3177, %v3193
    %v3196 = vadd.f32 %v3179, %v3193
    %v3197 = vadd.f32 %v3181, %v3193
    %v3198 = vadd.f32 %v3183, %v3193
    %v3199 = vadd.f32 %v3185, %v3193
    %v3200 = vadd.f32 %v3187, %v3193
    %v3201 = vadd.f32 %v3189, %v3193
    %v3202 = vadd.f32 %v3191, %v3193
    %v3203 = vlaneseq
    %v3204 = vand.u32 %v3203, 127
    %vm3205 = vcmp.eq.s32.totalorder %v3204, 0
    %v3206 = vsel %vm3205, 1, 0
    %v3207 = vcvt.s32.f32 %v3206
    %3209 = vset.pattern.permute.xlu0 0
    %3210 = vperm.xlu0 %3209, %v3195
    %v3211 = vpop.permute.xlu0 %3210
    %v3213 = vmul.f32 %v3211, %v3207
    %vm3214 = vcmp.eq.s32.totalorder %v3204, 1
    %v3215 = vsel %vm3214, 1, 0
    %v3216 = vcvt.s32.f32 %v3215
    %3218 = vset.pattern.permute.xlu0 0
    %3219 = vperm.xlu0 %3218, %v3196
    %v3220 = vpop.permute.xlu0 %3219
    %v3222 = vmul.f32 %v3220, %v3216
    %vm3223 = vcmp.eq.s32.totalorder %v3204, 2
    %v3224 = vsel %vm3223, 1, 0
    %v3225 = vcvt.s32.f32 %v3224
    %3227 = vset.pattern.permute.xlu0 0
    %3228 = vperm.xlu0 %3227, %v3197
    %v3229 = vpop.permute.xlu0 %3228
    %v3231 = vmul.f32 %v3229, %v3225
    %vm3232 = vcmp.eq.s32.totalorder %v3204, 3
    %v3233 = vsel %vm3232, 1, 0
    %v3234 = vcvt.s32.f32 %v3233
    %3236 = vset.pattern.permute.xlu0 0
    %3237 = vperm.xlu0 %3236, %v3198
    %v3238 = vpop.permute.xlu0 %3237
    %v3240 = vmul.f32 %v3238, %v3234
    %vm3241 = vcmp.eq.s32.totalorder %v3204, 4
    %v3242 = vsel %vm3241, 1, 0
    %v3243 = vcvt.s32.f32 %v3242
    %3245 = vset.pattern.permute.xlu0 0
    %3246 = vperm.xlu0 %3245, %v3199
    %v3247 = vpop.permute.xlu0 %3246
    %v3249 = vmul.f32 %v3247, %v3243
    %vm3250 = vcmp.eq.s32.totalorder %v3204, 5
    %v3251 = vsel %vm3250, 1, 0
    %v3252 = vcvt.s32.f32 %v3251
    %3254 = vset.pattern.permute.xlu0 0
    %3255 = vperm.xlu0 %3254, %v3200
    %v3256 = vpop.permute.xlu0 %3255
    %v3258 = vmul.f32 %v3256, %v3252
    %vm3259 = vcmp.eq.s32.totalorder %v3204, 6
    %v3260 = vsel %vm3259, 1, 0
    %v3261 = vcvt.s32.f32 %v3260
    %3263 = vset.pattern.permute.xlu0 0
    %3264 = vperm.xlu0 %3263, %v3201
    %v3265 = vpop.permute.xlu0 %3264
    %v3267 = vmul.f32 %v3265, %v3261
    %vm3268 = vcmp.eq.s32.totalorder %v3204, 7
    %v3269 = vsel %vm3268, 1, 0
    %v3270 = vcvt.s32.f32 %v3269
    %3272 = vset.pattern.permute.xlu0 0
    %3273 = vperm.xlu0 %3272, %v3202
    %v3274 = vpop.permute.xlu0 %3273
    %v3276 = vmul.f32 %v3274, %v3270
    %v3277 = vadd.f32 %v3213, %v3222
    %v3278 = vadd.f32 %v3231, %v3240
    %v3279 = vadd.f32 %v3249, %v3258
    %v3280 = vadd.f32 %v3267, %v3276
    %v3281 = vadd.f32 %v3277, %v3278
    %v3282 = vadd.f32 %v3279, %v3280
    %v3283 = vadd.f32 %v3281, %v3282
    %vm3284 = vcmask 64512
    %3285 = vst.msk [vmem:[#allocation14] sm:$0xff] %vm3284, %v3283
    // Predicated region
    $region62: #{tpu_custom_call.1} parent=1 // pred_check
      _
    $region63: #{tpu_custom_call.1} parent=1 // pred_check_branch
      %3287 = sbr.rel (0) target = $region65
    $region64: #{tpu_custom_call.1} parent=1 // pred_region
      %3289 = vsyncadd [#allocation5], 0
      %s3291 = sshll.u32 [#allocation14], 4
      %s3292 = int_to_ptr.vmem [resolvable:$true] %s3291
      %s3293 = sshll.u32 %s9, 4
      %s3294 = int_to_ptr.hbm [resolvable:$true] %s3293
      %3296 = dma.vmem_to_hbm [thread:$0]  %s3292, 128, %s3294, [#allocation5]
    $region65: #{tpu_custom_call.1} parent=1 // pred_fallthru
      _
    // Predicated region
    $region66: #{tpu_custom_call.1} parent=1 // pred_check
      _
    $region67: #{tpu_custom_call.1} parent=1 // pred_check_branch
      %3298 = sbr.rel (0) target = $region69
    $region68: #{tpu_custom_call.1} parent=1 // pred_region
      %3300 = dma.done [#allocation5], 128
    $region69: #{tpu_custom_call.1} parent=1 // pred_fallthru
      _
    %3301 = vsyncpa [#allocation4], 1
    %3302 = vsyncpa [#allocation7], 1
    %3303 = vsyncpa [#allocation10], 1
    %3304 = vsyncpa [#allocation13], 1
    %3305 = vsyncpa [#allocation5], 1

</llo_original>
